<compile_context>
chip_gen: v7x
topology: tpu7x:2x2x1
jax: 0.10.0
libtpu: 0.0.40
codegen_flags: <defaults>
</compile_context>

<pallas_src>
import jax
import jax.numpy as jnp
from jax.experimental import pallas as pl
from jax.experimental.pallas import tpu as pltpu


def _round_up(x, n):
    return ((x + n - 1) // n) * n


def _default_vmem_limit_bytes():
    """48 MiB on v7x (64 MiB physical per TC), ~100 MiB on v5e/v6e (128 MiB)."""
    try:
        kind = jax.devices()[0].device_kind.lower()
    except Exception:
        kind = ""
    if "v7" in kind or "7x" in kind:
        return 48 * 1024 * 1024
    return 100 * 1024 * 1024


# --------------------------------------------------------------------------- #
# Kernel
# --------------------------------------------------------------------------- #
def mscale_mlp_kernel(x_ref,
                      w1_ref, b1_ref,
                      w2_ref, b2_ref,
                      w3_ref, b3_ref,
                      w4_ref, b4_ref,
                      w5_ref, b5_ref,
                      w6_ref, b6_ref,
                      out_ref):
    # Feature-major activations: (features, TB), batch on the lane axis.
    # Layer 1: w1 (F1, d) contracted with x (TB, d) over d -> (F1, TB).
    # Multiscale K already folded into w1's rows by the wrapper.
    y = jax.lax.dot_general(
        w1_ref[...], x_ref[...],
        dimension_numbers=(((1,), (1,)), ((), ())),
        preferred_element_type=jnp.float32) + b1_ref[...]

    # Layers 2..5: ReLU -> matmul -> bias.  Dots run in the weight dtype
    # (bf16 on the v6e/v7x path); bias add / ReLU stay f32 (v5e VPU has no bf16).
    for w_ref, b_ref in ((w2_ref, b2_ref), (w3_ref, b3_ref),
                         (w4_ref, b4_ref), (w5_ref, b5_ref)):
        y = jnp.maximum(y, 0.0).astype(w_ref.dtype)
        y = jnp.dot(w_ref[...], y,
                    preferred_element_type=jnp.float32) + b_ref[...]

    # Layer 6: w6 is padded to 8 rows (row 0 real, rows 1..7 zero) to keep the
    # MXU shape >= (8, .); only row 0 is stored -> lane-dense (1, TB) output.
    y = jnp.maximum(y, 0.0).astype(w6_ref.dtype)
    y6 = jnp.dot(w6_ref[...], y, preferred_element_type=jnp.float32)
    out_ref[...] = (y6[0:1, :] + b6_ref[0, 0]).astype(out_ref.dtype)


# --------------------------------------------------------------------------- #
# Parameter preparation (fold K into W1, pad hidden dims, pick dtypes)
# --------------------------------------------------------------------------- #
def prepare_params(p, compute_dtype=jnp.bfloat16):
    """Fold K into W1 and zero-pad hidden widths to multiples of 128.

    Layer 1 (and x) stay f32 so the multiscale factors keep full precision;
    layers 2..6 use `compute_dtype` (bf16 by default for v6e/v7x MXU rate;
    pass jnp.float32 for an exact path).
    """
    d = p["w1"].shape[1]
    two_m = p["w1"].shape[0]
    m = p["w2"].shape[0]
    F1 = _round_up(two_m, 128)   # layer-1 output width (padded)
    F2 = _round_up(m, 128)       # hidden width (padded)

    def pad2(a, rows, cols, dtype=jnp.float32):
        a = jnp.asarray(a, jnp.float32)
        out = jnp.zeros((rows, cols), jnp.float32)
        out = out.at[:a.shape[0], :a.shape[1]].set(a)
        return out.astype(dtype)

    w1k = p["K"][:, None] * p["w1"]          # K*(W1 x) == (K (.) rows of W1) x
    kp = {
        "w1": pad2(w1k, F1, d),                        # f32, exactly d columns
        "b1": pad2(p["b1"][:, None], F1, 1),
        "w2": pad2(p["w2"], F2, F1, compute_dtype),
        "b2": pad2(p["b2"][:, None], F2, 1),
        "w3": pad2(p["w3"], F2, F2, compute_dtype),
        "b3": pad2(p["b3"][:, None], F2, 1),
        "w4": pad2(p["w4"], F2, F2, compute_dtype),
        "b4": pad2(p["b4"][:, None], F2, 1),
        "w5": pad2(p["w5"], F2, F2, compute_dtype),
        "b5": pad2(p["b5"][:, None], F2, 1),
        "w6": pad2(p["w6"], 8, F2, compute_dtype),     # row 0 real, 1..7 zero
        "b6": jnp.asarray(p["b6"], jnp.float32).reshape(1, 1),
    }
    return kp


# --------------------------------------------------------------------------- #
# Forward wrapper
# --------------------------------------------------------------------------- #
def mscale_forward(x, kp, *, tile_b=1024):
    """x: (B, d) float32.  kp: prepared (padded, K-folded) kernel params."""
    B, d = x.shape
    F1 = kp["w1"].shape[0]
    F2 = kp["w2"].shape[0]

    # Batch tile: lane-dense multiple of 128; cap at ~B/2 so the grid has at
    # least two tiles when B allows (fills both v7x TensorCores); the last
    # tile may be ragged (Pallas clips OOB reads/writes; columns independent).
    TB = max(128, min(tile_b, _round_up((B + 1) // 2, 128)))
    grid = (pl.cdiv(B, TB),)

    flops = 2 * B * (d * F1 + F1 * F2 + 3 * F2 * F2 + F2 * 8)
    bytes_accessed = int(x.size) * x.dtype.itemsize + 4 * B + sum(
        int(a.size) * a.dtype.itemsize for a in kp.values())
    cost = pl.CostEstimate(flops=int(flops), transcendentals=0,
                           bytes_accessed=int(bytes_accessed))

    weight_args = (kp["w1"], kp["b1"], kp["w2"], kp["b2"], kp["w3"], kp["b3"],
                   kp["w4"], kp["b4"], kp["w5"], kp["b5"], kp["w6"])

    def build(weight_pipeline_mode):
        def wspec(a):
            kwargs = {}
            if weight_pipeline_mode is not None:
                kwargs["pipeline_mode"] = weight_pipeline_mode
            return pl.BlockSpec(a.shape, lambda i: (0, 0), **kwargs)

        return pl.pallas_call(
            mscale_mlp_kernel,
            out_shape=jax.ShapeDtypeStruct((1, B), jnp.float32),
            grid=grid,
            in_specs=[pl.BlockSpec((TB, d), lambda i: (i, 0))]      # x tile
                     + [wspec(a) for a in weight_args]              # resident
                     + [pl.BlockSpec((1, 1), lambda i: (0, 0),
                                     memory_space=pltpu.MemorySpace.SMEM)],
            out_specs=pl.BlockSpec((1, TB), lambda i: (0, i)),
            compiler_params=pltpu.CompilerParams(
                dimension_semantics=("parallel",),
                vmem_limit_bytes=_default_vmem_limit_bytes()),
            cost_estimate=cost,
        )

    args = (x.astype(kp["w1"].dtype),) + weight_args + (kp["b6"],)
    try:
        # Weights have constant index maps -> single-buffer them (halves their
        # resident VMEM; matters for large m on v7x's 64 MiB VMEM).
        out = build(pl.Buffered(buffer_count=1))(*args)
    except Exception:
        # pipeline_mode / Buffered(1) unsupported on this jax/libtpu: fall back
        # to the default (double-buffered) weight specs.
        out = build(None)(*args)

    # boundary_control_type == 'none'  ->  squeeze(1)
    return out[0]


# --------------------------------------------------------------------------- #
# Deterministic synthetic params (PyTorch nn.Linear layout: (out, in) / (out,))
# --------------------------------------------------------------------------- #
def init_params(key, d, m, K=8):
    def linear(key, fan_in, fan_out):
        kw, kb = jax.random.split(key)
        bound = 1.0 / jnp.sqrt(jnp.float32(fan_in))
        w = jax.random.uniform(kw, (fan_out, fan_in), jnp.float32, -bound, bound)
        b = jax.random.uniform(kb, (fan_out,), jnp.float32, -bound, bound)
        return w, b

    keys = jax.random.split(key, 6)
    w1, b1 = linear(keys[0], d, 2 * m)
    w2, b2 = linear(keys[1], 2 * m, m)
    w3, b3 = linear(keys[2], m, m)
    w4, b4 = linear(keys[3], m, m)
    w5, b5 = linear(keys[4], m, m)
    w6, b6 = linear(keys[5], m, 1)

    # K vector: (i // (m // K)) + 1 for i in range(2*m)
    k_vec = (jnp.arange(2 * m, dtype=jnp.int32) // (m // K) + 1).astype(jnp.float32)

    return {"w1": w1, "b1": b1, "K": k_vec,
            "w2": w2, "b2": b2, "w3": w3, "b3": b3,
            "w4": w4, "b4": b4, "w5": w5, "b5": b5,
            "w6": w6, "b6": b6}


def reference_forward(x, p):
    """Pure-JAX reference of the PyTorch forward (ReLU, boundary 'none')."""
    y = x @ p["w1"].T + p["b1"]
    y = p["K"] * (y - p["b1"]) + p["b1"]
    for i in (2, 3, 4, 5, 6):
        y = jnp.maximum(y, 0.0)
        y = y @ p[f"w{i}"].T + p[f"b{i}"]
    return y[:, 0]


if __name__ == "__main__":
    # Small shapes: batch=8, d=4, m=32, K (number of scales)=8.
    B, d, m, K = 8, 4, 32, 8
    key = jax.random.PRNGKey(0)
    kx, kp_key, kx2 = jax.random.split(key, 3)
    x = jax.random.uniform(kx, (B, d), jnp.float32)
    params = init_params(kp_key, d, m, K=K)
    ref = reference_forward(x, params)

    # f32 path: numerical check against the pure-JAX reference.
    kp32 = prepare_params(params, compute_dtype=jnp.float32)
    out = jax.block_until_ready(mscale_forward(x, kp32))
    assert out.shape == (B,)
    assert jnp.allclose(out, ref, atol=1e-4, rtol=1e-4)

    # Multi-tile path with a ragged last tile (grid=2, second tile partial).
    B2 = 300
    x2 = jax.random.uniform(kx2, (B2, d), jnp.float32)
    ref2 = reference_forward(x2, params)
    out2 = jax.block_until_ready(mscale_forward(x2, kp32))
    assert out2.shape == (B2,)
    assert jnp.allclose(out2, ref2, atol=1e-4, rtol=1e-4)

    # bf16 (layers 2..6) path: default compute dtype for v6e/v7x MXU rate.
    kp16 = prepare_params(params)            # bf16 default
    out16 = jax.block_until_ready(mscale_forward(x, kp16))
    assert out16.shape == (B,)
    assert bool(jnp.all(jnp.isfinite(out16)))

    print("KERNEL_OK")
</pallas_src>

<mosaic_0001>
module attributes {stable_mosaic.version = 11 : i64} {
  func.func @mscale_mlp_kernel(%arg0: i32, %arg1: memref<128x4xf32, #tpu.memory_space<vmem>>, %arg2: memref<128x4xf32, #tpu.memory_space<vmem>>, %arg3: memref<128x1xf32, #tpu.memory_space<vmem>>, %arg4: memref<128x128xf32, #tpu.memory_space<vmem>>, %arg5: memref<128x1xf32, #tpu.memory_space<vmem>>, %arg6: memref<128x128xf32, #tpu.memory_space<vmem>>, %arg7: memref<128x1xf32, #tpu.memory_space<vmem>>, %arg8: memref<128x128xf32, #tpu.memory_space<vmem>>, %arg9: memref<128x1xf32, #tpu.memory_space<vmem>>, %arg10: memref<128x128xf32, #tpu.memory_space<vmem>>, %arg11: memref<128x1xf32, #tpu.memory_space<vmem>>, %arg12: memref<8x128xf32, #tpu.memory_space<vmem>>, %arg13: memref<1x1xf32, #tpu.memory_space<smem>>, %arg14: memref<1x128xf32, #tpu.memory_space<vmem>>) attributes {dimension_semantics = [#tpu.dimension_semantics<parallel>], iteration_bounds = array<i64: 1>, scalar_prefetch = 0 : i64, scratch_operands = 0 : i64, tpu.core_type = #tpu.core_type<tc>, window_params = [{transform_indices = @transform_0, window_bounds = array<i64: 128, 4>}, {pipeline_mode = #tpu.pipeline_mode<synchronous>, transform_indices = @transform_1, window_bounds = array<i64: 128, 4>}, {pipeline_mode = #tpu.pipeline_mode<synchronous>, transform_indices = @transform_2, window_bounds = array<i64: 128, 1>}, {pipeline_mode = #tpu.pipeline_mode<synchronous>, transform_indices = @transform_3, window_bounds = array<i64: 128, 128>}, {pipeline_mode = #tpu.pipeline_mode<synchronous>, transform_indices = @transform_4, window_bounds = array<i64: 128, 1>}, {pipeline_mode = #tpu.pipeline_mode<synchronous>, transform_indices = @transform_5, window_bounds = array<i64: 128, 128>}, {pipeline_mode = #tpu.pipeline_mode<synchronous>, transform_indices = @transform_6, window_bounds = array<i64: 128, 1>}, {pipeline_mode = #tpu.pipeline_mode<synchronous>, transform_indices = @transform_7, window_bounds = array<i64: 128, 128>}, {pipeline_mode = #tpu.pipeline_mode<synchronous>, transform_indices = @transform_8, window_bounds = array<i64: 128, 1>}, {pipeline_mode = #tpu.pipeline_mode<synchronous>, transform_indices = @transform_9, window_bounds = array<i64: 128, 128>}, {pipeline_mode = #tpu.pipeline_mode<synchronous>, transform_indices = @transform_10, window_bounds = array<i64: 128, 1>}, {pipeline_mode = #tpu.pipeline_mode<synchronous>, transform_indices = @transform_11, window_bounds = array<i64: 8, 128>}, {transform_indices = @transform_12, window_bounds = array<i64: 1, 1>}, {transform_indices = @transform_13, window_bounds = array<i64: 1, 128>}]} {
    %c0 = arith.constant 0 : index
    %c0_0 = arith.constant 0 : index
    %0 = vector.load %arg2[%c0, %c0_0] : memref<128x4xf32, #tpu.memory_space<vmem>>, vector<128x4xf32>
    %c0_1 = arith.constant 0 : index
    %c0_2 = arith.constant 0 : index
    %1 = vector.load %arg1[%c0_1, %c0_2] : memref<128x4xf32, #tpu.memory_space<vmem>>, vector<128x4xf32>
    %cst = arith.constant dense<0.000000e+00> : vector<128x128xf32>
    %2 = tpu.matmul %0, %1, %cst {dimension_numbers = #tpu.dot_dimension_numbers<[1], [1], [0], [0], [0, 0, 1, 0], [], []>} : vector<128x4xf32>, vector<128x4xf32>, vector<128x128xf32> -> vector<128x128xf32>
    %c0_3 = arith.constant 0 : index
    %c0_4 = arith.constant 0 : index
    %3 = vector.load %arg3[%c0_3, %c0_4] : memref<128x1xf32, #tpu.memory_space<vmem>>, vector<128x1xf32>
    %4 = vector.broadcast %3 : vector<128x1xf32> to vector<128x128xf32>
    %5 = arith.addf %2, %4 : vector<128x128xf32>
    %cst_5 = arith.constant 0.000000e+00 : f32
    %6 = vector.broadcast %cst_5 : f32 to vector<128x128xf32>
    %7 = arith.maximumf %5, %6 : vector<128x128xf32>
    %c0_6 = arith.constant 0 : index
    %c0_7 = arith.constant 0 : index
    %8 = vector.load %arg4[%c0_6, %c0_7] : memref<128x128xf32, #tpu.memory_space<vmem>>, vector<128x128xf32>
    %cst_8 = arith.constant dense<0.000000e+00> : vector<128x128xf32>
    %9 = tpu.matmul %8, %7, %cst_8 {dimension_numbers = #tpu.dot_dimension_numbers<[1], [0], [0], [1], [0, 0, 1, 1], [], []>} : vector<128x128xf32>, vector<128x128xf32>, vector<128x128xf32> -> vector<128x128xf32>
    %c0_9 = arith.constant 0 : index
    %c0_10 = arith.constant 0 : index
    %10 = vector.load %arg5[%c0_9, %c0_10] : memref<128x1xf32, #tpu.memory_space<vmem>>, vector<128x1xf32>
    %11 = vector.broadcast %10 : vector<128x1xf32> to vector<128x128xf32>
    %12 = arith.addf %9, %11 : vector<128x128xf32>
    %cst_11 = arith.constant 0.000000e+00 : f32
    %13 = vector.broadcast %cst_11 : f32 to vector<128x128xf32>
    %14 = arith.maximumf %12, %13 : vector<128x128xf32>
    %c0_12 = arith.constant 0 : index
    %c0_13 = arith.constant 0 : index
    %15 = vector.load %arg6[%c0_12, %c0_13] : memref<128x128xf32, #tpu.memory_space<vmem>>, vector<128x128xf32>
    %cst_14 = arith.constant dense<0.000000e+00> : vector<128x128xf32>
    %16 = tpu.matmul %15, %14, %cst_14 {dimension_numbers = #tpu.dot_dimension_numbers<[1], [0], [0], [1], [0, 0, 1, 1], [], []>} : vector<128x128xf32>, vector<128x128xf32>, vector<128x128xf32> -> vector<128x128xf32>
    %c0_15 = arith.constant 0 : index
    %c0_16 = arith.constant 0 : index
    %17 = vector.load %arg7[%c0_15, %c0_16] : memref<128x1xf32, #tpu.memory_space<vmem>>, vector<128x1xf32>
    %18 = vector.broadcast %17 : vector<128x1xf32> to vector<128x128xf32>
    %19 = arith.addf %16, %18 : vector<128x128xf32>
    %cst_17 = arith.constant 0.000000e+00 : f32
    %20 = vector.broadcast %cst_17 : f32 to vector<128x128xf32>
    %21 = arith.maximumf %19, %20 : vector<128x128xf32>
    %c0_18 = arith.constant 0 : index
    %c0_19 = arith.constant 0 : index
    %22 = vector.load %arg8[%c0_18, %c0_19] : memref<128x128xf32, #tpu.memory_space<vmem>>, vector<128x128xf32>
    %cst_20 = arith.constant dense<0.000000e+00> : vector<128x128xf32>
    %23 = tpu.matmul %22, %21, %cst_20 {dimension_numbers = #tpu.dot_dimension_numbers<[1], [0], [0], [1], [0, 0, 1, 1], [], []>} : vector<128x128xf32>, vector<128x128xf32>, vector<128x128xf32> -> vector<128x128xf32>
    %c0_21 = arith.constant 0 : index
    %c0_22 = arith.constant 0 : index
    %24 = vector.load %arg9[%c0_21, %c0_22] : memref<128x1xf32, #tpu.memory_space<vmem>>, vector<128x1xf32>
    %25 = vector.broadcast %24 : vector<128x1xf32> to vector<128x128xf32>
    %26 = arith.addf %23, %25 : vector<128x128xf32>
    %cst_23 = arith.constant 0.000000e+00 : f32
    %27 = vector.broadcast %cst_23 : f32 to vector<128x128xf32>
    %28 = arith.maximumf %26, %27 : vector<128x128xf32>
    %c0_24 = arith.constant 0 : index
    %c0_25 = arith.constant 0 : index
    %29 = vector.load %arg10[%c0_24, %c0_25] : memref<128x128xf32, #tpu.memory_space<vmem>>, vector<128x128xf32>
    %cst_26 = arith.constant dense<0.000000e+00> : vector<128x128xf32>
    %30 = tpu.matmul %29, %28, %cst_26 {dimension_numbers = #tpu.dot_dimension_numbers<[1], [0], [0], [1], [0, 0, 1, 1], [], []>} : vector<128x128xf32>, vector<128x128xf32>, vector<128x128xf32> -> vector<128x128xf32>
    %c0_27 = arith.constant 0 : index
    %c0_28 = arith.constant 0 : index
    %31 = vector.load %arg11[%c0_27, %c0_28] : memref<128x1xf32, #tpu.memory_space<vmem>>, vector<128x1xf32>
    %32 = vector.broadcast %31 : vector<128x1xf32> to vector<128x128xf32>
    %33 = arith.addf %30, %32 : vector<128x128xf32>
    %cst_29 = arith.constant 0.000000e+00 : f32
    %34 = vector.broadcast %cst_29 : f32 to vector<128x128xf32>
    %35 = arith.maximumf %33, %34 : vector<128x128xf32>
    %c0_30 = arith.constant 0 : index
    %c0_31 = arith.constant 0 : index
    %36 = vector.load %arg12[%c0_30, %c0_31] : memref<8x128xf32, #tpu.memory_space<vmem>>, vector<8x128xf32>
    %cst_32 = arith.constant dense<0.000000e+00> : vector<8x128xf32>
    %37 = tpu.matmul %36, %35, %cst_32 {dimension_numbers = #tpu.dot_dimension_numbers<[1], [0], [0], [1], [0, 0, 1, 1], [], []>} : vector<8x128xf32>, vector<128x128xf32>, vector<8x128xf32> -> vector<8x128xf32>
    %38 = vector.extract_strided_slice %37 {offsets = [0, 0], sizes = [1, 128], strides = [1, 1]} : vector<8x128xf32> to vector<1x128xf32>
    %c0_33 = arith.constant 0 : index
    %c0_34 = arith.constant 0 : index
    %39 = memref.load %arg13[%c0_33, %c0_34] : memref<1x1xf32, #tpu.memory_space<smem>>
    %40 = vector.broadcast %39 : f32 to vector<1x128xf32>
    %41 = arith.addf %38, %40 : vector<1x128xf32>
    %c0_35 = arith.constant 0 : index
    %c0_36 = arith.constant 0 : index
    %42 = vector.load %arg14[%c0_35, %c0_36] : memref<1x128xf32, #tpu.memory_space<vmem>>, vector<1x128xf32>
    tpu.vector_store %arg14[%c0_35, %c0_36], %41 {strides = array<i32>} : memref<1x128xf32, #tpu.memory_space<vmem>>, vector<1x128xf32>,
    return
  }
  func.func @transform_0(%arg0: i32) -> (i32, i32) {
    %c0_i32 = arith.constant 0 : i32
    %c0_i32_0 = arith.constant 0 : i32
    return %arg0, %c0_i32 : i32, i32
  }
  func.func @transform_1(%arg0: i32) -> (i32, i32) {
    %c0_i32 = arith.constant 0 : i32
    %c0_i32_0 = arith.constant 0 : i32
    %c0_i32_1 = arith.constant 0 : i32
    return %c0_i32, %c0_i32_0 : i32, i32
  }
  func.func @transform_2(%arg0: i32) -> (i32, i32) {
    %c0_i32 = arith.constant 0 : i32
    %c0_i32_0 = arith.constant 0 : i32
    %c0_i32_1 = arith.constant 0 : i32
    return %c0_i32, %c0_i32_0 : i32, i32
  }
  func.func @transform_3(%arg0: i32) -> (i32, i32) {
    %c0_i32 = arith.constant 0 : i32
    %c0_i32_0 = arith.constant 0 : i32
    %c0_i32_1 = arith.constant 0 : i32
    return %c0_i32, %c0_i32_0 : i32, i32
  }
  func.func @transform_4(%arg0: i32) -> (i32, i32) {
    %c0_i32 = arith.constant 0 : i32
    %c0_i32_0 = arith.constant 0 : i32
    %c0_i32_1 = arith.constant 0 : i32
    return %c0_i32, %c0_i32_0 : i32, i32
  }
  func.func @transform_5(%arg0: i32) -> (i32, i32) {
    %c0_i32 = arith.constant 0 : i32
    %c0_i32_0 = arith.constant 0 : i32
    %c0_i32_1 = arith.constant 0 : i32
    return %c0_i32, %c0_i32_0 : i32, i32
  }
  func.func @transform_6(%arg0: i32) -> (i32, i32) {
    %c0_i32 = arith.constant 0 : i32
    %c0_i32_0 = arith.constant 0 : i32
    %c0_i32_1 = arith.constant 0 : i32
    return %c0_i32, %c0_i32_0 : i32, i32
  }
  func.func @transform_7(%arg0: i32) -> (i32, i32) {
    %c0_i32 = arith.constant 0 : i32
    %c0_i32_0 = arith.constant 0 : i32
    %c0_i32_1 = arith.constant 0 : i32
    return %c0_i32, %c0_i32_0 : i32, i32
  }
  func.func @transform_8(%arg0: i32) -> (i32, i32) {
    %c0_i32 = arith.constant 0 : i32
    %c0_i32_0 = arith.constant 0 : i32
    %c0_i32_1 = arith.constant 0 : i32
    return %c0_i32, %c0_i32_0 : i32, i32
  }
  func.func @transform_9(%arg0: i32) -> (i32, i32) {
    %c0_i32 = arith.constant 0 : i32
    %c0_i32_0 = arith.constant 0 : i32
    %c0_i32_1 = arith.constant 0 : i32
    return %c0_i32, %c0_i32_0 : i32, i32
  }
  func.func @transform_10(%arg0: i32) -> (i32, i32) {
    %c0_i32 = arith.constant 0 : i32
    %c0_i32_0 = arith.constant 0 : i32
    %c0_i32_1 = arith.constant 0 : i32
    return %c0_i32, %c0_i32_0 : i32, i32
  }
  func.func @transform_11(%arg0: i32) -> (i32, i32) {
    %c0_i32 = arith.constant 0 : i32
    %c0_i32_0 = arith.constant 0 : i32
    %c0_i32_1 = arith.constant 0 : i32
    return %c0_i32, %c0_i32_0 : i32, i32
  }
  func.func @transform_12(%arg0: i32) -> (i32, i32) {
    %c0_i32 = arith.constant 0 : i32
    %c0_i32_0 = arith.constant 0 : i32
    %c0_i32_1 = arith.constant 0 : i32
    return %c0_i32, %c0_i32_0 : i32, i32
  }
  func.func @transform_13(%arg0: i32) -> (i32, i32) {
    %c0_i32 = arith.constant 0 : i32
    %c0_i32_0 = arith.constant 0 : i32
    return %c0_i32, %arg0 : i32, i32
  }
}

module attributes {stable_mosaic.version = 11 : i64} {
  func.func @mscale_mlp_kernel(%arg0: i32, %arg1: memref<128x4xf32, #tpu.memory_space<vmem>>, %arg2: memref<128x4xf32, #tpu.memory_space<vmem>>, %arg3: memref<128x1xf32, #tpu.memory_space<vmem>>, %arg4: memref<128x128xf32, #tpu.memory_space<vmem>>, %arg5: memref<128x1xf32, #tpu.memory_space<vmem>>, %arg6: memref<128x128xf32, #tpu.memory_space<vmem>>, %arg7: memref<128x1xf32, #tpu.memory_space<vmem>>, %arg8: memref<128x128xf32, #tpu.memory_space<vmem>>, %arg9: memref<128x1xf32, #tpu.memory_space<vmem>>, %arg10: memref<128x128xf32, #tpu.memory_space<vmem>>, %arg11: memref<128x1xf32, #tpu.memory_space<vmem>>, %arg12: memref<8x128xf32, #tpu.memory_space<vmem>>, %arg13: memref<1x1xf32, #tpu.memory_space<smem>>, %arg14: memref<1x128xf32, #tpu.memory_space<vmem>>) attributes {dimension_semantics = [#tpu.dimension_semantics<parallel>], iteration_bounds = array<i64: 1>, scalar_prefetch = 0 : i64, scratch_operands = 0 : i64, tpu.core_type = #tpu.core_type<tc>, window_params = [{transform_indices = @transform_0, window_bounds = array<i64: 128, 4>}, {pipeline_mode = #tpu.pipeline_mode<synchronous>, transform_indices = @transform_1, window_bounds = array<i64: 128, 4>}, {pipeline_mode = #tpu.pipeline_mode<synchronous>, transform_indices = @transform_2, window_bounds = array<i64: 128, 1>}, {pipeline_mode = #tpu.pipeline_mode<synchronous>, transform_indices = @transform_3, window_bounds = array<i64: 128, 128>}, {pipeline_mode = #tpu.pipeline_mode<synchronous>, transform_indices = @transform_4, window_bounds = array<i64: 128, 1>}, {pipeline_mode = #tpu.pipeline_mode<synchronous>, transform_indices = @transform_5, window_bounds = array<i64: 128, 128>}, {pipeline_mode = #tpu.pipeline_mode<synchronous>, transform_indices = @transform_6, window_bounds = array<i64: 128, 1>}, {pipeline_mode = #tpu.pipeline_mode<synchronous>, transform_indices = @transform_7, window_bounds = array<i64: 128, 128>}, {pipeline_mode = #tpu.pipeline_mode<synchronous>, transform_indices = @transform_8, window_bounds = array<i64: 128, 1>}, {pipeline_mode = #tpu.pipeline_mode<synchronous>, transform_indices = @transform_9, window_bounds = array<i64: 128, 128>}, {pipeline_mode = #tpu.pipeline_mode<synchronous>, transform_indices = @transform_10, window_bounds = array<i64: 128, 1>}, {pipeline_mode = #tpu.pipeline_mode<synchronous>, transform_indices = @transform_11, window_bounds = array<i64: 8, 128>}, {transform_indices = @transform_12, window_bounds = array<i64: 1, 1>}, {transform_indices = @transform_13, window_bounds = array<i64: 1, 128>}]} {
    %c0 = arith.constant 0 : index
    %c0_0 = arith.constant 0 : index
    %0 = vector.load %arg2[%c0, %c0_0] : memref<128x4xf32, #tpu.memory_space<vmem>>, vector<128x4xf32>
    %c0_1 = arith.constant 0 : index
    %c0_2 = arith.constant 0 : index
    %1 = vector.load %arg1[%c0_1, %c0_2] : memref<128x4xf32, #tpu.memory_space<vmem>>, vector<128x4xf32>
    %cst = arith.constant dense<0.000000e+00> : vector<128x128xf32>
    %2 = tpu.matmul %0, %1, %cst {dimension_numbers = #tpu.dot_dimension_numbers<[1], [1], [0], [0], [0, 0, 1, 0], [], []>} : vector<128x4xf32>, vector<128x4xf32>, vector<128x128xf32> -> vector<128x128xf32>
    %c0_3 = arith.constant 0 : index
    %c0_4 = arith.constant 0 : index
    %3 = vector.load %arg3[%c0_3, %c0_4] : memref<128x1xf32, #tpu.memory_space<vmem>>, vector<128x1xf32>
    %4 = vector.broadcast %3 : vector<128x1xf32> to vector<128x128xf32>
    %5 = arith.addf %2, %4 : vector<128x128xf32>
    %cst_5 = arith.constant 0.000000e+00 : f32
    %6 = vector.broadcast %cst_5 : f32 to vector<128x128xf32>
    %7 = arith.maximumf %5, %6 : vector<128x128xf32>
    %c0_6 = arith.constant 0 : index
    %c0_7 = arith.constant 0 : index
    %8 = vector.load %arg4[%c0_6, %c0_7] : memref<128x128xf32, #tpu.memory_space<vmem>>, vector<128x128xf32>
    %cst_8 = arith.constant dense<0.000000e+00> : vector<128x128xf32>
    %9 = tpu.matmul %8, %7, %cst_8 {dimension_numbers = #tpu.dot_dimension_numbers<[1], [0], [0], [1], [0, 0, 1, 1], [], []>} : vector<128x128xf32>, vector<128x128xf32>, vector<128x128xf32> -> vector<128x128xf32>
    %c0_9 = arith.constant 0 : index
    %c0_10 = arith.constant 0 : index
    %10 = vector.load %arg5[%c0_9, %c0_10] : memref<128x1xf32, #tpu.memory_space<vmem>>, vector<128x1xf32>
    %11 = vector.broadcast %10 : vector<128x1xf32> to vector<128x128xf32>
    %12 = arith.addf %9, %11 : vector<128x128xf32>
    %cst_11 = arith.constant 0.000000e+00 : f32
    %13 = vector.broadcast %cst_11 : f32 to vector<128x128xf32>
    %14 = arith.maximumf %12, %13 : vector<128x128xf32>
    %c0_12 = arith.constant 0 : index
    %c0_13 = arith.constant 0 : index
    %15 = vector.load %arg6[%c0_12, %c0_13] : memref<128x128xf32, #tpu.memory_space<vmem>>, vector<128x128xf32>
    %cst_14 = arith.constant dense<0.000000e+00> : vector<128x128xf32>
    %16 = tpu.matmul %15, %14, %cst_14 {dimension_numbers = #tpu.dot_dimension_numbers<[1], [0], [0], [1], [0, 0, 1, 1], [], []>} : vector<128x128xf32>, vector<128x128xf32>, vector<128x128xf32> -> vector<128x128xf32>
    %c0_15 = arith.constant 0 : index
    %c0_16 = arith.constant 0 : index
    %17 = vector.load %arg7[%c0_15, %c0_16] : memref<128x1xf32, #tpu.memory_space<vmem>>, vector<128x1xf32>
    %18 = vector.broadcast %17 : vector<128x1xf32> to vector<128x128xf32>
    %19 = arith.addf %16, %18 : vector<128x128xf32>
    %cst_17 = arith.constant 0.000000e+00 : f32
    %20 = vector.broadcast %cst_17 : f32 to vector<128x128xf32>
    %21 = arith.maximumf %19, %20 : vector<128x128xf32>
    %c0_18 = arith.constant 0 : index
    %c0_19 = arith.constant 0 : index
    %22 = vector.load %arg8[%c0_18, %c0_19] : memref<128x128xf32, #tpu.memory_space<vmem>>, vector<128x128xf32>
    %cst_20 = arith.constant dense<0.000000e+00> : vector<128x128xf32>
    %23 = tpu.matmul %22, %21, %cst_20 {dimension_numbers = #tpu.dot_dimension_numbers<[1], [0], [0], [1], [0, 0, 1, 1], [], []>} : vector<128x128xf32>, vector<128x128xf32>, vector<128x128xf32> -> vector<128x128xf32>
    %c0_21 = arith.constant 0 : index
    %c0_22 = arith.constant 0 : index
    %24 = vector.load %arg9[%c0_21, %c0_22] : memref<128x1xf32, #tpu.memory_space<vmem>>, vector<128x1xf32>
    %25 = vector.broadcast %24 : vector<128x1xf32> to vector<128x128xf32>
    %26 = arith.addf %23, %25 : vector<128x128xf32>
    %cst_23 = arith.constant 0.000000e+00 : f32
    %27 = vector.broadcast %cst_23 : f32 to vector<128x128xf32>
    %28 = arith.maximumf %26, %27 : vector<128x128xf32>
    %c0_24 = arith.constant 0 : index
    %c0_25 = arith.constant 0 : index
    %29 = vector.load %arg10[%c0_24, %c0_25] : memref<128x128xf32, #tpu.memory_space<vmem>>, vector<128x128xf32>
    %cst_26 = arith.constant dense<0.000000e+00> : vector<128x128xf32>
    %30 = tpu.matmul %29, %28, %cst_26 {dimension_numbers = #tpu.dot_dimension_numbers<[1], [0], [0], [1], [0, 0, 1, 1], [], []>} : vector<128x128xf32>, vector<128x128xf32>, vector<128x128xf32> -> vector<128x128xf32>
    %c0_27 = arith.constant 0 : index
    %c0_28 = arith.constant 0 : index
    %31 = vector.load %arg11[%c0_27, %c0_28] : memref<128x1xf32, #tpu.memory_space<vmem>>, vector<128x1xf32>
    %32 = vector.broadcast %31 : vector<128x1xf32> to vector<128x128xf32>
    %33 = arith.addf %30, %32 : vector<128x128xf32>
    %cst_29 = arith.constant 0.000000e+00 : f32
    %34 = vector.broadcast %cst_29 : f32 to vector<128x128xf32>
    %35 = arith.maximumf %33, %34 : vector<128x128xf32>
    %c0_30 = arith.constant 0 : index
    %c0_31 = arith.constant 0 : index
    %36 = vector.load %arg12[%c0_30, %c0_31] : memref<8x128xf32, #tpu.memory_space<vmem>>, vector<8x128xf32>
    %cst_32 = arith.constant dense<0.000000e+00> : vector<8x128xf32>
    %37 = tpu.matmul %36, %35, %cst_32 {dimension_numbers = #tpu.dot_dimension_numbers<[1], [0], [0], [1], [0, 0, 1, 1], [], []>} : vector<8x128xf32>, vector<128x128xf32>, vector<8x128xf32> -> vector<8x128xf32>
    %38 = vector.extract_strided_slice %37 {offsets = [0, 0], sizes = [1, 128], strides = [1, 1]} : vector<8x128xf32> to vector<1x128xf32>
    %c0_33 = arith.constant 0 : index
    %c0_34 = arith.constant 0 : index
    %39 = memref.load %arg13[%c0_33, %c0_34] : memref<1x1xf32, #tpu.memory_space<smem>>
    %40 = vector.broadcast %39 : f32 to vector<1x128xf32>
    %41 = arith.addf %38, %40 : vector<1x128xf32>
    %c0_35 = arith.constant 0 : index
    %c0_36 = arith.constant 0 : index
    %42 = vector.load %arg14[%c0_35, %c0_36] : memref<1x128xf32, #tpu.memory_space<vmem>>, vector<1x128xf32>
    tpu.vector_store %arg14[%c0_35, %c0_36], %41 {strides = array<i32>} : memref<1x128xf32, #tpu.memory_space<vmem>>, vector<1x128xf32>,
    return
  }
  func.func @transform_0(%arg0: i32) -> (i32, i32) {
    %c0_i32 = arith.constant 0 : i32
    %c0_i32_0 = arith.constant 0 : i32
    return %arg0, %c0_i32 : i32, i32
  }
  func.func @transform_1(%arg0: i32) -> (i32, i32) {
    %c0_i32 = arith.constant 0 : i32
    %c0_i32_0 = arith.constant 0 : i32
    %c0_i32_1 = arith.constant 0 : i32
    return %c0_i32, %c0_i32_0 : i32, i32
  }
  func.func @transform_2(%arg0: i32) -> (i32, i32) {
    %c0_i32 = arith.constant 0 : i32
    %c0_i32_0 = arith.constant 0 : i32
    %c0_i32_1 = arith.constant 0 : i32
    return %c0_i32, %c0_i32_0 : i32, i32
  }
  func.func @transform_3(%arg0: i32) -> (i32, i32) {
    %c0_i32 = arith.constant 0 : i32
    %c0_i32_0 = arith.constant 0 : i32
    %c0_i32_1 = arith.constant 0 : i32
    return %c0_i32, %c0_i32_0 : i32, i32
  }
  func.func @transform_4(%arg0: i32) -> (i32, i32) {
    %c0_i32 = arith.constant 0 : i32
    %c0_i32_0 = arith.constant 0 : i32
    %c0_i32_1 = arith.constant 0 : i32
    return %c0_i32, %c0_i32_0 : i32, i32
  }
  func.func @transform_5(%arg0: i32) -> (i32, i32) {
    %c0_i32 = arith.constant 0 : i32
    %c0_i32_0 = arith.constant 0 : i32
    %c0_i32_1 = arith.constant 0 : i32
    return %c0_i32, %c0_i32_0 : i32, i32
  }
  func.func @transform_6(%arg0: i32) -> (i32, i32) {
    %c0_i32 = arith.constant 0 : i32
    %c0_i32_0 = arith.constant 0 : i32
    %c0_i32_1 = arith.constant 0 : i32
    return %c0_i32, %c0_i32_0 : i32, i32
  }
  func.func @transform_7(%arg0: i32) -> (i32, i32) {
    %c0_i32 = arith.constant 0 : i32
    %c0_i32_0 = arith.constant 0 : i32
    %c0_i32_1 = arith.constant 0 : i32
    return %c0_i32, %c0_i32_0 : i32, i32
  }
  func.func @transform_8(%arg0: i32) -> (i32, i32) {
    %c0_i32 = arith.constant 0 : i32
    %c0_i32_0 = arith.constant 0 : i32
    %c0_i32_1 = arith.constant 0 : i32
    return %c0_i32, %c0_i32_0 : i32, i32
  }
  func.func @transform_9(%arg0: i32) -> (i32, i32) {
    %c0_i32 = arith.constant 0 : i32
    %c0_i32_0 = arith.constant 0 : i32
    %c0_i32_1 = arith.constant 0 : i32
    return %c0_i32, %c0_i32_0 : i32, i32
  }
  func.func @transform_10(%arg0: i32) -> (i32, i32) {
    %c0_i32 = arith.constant 0 : i32
    %c0_i32_0 = arith.constant 0 : i32
    %c0_i32_1 = arith.constant 0 : i32
    return %c0_i32, %c0_i32_0 : i32, i32
  }
  func.func @transform_11(%arg0: i32) -> (i32, i32) {
    %c0_i32 = arith.constant 0 : i32
    %c0_i32_0 = arith.constant 0 : i32
    %c0_i32_1 = arith.constant 0 : i32
    return %c0_i32, %c0_i32_0 : i32, i32
  }
  func.func @transform_12(%arg0: i32) -> (i32, i32) {
    %c0_i32 = arith.constant 0 : i32
    %c0_i32_0 = arith.constant 0 : i32
    %c0_i32_1 = arith.constant 0 : i32
    return %c0_i32, %c0_i32_0 : i32, i32
  }
  func.func @transform_13(%arg0: i32) -> (i32, i32) {
    %c0_i32 = arith.constant 0 : i32
    %c0_i32_0 = arith.constant 0 : i32
    return %c0_i32, %arg0 : i32, i32
  }
}

</mosaic_0001>

<llo_original>
// kernel: tpu_custom_call.1
$region0: #{tpu_custom_call.1}
  #allocation0 [shape = 'u32[]', space=smem, size = 0x4, offset = 0x4, fixed_abs, tag = 'smem constant byte address 0x4 - core index']
  #allocation1 [shape = 'u32[144,128]{1,0:T(1,128)}', space=vmem, size = 0x12000, scoped, tag = 'internal scratch']
  #allocation2 [shape = 'f32[1,1]{1,0:T(1,128)S(6)}', space=smem, size = 0x200, scoped, tag = 'scoped memory for tpu_custom_call.1']
  %s0 = inlined_call_operand.hbm [shape: f32[8,4], index: 0, kind: input, shape index: {}]
  %s1 = inlined_call_operand.hbm [shape: f32[128,4], index: 1, kind: input, shape index: {}]
  %s2 = inlined_call_operand.hbm [shape: f32[128,1], index: 2, kind: input, shape index: {}]
  %s3 = inlined_call_operand.hbm [shape: f32[128,128], index: 3, kind: input, shape index: {}]
  %s4 = inlined_call_operand.hbm [shape: f32[128,1], index: 4, kind: input, shape index: {}]
  %s5 = inlined_call_operand.hbm [shape: f32[128,128], index: 5, kind: input, shape index: {}]
  %s6 = inlined_call_operand.hbm [shape: f32[128,1], index: 6, kind: input, shape index: {}]
  %s7 = inlined_call_operand.hbm [shape: f32[128,128], index: 7, kind: input, shape index: {}]
  %s8 = inlined_call_operand.hbm [shape: f32[128,1], index: 8, kind: input, shape index: {}]
  %s9 = inlined_call_operand.hbm [shape: f32[128,128], index: 9, kind: input, shape index: {}]
  %s10 = inlined_call_operand.hbm [shape: f32[128,1], index: 10, kind: input, shape index: {}]
  %s11 = inlined_call_operand.hbm [shape: f32[8,128], index: 11, kind: input, shape index: {}]
  %s12 = inlined_call_operand.<no memory space> [shape: f32[1,1], index: 12, kind: input, shape index: {}]
  %s13 = inlined_call_operand.hbm [shape: f32[1,8], index: 13, kind: output, shape index: {}]
  %s14 = sld [smem:[#allocation0]]
  $region110: #{tpu_custom_call.1} parent=0
    _
  %s16 = ssub.s32 1, %s14
  %s17 = scalar_select 0, %s16, %s14
  %18 = sst [smem:[#allocation2]] %s12
  $region1: #{tpu_custom_call.1} parent=0
    #allocation3 [shape = 'u8[65536]{0}', space=vmem, size = 0x10000, scoped, tag = 'input window, operand 0, single buffered']
    #allocation4 [shape = 's32[1]{0}', space=sflag, size = 0x4, scoped, tag = 'scoped memory for tpu_custom_call.1']
    #allocation5 [shape = 's32[1]{0}', space=sflag, size = 0x4, scoped, tag = 'scoped memory for tpu_custom_call.1']
    #allocation6 [shape = 'u8[65536]{0}', space=vmem, size = 0x10000, scoped, tag = 'input window, operand 1, single buffered']
    #allocation7 [shape = 's32[1]{0}', space=sflag, size = 0x4, scoped, tag = 'scoped memory for tpu_custom_call.1']
    #allocation8 [shape = 'u8[65536]{0}', space=vmem, size = 0x10000, scoped, tag = 'input window, operand 2, single buffered']
    #allocation9 [shape = 'u8[65536]{0}', space=vmem, size = 0x10000, scoped, tag = 'input window, operand 3, single buffered']
    #allocation10 [shape = 's32[1]{0}', space=sflag, size = 0x4, scoped, tag = 'scoped memory for tpu_custom_call.1']
    #allocation11 [shape = 'u8[65536]{0}', space=vmem, size = 0x10000, scoped, tag = 'input window, operand 4, single buffered']
    #allocation12 [shape = 'u8[65536]{0}', space=vmem, size = 0x10000, scoped, tag = 'input window, operand 5, single buffered']
    #allocation13 [shape = 's32[1]{0}', space=sflag, size = 0x4, scoped, tag = 'scoped memory for tpu_custom_call.1']
    #allocation14 [shape = 'u8[65536]{0}', space=vmem, size = 0x10000, scoped, tag = 'input window, operand 6, single buffered']
    #allocation15 [shape = 'u8[65536]{0}', space=vmem, size = 0x10000, scoped, tag = 'input window, operand 7, single buffered']
    #allocation16 [shape = 's32[1]{0}', space=sflag, size = 0x4, scoped, tag = 'scoped memory for tpu_custom_call.1']
    #allocation17 [shape = 'u8[65536]{0}', space=vmem, size = 0x10000, scoped, tag = 'input window, operand 8, single buffered']
    #allocation18 [shape = 'u8[65536]{0}', space=vmem, size = 0x10000, scoped, tag = 'input window, operand 9, single buffered']
    #allocation19 [shape = 's32[1]{0}', space=sflag, size = 0x4, scoped, tag = 'scoped memory for tpu_custom_call.1']
    #allocation20 [shape = 'u8[65536]{0}', space=vmem, size = 0x10000, scoped, tag = 'input window, operand 10, single buffered']
    #allocation21 [shape = 'u8[4096]{0}', space=vmem, size = 0x1000, scoped, tag = 'input window, operand 11, single buffered']
    #allocation22 [shape = 's32[1]{0}', space=sflag, size = 0x4, scoped, tag = 'scoped memory for tpu_custom_call.1']
    #allocation23 [shape = 'u8[512]{0}', space=vmem, size = 0x400, scoped, tag = 'output window, operand 0, single buffered']
    %19 = vsyncpa [#allocation4], 0
    %20 = vsyncpa [#allocation7], 0
    %21 = vsyncpa [#allocation10], 0
    %22 = vsyncpa [#allocation13], 0
    %23 = vsyncpa [#allocation16], 0
    %24 = vsyncpa [#allocation19], 0
    %25 = vsyncpa [#allocation22], 0
    %26 = vsyncpa [#allocation5], 0
    // Predicated region
    $region2: #{tpu_custom_call.1} parent=1 // pred_check
      _
    $region3: #{tpu_custom_call.1} parent=1 // pred_check_branch
      %28 = sbr.rel (0) target = $region5
    $region4: #{tpu_custom_call.1} parent=1 // pred_region
      %s30 = ssub.s32 2048, 128
      %31 = vsyncadd [#allocation4], %s30
      %s32 = sshll.u32 [#allocation3], 4
      %s33 = int_to_ptr.vmem [resolvable:$true] %s32
      %38 = dma.hbm_to_vmem [thread:$0]  %s0, 128, %s33, [#allocation4], 128, 128, 8
    $region5: #{tpu_custom_call.1} parent=1 // pred_fallthru
      _
    // Predicated region
    $region6: #{tpu_custom_call.1} parent=1 // pred_check
      _
    $region7: #{tpu_custom_call.1} parent=1 // pred_check_branch
      %40 = sbr.rel (0) target = $region9
    $region8: #{tpu_custom_call.1} parent=1 // pred_region
      %s42 = ssub.s32 2048, 2048
      %43 = vsyncadd [#allocation7], %s42
      %s44 = sshll.u32 [#allocation6], 4
      %s45 = int_to_ptr.vmem [resolvable:$true] %s44
      %50 = dma.hbm_to_vmem [thread:$0]  %s1, 2048, %s45, [#allocation7], 128, 128, 8
    $region9: #{tpu_custom_call.1} parent=1 // pred_fallthru
      _
    // Predicated region
    $region10: #{tpu_custom_call.1} parent=1 // pred_check
      _
    $region11: #{tpu_custom_call.1} parent=1 // pred_check_branch
      %52 = sbr.rel (0) target = $region13
    $region12: #{tpu_custom_call.1} parent=1 // pred_region
      %s54 = ssub.s32 2048, 2048
      %55 = vsyncadd [#allocation7], %s54
      %s56 = sshll.u32 [#allocation8], 4
      %s57 = int_to_ptr.vmem [resolvable:$true] %s56
      %62 = dma.hbm_to_vmem [thread:$0]  %s2, 2048, %s57, [#allocation7], 128, 128, 8
    $region13: #{tpu_custom_call.1} parent=1 // pred_fallthru
      _
    // Predicated region
    $region14: #{tpu_custom_call.1} parent=1 // pred_check
      _
    $region15: #{tpu_custom_call.1} parent=1 // pred_check_branch
      %64 = sbr.rel (0) target = $region17
    $region16: #{tpu_custom_call.1} parent=1 // pred_region
      %s66 = ssub.s32 2048, 2048
      %67 = vsyncadd [#allocation10], %s66
      %s68 = sshll.u32 [#allocation9], 4
      %s69 = int_to_ptr.vmem [resolvable:$true] %s68
      %74 = dma.hbm_to_vmem [thread:$0]  %s3, 2048, %s69, [#allocation10], 128, 128, 8
    $region17: #{tpu_custom_call.1} parent=1 // pred_fallthru
      _
    // Predicated region
    $region18: #{tpu_custom_call.1} parent=1 // pred_check
      _
    $region19: #{tpu_custom_call.1} parent=1 // pred_check_branch
      %76 = sbr.rel (0) target = $region21
    $region20: #{tpu_custom_call.1} parent=1 // pred_region
      %s78 = ssub.s32 2048, 2048
      %79 = vsyncadd [#allocation10], %s78
      %s80 = sshll.u32 [#allocation11], 4
      %s81 = int_to_ptr.vmem [resolvable:$true] %s80
      %86 = dma.hbm_to_vmem [thread:$0]  %s4, 2048, %s81, [#allocation10], 128, 128, 8
    $region21: #{tpu_custom_call.1} parent=1 // pred_fallthru
      _
    // Predicated region
    $region22: #{tpu_custom_call.1} parent=1 // pred_check
      _
    $region23: #{tpu_custom_call.1} parent=1 // pred_check_branch
      %88 = sbr.rel (0) target = $region25
    $region24: #{tpu_custom_call.1} parent=1 // pred_region
      %s90 = ssub.s32 2048, 2048
      %91 = vsyncadd [#allocation13], %s90
      %s92 = sshll.u32 [#allocation12], 4
      %s93 = int_to_ptr.vmem [resolvable:$true] %s92
      %98 = dma.hbm_to_vmem [thread:$0]  %s5, 2048, %s93, [#allocation13], 128, 128, 8
    $region25: #{tpu_custom_call.1} parent=1 // pred_fallthru
      _
    // Predicated region
    $region26: #{tpu_custom_call.1} parent=1 // pred_check
      _
    $region27: #{tpu_custom_call.1} parent=1 // pred_check_branch
      %100 = sbr.rel (0) target = $region29
    $region28: #{tpu_custom_call.1} parent=1 // pred_region
      %s102 = ssub.s32 2048, 2048
      %103 = vsyncadd [#allocation13], %s102
      %s104 = sshll.u32 [#allocation14], 4
      %s105 = int_to_ptr.vmem [resolvable:$true] %s104
      %110 = dma.hbm_to_vmem [thread:$0]  %s6, 2048, %s105, [#allocation13], 128, 128, 8
    $region29: #{tpu_custom_call.1} parent=1 // pred_fallthru
      _
    // Predicated region
    $region30: #{tpu_custom_call.1} parent=1 // pred_check
      _
    $region31: #{tpu_custom_call.1} parent=1 // pred_check_branch
      %112 = sbr.rel (0) target = $region33
    $region32: #{tpu_custom_call.1} parent=1 // pred_region
      %s114 = ssub.s32 2048, 2048
      %115 = vsyncadd [#allocation16], %s114
      %s116 = sshll.u32 [#allocation15], 4
      %s117 = int_to_ptr.vmem [resolvable:$true] %s116
      %122 = dma.hbm_to_vmem [thread:$0]  %s7, 2048, %s117, [#allocation16], 128, 128, 8
    $region33: #{tpu_custom_call.1} parent=1 // pred_fallthru
      _
    // Predicated region
    $region34: #{tpu_custom_call.1} parent=1 // pred_check
      _
    $region35: #{tpu_custom_call.1} parent=1 // pred_check_branch
      %124 = sbr.rel (0) target = $region37
    $region36: #{tpu_custom_call.1} parent=1 // pred_region
      %s126 = ssub.s32 2048, 2048
      %127 = vsyncadd [#allocation16], %s126
      %s128 = sshll.u32 [#allocation17], 4
      %s129 = int_to_ptr.vmem [resolvable:$true] %s128
      %134 = dma.hbm_to_vmem [thread:$0]  %s8, 2048, %s129, [#allocation16], 128, 128, 8
    $region37: #{tpu_custom_call.1} parent=1 // pred_fallthru
      _
    // Predicated region
    $region38: #{tpu_custom_call.1} parent=1 // pred_check
      _
    $region39: #{tpu_custom_call.1} parent=1 // pred_check_branch
      %136 = sbr.rel (0) target = $region41
    $region40: #{tpu_custom_call.1} parent=1 // pred_region
      %s138 = ssub.s32 2048, 2048
      %139 = vsyncadd [#allocation19], %s138
      %s140 = sshll.u32 [#allocation18], 4
      %s141 = int_to_ptr.vmem [resolvable:$true] %s140
      %146 = dma.hbm_to_vmem [thread:$0]  %s9, 2048, %s141, [#allocation19], 128, 128, 8
    $region41: #{tpu_custom_call.1} parent=1 // pred_fallthru
      _
    // Predicated region
    $region42: #{tpu_custom_call.1} parent=1 // pred_check
      _
    $region43: #{tpu_custom_call.1} parent=1 // pred_check_branch
      %148 = sbr.rel (0) target = $region45
    $region44: #{tpu_custom_call.1} parent=1 // pred_region
      %s150 = ssub.s32 2048, 2048
      %151 = vsyncadd [#allocation19], %s150
      %s152 = sshll.u32 [#allocation20], 4
      %s153 = int_to_ptr.vmem [resolvable:$true] %s152
      %158 = dma.hbm_to_vmem [thread:$0]  %s10, 2048, %s153, [#allocation19], 128, 128, 8
    $region45: #{tpu_custom_call.1} parent=1 // pred_fallthru
      _
    // Predicated region
    $region46: #{tpu_custom_call.1} parent=1 // pred_check
      _
    $region47: #{tpu_custom_call.1} parent=1 // pred_check_branch
      %160 = sbr.rel (0) target = $region49
    $region48: #{tpu_custom_call.1} parent=1 // pred_region
      %s162 = ssub.s32 128, 128
      %163 = vsyncadd [#allocation22], %s162
      %s165 = sshll.u32 [#allocation21], 4
      %s166 = int_to_ptr.vmem [resolvable:$true] %s165
      %168 = dma.hbm_to_vmem [thread:$0]  %s11, 128, %s166, [#allocation22]
    $region49: #{tpu_custom_call.1} parent=1 // pred_fallthru
      _
    // Predicated region
    $region50: #{tpu_custom_call.1} parent=1 // pred_check
      _
    $region51: #{tpu_custom_call.1} parent=1 // pred_check_branch
      %170 = sbr.rel (0) target = $region53
    $region52: #{tpu_custom_call.1} parent=1 // pred_region
      _
    $region53: #{tpu_custom_call.1} parent=1 // pred_fallthru
      _
    // Predicated region
    $region54: #{tpu_custom_call.1} parent=1 // pred_check
      _
    $region55: #{tpu_custom_call.1} parent=1 // pred_check_branch
      %172 = sbr.rel (0) target = $region57
    $region56: #{tpu_custom_call.1} parent=1 // pred_region
      %173 = dma.done [#allocation4], 2048
    $region57: #{tpu_custom_call.1} parent=1 // pred_fallthru
      _
    // Predicated region
    $region58: #{tpu_custom_call.1} parent=1 // pred_check
      _
    $region59: #{tpu_custom_call.1} parent=1 // pred_check_branch
      %175 = sbr.rel (0) target = $region61
    $region60: #{tpu_custom_call.1} parent=1 // pred_region
      %176 = dma.done [#allocation7], 2048
    $region61: #{tpu_custom_call.1} parent=1 // pred_fallthru
      _
    // Predicated region
    $region62: #{tpu_custom_call.1} parent=1 // pred_check
      _
    $region63: #{tpu_custom_call.1} parent=1 // pred_check_branch
      %178 = sbr.rel (0) target = $region65
    $region64: #{tpu_custom_call.1} parent=1 // pred_region
      %179 = dma.done [#allocation7], 2048
    $region65: #{tpu_custom_call.1} parent=1 // pred_fallthru
      _
    // Predicated region
    $region66: #{tpu_custom_call.1} parent=1 // pred_check
      _
    $region67: #{tpu_custom_call.1} parent=1 // pred_check_branch
      %181 = sbr.rel (0) target = $region69
    $region68: #{tpu_custom_call.1} parent=1 // pred_region
      %182 = dma.done [#allocation10], 2048
    $region69: #{tpu_custom_call.1} parent=1 // pred_fallthru
      _
    // Predicated region
    $region70: #{tpu_custom_call.1} parent=1 // pred_check
      _
    $region71: #{tpu_custom_call.1} parent=1 // pred_check_branch
      %184 = sbr.rel (0) target = $region73
    $region72: #{tpu_custom_call.1} parent=1 // pred_region
      %185 = dma.done [#allocation10], 2048
    $region73: #{tpu_custom_call.1} parent=1 // pred_fallthru
      _
    // Predicated region
    $region74: #{tpu_custom_call.1} parent=1 // pred_check
      _
    $region75: #{tpu_custom_call.1} parent=1 // pred_check_branch
      %187 = sbr.rel (0) target = $region77
    $region76: #{tpu_custom_call.1} parent=1 // pred_region
      %188 = dma.done [#allocation13], 2048
    $region77: #{tpu_custom_call.1} parent=1 // pred_fallthru
      _
    // Predicated region
    $region78: #{tpu_custom_call.1} parent=1 // pred_check
      _
    $region79: #{tpu_custom_call.1} parent=1 // pred_check_branch
      %190 = sbr.rel (0) target = $region81
    $region80: #{tpu_custom_call.1} parent=1 // pred_region
      %191 = dma.done [#allocation13], 2048
    $region81: #{tpu_custom_call.1} parent=1 // pred_fallthru
      _
    // Predicated region
    $region82: #{tpu_custom_call.1} parent=1 // pred_check
      _
    $region83: #{tpu_custom_call.1} parent=1 // pred_check_branch
      %193 = sbr.rel (0) target = $region85
    $region84: #{tpu_custom_call.1} parent=1 // pred_region
      %194 = dma.done [#allocation16], 2048
    $region85: #{tpu_custom_call.1} parent=1 // pred_fallthru
      _
    // Predicated region
    $region86: #{tpu_custom_call.1} parent=1 // pred_check
      _
    $region87: #{tpu_custom_call.1} parent=1 // pred_check_branch
      %196 = sbr.rel (0) target = $region89
    $region88: #{tpu_custom_call.1} parent=1 // pred_region
      %197 = dma.done [#allocation16], 2048
    $region89: #{tpu_custom_call.1} parent=1 // pred_fallthru
      _
    // Predicated region
    $region90: #{tpu_custom_call.1} parent=1 // pred_check
      _
    $region91: #{tpu_custom_call.1} parent=1 // pred_check_branch
      %199 = sbr.rel (0) target = $region93
    $region92: #{tpu_custom_call.1} parent=1 // pred_region
      %200 = dma.done [#allocation19], 2048
    $region93: #{tpu_custom_call.1} parent=1 // pred_fallthru
      _
    // Predicated region
    $region94: #{tpu_custom_call.1} parent=1 // pred_check
      _
    $region95: #{tpu_custom_call.1} parent=1 // pred_check_branch
      %202 = sbr.rel (0) target = $region97
    $region96: #{tpu_custom_call.1} parent=1 // pred_region
      %203 = dma.done [#allocation19], 2048
    $region97: #{tpu_custom_call.1} parent=1 // pred_fallthru
      _
    // Predicated region
    $region98: #{tpu_custom_call.1} parent=1 // pred_check
      _
    $region99: #{tpu_custom_call.1} parent=1 // pred_check_branch
      %205 = sbr.rel (0) target = $region101
    $region100: #{tpu_custom_call.1} parent=1 // pred_region
      %206 = dma.done [#allocation22], 128
    $region101: #{tpu_custom_call.1} parent=1 // pred_fallthru
      _
    %v207 = vld [vmem:[#allocation6] sm:$0xff]
    %v208 = vld [vmem:[#allocation6 + $0x8] sm:$0xff]
    %v209 = vld [vmem:[#allocation6 + $0x10] sm:$0xff]
    %v210 = vld [vmem:[#allocation6 + $0x18] sm:$0xff]
    %v211 = vld [vmem:[#allocation6 + $0x20] sm:$0xff]
    %v212 = vld [vmem:[#allocation6 + $0x28] sm:$0xff]
    %v213 = vld [vmem:[#allocation6 + $0x30] sm:$0xff]
    %v214 = vld [vmem:[#allocation6 + $0x38] sm:$0xff]
    %v215 = vld [vmem:[#allocation6 + $0x40] sm:$0xff]
    %v216 = vld [vmem:[#allocation6 + $0x48] sm:$0xff]
    %v217 = vld [vmem:[#allocation6 + $0x50] sm:$0xff]
    %v218 = vld [vmem:[#allocation6 + $0x58] sm:$0xff]
    %v219 = vld [vmem:[#allocation6 + $0x60] sm:$0xff]
    %v220 = vld [vmem:[#allocation6 + $0x68] sm:$0xff]
    %v221 = vld [vmem:[#allocation6 + $0x70] sm:$0xff]
    %v222 = vld [vmem:[#allocation6 + $0x78] sm:$0xff]
    %v223 = vld [vmem:[#allocation3] sm:$0xff]
    %v224 = vld [vmem:[#allocation3 + $0x8] sm:$0xff]
    %v225 = vld [vmem:[#allocation3 + $0x10] sm:$0xff]
    %v226 = vld [vmem:[#allocation3 + $0x18] sm:$0xff]
    %v227 = vld [vmem:[#allocation3 + $0x20] sm:$0xff]
    %v228 = vld [vmem:[#allocation3 + $0x28] sm:$0xff]
    %v229 = vld [vmem:[#allocation3 + $0x30] sm:$0xff]
    %v230 = vld [vmem:[#allocation3 + $0x38] sm:$0xff]
    %v231 = vld [vmem:[#allocation3 + $0x40] sm:$0xff]
    %v232 = vld [vmem:[#allocation3 + $0x48] sm:$0xff]
    %v233 = vld [vmem:[#allocation3 + $0x50] sm:$0xff]
    %v234 = vld [vmem:[#allocation3 + $0x58] sm:$0xff]
    %v235 = vld [vmem:[#allocation3 + $0x60] sm:$0xff]
    %v236 = vld [vmem:[#allocation3 + $0x68] sm:$0xff]
    %v237 = vld [vmem:[#allocation3 + $0x70] sm:$0xff]
    %v238 = vld [vmem:[#allocation3 + $0x78] sm:$0xff]
    %v239 = vld [vmem:[#allocation8] sm:$0xff]
    %v240 = vld [vmem:[#allocation8 + $0x8] sm:$0xff]
    %v241 = vld [vmem:[#allocation8 + $0x10] sm:$0xff]
    %v242 = vld [vmem:[#allocation8 + $0x18] sm:$0xff]
    %v243 = vld [vmem:[#allocation8 + $0x20] sm:$0xff]
    %v244 = vld [vmem:[#allocation8 + $0x28] sm:$0xff]
    %v245 = vld [vmem:[#allocation8 + $0x30] sm:$0xff]
    %v246 = vld [vmem:[#allocation8 + $0x38] sm:$0xff]
    %v247 = vld [vmem:[#allocation8 + $0x40] sm:$0xff]
    %v248 = vld [vmem:[#allocation8 + $0x48] sm:$0xff]
    %v249 = vld [vmem:[#allocation8 + $0x50] sm:$0xff]
    %v250 = vld [vmem:[#allocation8 + $0x58] sm:$0xff]
    %v251 = vld [vmem:[#allocation8 + $0x60] sm:$0xff]
    %v252 = vld [vmem:[#allocation8 + $0x68] sm:$0xff]
    %v253 = vld [vmem:[#allocation8 + $0x70] sm:$0xff]
    %v254 = vld [vmem:[#allocation8 + $0x78] sm:$0xff]
    %256 = vset.pattern.permute.xlu0 0
    %257 = vperm.xlu0 %256, %v239
    %v258 = vpop.permute.xlu0 %257
    %261 = vset.pattern.permute.xlu0 0
    %262 = vperm.xlu0 %261, %v240
    %v263 = vpop.permute.xlu0 %262
    %266 = vset.pattern.permute.xlu0 0
    %267 = vperm.xlu0 %266, %v241
    %v268 = vpop.permute.xlu0 %267
    %271 = vset.pattern.permute.xlu0 0
    %272 = vperm.xlu0 %271, %v242
    %v273 = vpop.permute.xlu0 %272
    %276 = vset.pattern.permute.xlu0 0
    %277 = vperm.xlu0 %276, %v243
    %v278 = vpop.permute.xlu0 %277
    %281 = vset.pattern.permute.xlu0 0
    %282 = vperm.xlu0 %281, %v244
    %v283 = vpop.permute.xlu0 %282
    %286 = vset.pattern.permute.xlu0 0
    %287 = vperm.xlu0 %286, %v245
    %v288 = vpop.permute.xlu0 %287
    %291 = vset.pattern.permute.xlu0 0
    %292 = vperm.xlu0 %291, %v246
    %v293 = vpop.permute.xlu0 %292
    %296 = vset.pattern.permute.xlu0 0
    %297 = vperm.xlu0 %296, %v247
    %v298 = vpop.permute.xlu0 %297
    %301 = vset.pattern.permute.xlu0 0
    %302 = vperm.xlu0 %301, %v248
    %v303 = vpop.permute.xlu0 %302
    %306 = vset.pattern.permute.xlu0 0
    %307 = vperm.xlu0 %306, %v249
    %v308 = vpop.permute.xlu0 %307
    %311 = vset.pattern.permute.xlu0 0
    %312 = vperm.xlu0 %311, %v250
    %v313 = vpop.permute.xlu0 %312
    %316 = vset.pattern.permute.xlu0 0
    %317 = vperm.xlu0 %316, %v251
    %v318 = vpop.permute.xlu0 %317
    %321 = vset.pattern.permute.xlu0 0
    %322 = vperm.xlu0 %321, %v252
    %v323 = vpop.permute.xlu0 %322
    %326 = vset.pattern.permute.xlu0 0
    %327 = vperm.xlu0 %326, %v253
    %v328 = vpop.permute.xlu0 %327
    %331 = vset.pattern.permute.xlu0 0
    %332 = vperm.xlu0 %331, %v254
    %v333 = vpop.permute.xlu0 %332
    %vm335 = vcmask 31744
    %v337 = vsel %vm335, %v207, 0
    %v340 = vsel %vm335, %v208, 0
    %v343 = vsel %vm335, %v209, 0
    %v346 = vsel %vm335, %v210, 0
    %v349 = vsel %vm335, %v211, 0
    %v352 = vsel %vm335, %v212, 0
    %v355 = vsel %vm335, %v213, 0
    %v358 = vsel %vm335, %v214, 0
    %v361 = vsel %vm335, %v215, 0
    %v364 = vsel %vm335, %v216, 0
    %v367 = vsel %vm335, %v217, 0
    %v370 = vsel %vm335, %v218, 0
    %v373 = vsel %vm335, %v219, 0
    %v376 = vsel %vm335, %v220, 0
    %v379 = vsel %vm335, %v221, 0
    %v382 = vsel %vm335, %v222, 0
    %v385 = vsel %vm335, %v223, 0
    %v388 = vsel %vm335, %v224, 0
    %v391 = vsel %vm335, %v225, 0
    %v394 = vsel %vm335, %v226, 0
    %v397 = vsel %vm335, %v227, 0
    %v400 = vsel %vm335, %v228, 0
    %v403 = vsel %vm335, %v229, 0
    %v406 = vsel %vm335, %v230, 0
    %v409 = vsel %vm335, %v231, 0
    %v412 = vsel %vm335, %v232, 0
    %v415 = vsel %vm335, %v233, 0
    %v418 = vsel %vm335, %v234, 0
    %v421 = vsel %vm335, %v235, 0
    %v424 = vsel %vm335, %v236, 0
    %v427 = vsel %vm335, %v237, 0
    %v430 = vsel %vm335, %v238, 0
    %432 = vmatprep.subr.mxu0 0.0
    %433 = vmatpush1.xpose.msra.mxu0 %v385
    %434 = vmatprep.subr.mxu0 0.0
    %435 = vmatpush1.xpose.msra.mxu0 %v388
    %436 = vmatprep.subr.mxu0 0.0
    %437 = vmatpush1.xpose.msra.mxu0 %v391
    %438 = vmatprep.subr.mxu0 0.0
    %439 = vmatpush1.xpose.msra.mxu0 %v394
    %440 = vmatprep.subr.mxu0 0.0
    %441 = vmatpush1.xpose.msra.mxu0 %v397
    %442 = vmatprep.subr.mxu0 0.0
    %443 = vmatpush1.xpose.msra.mxu0 %v400
    %444 = vmatprep.subr.mxu0 0.0
    %445 = vmatpush1.xpose.msra.mxu0 %v403
    %446 = vmatprep.subr.mxu0 0.0
    %447 = vmatpush1.xpose.msra.mxu0 %v406
    %448 = vmatprep.subr.mxu0 0.0
    %449 = vmatpush1.xpose.msra.mxu0 %v409
    %450 = vmatprep.subr.mxu0 0.0
    %451 = vmatpush1.xpose.msra.mxu0 %v412
    %452 = vmatprep.subr.mxu0 0.0
    %453 = vmatpush1.xpose.msra.mxu0 %v415
    %454 = vmatprep.subr.mxu0 0.0
    %455 = vmatpush1.xpose.msra.mxu0 %v418
    %456 = vmatprep.subr.mxu0 0.0
    %457 = vmatpush1.xpose.msra.mxu0 %v421
    %458 = vmatprep.subr.mxu0 0.0
    %459 = vmatpush1.xpose.msra.mxu0 %v424
    %460 = vmatprep.subr.mxu0 0.0
    %461 = vmatpush1.xpose.msra.mxu0 %v427
    %462 = vmatprep.subr.mxu0 0.0
    %463 = vmatpush1.xpose.msra.mxu0 %v430
    %464 = vmatprep.subr.mxu0 0.0
    %465 = vmatpush1.xpose.msra.mxu0 0.0
    %466 = vmatprep.subr.mxu0 0.0
    %467 = vmatpush1.xpose.msra.mxu0 0.0
    %468 = vmatprep.subr.mxu0 0.0
    %469 = vmatpush1.xpose.msra.mxu0 0.0
    %470 = vmatprep.subr.mxu0 0.0
    %471 = vmatpush1.xpose.msra.mxu0 0.0
    %472 = vmatprep.subr.mxu0 0.0
    %473 = vmatpush1.xpose.msra.mxu0 0.0
    %474 = vmatprep.subr.mxu0 0.0
    %475 = vmatpush1.xpose.msra.mxu0 0.0
    %476 = vmatprep.subr.mxu0 0.0
    %477 = vmatpush1.xpose.msra.mxu0 0.0
    %478 = vmatprep.subr.mxu0 0.0
    %479 = vmatpush1.xpose.msra.mxu0 0.0
    %480 = vmatprep.subr.mxu0 0.0
    %481 = vmatpush1.xpose.msra.mxu0 0.0
    %482 = vmatprep.subr.mxu0 0.0
    %483 = vmatpush1.xpose.msra.mxu0 0.0
    %484 = vmatprep.subr.mxu0 0.0
    %485 = vmatpush1.xpose.msra.mxu0 0.0
    %486 = vmatprep.subr.mxu0 0.0
    %487 = vmatpush1.xpose.msra.mxu0 0.0
    %488 = vmatprep.subr.mxu0 0.0
    %489 = vmatpush1.xpose.msra.mxu0 0.0
    %490 = vmatprep.subr.mxu0 0.0
    %491 = vmatpush1.xpose.msra.mxu0 0.0
    %492 = vmatprep.subr.mxu0 0.0
    %493 = vmatpush1.xpose.msra.mxu0 0.0
    %494 = vmatprep.subr.mxu0 0.0
    %495 = vmatpush1.xpose.msra.mxu0 0.0
    %496 = vmatprep.mubr.f32.mxu0 0.0
    %497 = vmatmul.mubr.f32.gmra.mrb[0].mxu0 %v337
    %v498 = vpop.f32.mrb[0].mxu0
    %v499 = vadd.f32 %v258, %v498
    %v500 = vpop.f32.mrb[0].mxu0
    %501 = vmatprep.mubr.f32.mxu0 0.0
    %502 = vmatmul.mubr.f32.gmra.mrb[0].mxu0 %v340
    %v503 = vpop.f32.mrb[0].mxu0
    %v504 = vadd.f32 %v263, %v503
    %v505 = vpop.f32.mrb[0].mxu0
    %506 = vmatprep.mubr.f32.mxu0 0.0
    %507 = vmatmul.mubr.f32.gmra.mrb[0].mxu0 %v343
    %v508 = vpop.f32.mrb[0].mxu0
    %v509 = vadd.f32 %v268, %v508
    %v510 = vpop.f32.mrb[0].mxu0
    %511 = vmatprep.mubr.f32.mxu0 0.0
    %512 = vmatmul.mubr.f32.gmra.mrb[0].mxu0 %v346
    %v513 = vpop.f32.mrb[0].mxu0
    %v514 = vadd.f32 %v273, %v513
    %v515 = vpop.f32.mrb[0].mxu0
    %516 = vmatprep.mubr.f32.mxu0 0.0
    %517 = vmatmul.mubr.f32.gmra.mrb[0].mxu0 %v349
    %v518 = vpop.f32.mrb[0].mxu0
    %v519 = vadd.f32 %v278, %v518
    %v520 = vpop.f32.mrb[0].mxu0
    %521 = vmatprep.mubr.f32.mxu0 0.0
    %522 = vmatmul.mubr.f32.gmra.mrb[0].mxu0 %v352
    %v523 = vpop.f32.mrb[0].mxu0
    %v524 = vadd.f32 %v283, %v523
    %v525 = vpop.f32.mrb[0].mxu0
    %526 = vmatprep.mubr.f32.mxu0 0.0
    %527 = vmatmul.mubr.f32.gmra.mrb[0].mxu0 %v355
    %v528 = vpop.f32.mrb[0].mxu0
    %v529 = vadd.f32 %v288, %v528
    %v530 = vpop.f32.mrb[0].mxu0
    %531 = vmatprep.mubr.f32.mxu0 0.0
    %532 = vmatmul.mubr.f32.gmra.mrb[0].mxu0 %v358
    %v533 = vpop.f32.mrb[0].mxu0
    %v534 = vadd.f32 %v293, %v533
    %v535 = vpop.f32.mrb[0].mxu0
    %536 = vmatprep.mubr.f32.mxu0 0.0
    %537 = vmatmul.mubr.f32.gmra.mrb[0].mxu0 %v361
    %v538 = vpop.f32.mrb[0].mxu0
    %v539 = vadd.f32 %v298, %v538
    %v540 = vpop.f32.mrb[0].mxu0
    %541 = vmatprep.mubr.f32.mxu0 0.0
    %542 = vmatmul.mubr.f32.gmra.mrb[0].mxu0 %v364
    %v543 = vpop.f32.mrb[0].mxu0
    %v544 = vadd.f32 %v303, %v543
    %v545 = vpop.f32.mrb[0].mxu0
    %546 = vmatprep.mubr.f32.mxu0 0.0
    %547 = vmatmul.mubr.f32.gmra.mrb[0].mxu0 %v367
    %v548 = vpop.f32.mrb[0].mxu0
    %v549 = vadd.f32 %v308, %v548
    %v550 = vpop.f32.mrb[0].mxu0
    %551 = vmatprep.mubr.f32.mxu0 0.0
    %552 = vmatmul.mubr.f32.gmra.mrb[0].mxu0 %v370
    %v553 = vpop.f32.mrb[0].mxu0
    %v554 = vadd.f32 %v313, %v553
    %v555 = vpop.f32.mrb[0].mxu0
    %556 = vmatprep.mubr.f32.mxu0 0.0
    %557 = vmatmul.mubr.f32.gmra.mrb[0].mxu0 %v373
    %v558 = vpop.f32.mrb[0].mxu0
    %v559 = vadd.f32 %v318, %v558
    %v560 = vpop.f32.mrb[0].mxu0
    %561 = vmatprep.mubr.f32.mxu0 0.0
    %562 = vmatmul.mubr.f32.gmra.mrb[0].mxu0 %v376
    %v563 = vpop.f32.mrb[0].mxu0
    %v564 = vadd.f32 %v323, %v563
    %v565 = vpop.f32.mrb[0].mxu0
    %566 = vmatprep.mubr.f32.mxu0 0.0
    %567 = vmatmul.mubr.f32.gmra.mrb[0].mxu0 %v379
    %v568 = vpop.f32.mrb[0].mxu0
    %v569 = vadd.f32 %v328, %v568
    %v570 = vpop.f32.mrb[0].mxu0
    %571 = vmatprep.mubr.f32.mxu0 0.0
    %572 = vmatmul.mubr.f32.gmra.mrb[0].mxu0 %v382
    %v573 = vpop.f32.mrb[0].mxu0
    %v574 = vadd.f32 %v333, %v573
    %v575 = vpop.f32.mrb[0].mxu0
    %576 = vdwg.mxu0
    %v577 = vmax.f32 %v499, 0.0
    %v578 = vmax.f32 %v504, 0.0
    %v579 = vmax.f32 %v509, 0.0
    %v580 = vmax.f32 %v514, 0.0
    %v581 = vmax.f32 %v519, 0.0
    %v582 = vmax.f32 %v524, 0.0
    %v583 = vmax.f32 %v529, 0.0
    %v584 = vmax.f32 %v534, 0.0
    %v585 = vmax.f32 %v539, 0.0
    %v586 = vmax.f32 %v544, 0.0
    %v587 = vmax.f32 %v549, 0.0
    %v588 = vmax.f32 %v554, 0.0
    %v589 = vmax.f32 %v559, 0.0
    %v590 = vmax.f32 %v564, 0.0
    %v591 = vmax.f32 %v569, 0.0
    %v592 = vmax.f32 %v574, 0.0
    %v593 = vld [vmem:[#allocation9] sm:$0xff]
    %v594 = vld [vmem:[#allocation9 + $0x8] sm:$0xff]
    %v595 = vld [vmem:[#allocation9 + $0x10] sm:$0xff]
    %v596 = vld [vmem:[#allocation9 + $0x18] sm:$0xff]
    %v597 = vld [vmem:[#allocation9 + $0x20] sm:$0xff]
    %v598 = vld [vmem:[#allocation9 + $0x28] sm:$0xff]
    %v599 = vld [vmem:[#allocation9 + $0x30] sm:$0xff]
    %v600 = vld [vmem:[#allocation9 + $0x38] sm:$0xff]
    %v601 = vld [vmem:[#allocation9 + $0x40] sm:$0xff]
    %v602 = vld [vmem:[#allocation9 + $0x48] sm:$0xff]
    %v603 = vld [vmem:[#allocation9 + $0x50] sm:$0xff]
    %v604 = vld [vmem:[#allocation9 + $0x58] sm:$0xff]
    %v605 = vld [vmem:[#allocation9 + $0x60] sm:$0xff]
    %v606 = vld [vmem:[#allocation9 + $0x68] sm:$0xff]
    %v607 = vld [vmem:[#allocation9 + $0x70] sm:$0xff]
    %v608 = vld [vmem:[#allocation9 + $0x78] sm:$0xff]
    %v609 = vld [vmem:[#allocation11] sm:$0xff]
    %v610 = vld [vmem:[#allocation11 + $0x8] sm:$0xff]
    %v611 = vld [vmem:[#allocation11 + $0x10] sm:$0xff]
    %v612 = vld [vmem:[#allocation11 + $0x18] sm:$0xff]
    %v613 = vld [vmem:[#allocation11 + $0x20] sm:$0xff]
    %v614 = vld [vmem:[#allocation11 + $0x28] sm:$0xff]
    %v615 = vld [vmem:[#allocation11 + $0x30] sm:$0xff]
    %v616 = vld [vmem:[#allocation11 + $0x38] sm:$0xff]
    %v617 = vld [vmem:[#allocation11 + $0x40] sm:$0xff]
    %v618 = vld [vmem:[#allocation11 + $0x48] sm:$0xff]
    %v619 = vld [vmem:[#allocation11 + $0x50] sm:$0xff]
    %v620 = vld [vmem:[#allocation11 + $0x58] sm:$0xff]
    %v621 = vld [vmem:[#allocation11 + $0x60] sm:$0xff]
    %v622 = vld [vmem:[#allocation11 + $0x68] sm:$0xff]
    %v623 = vld [vmem:[#allocation11 + $0x70] sm:$0xff]
    %v624 = vld [vmem:[#allocation11 + $0x78] sm:$0xff]
    %626 = vset.pattern.permute.xlu0 0
    %627 = vperm.xlu0 %626, %v609
    %v628 = vpop.permute.xlu0 %627
    %631 = vset.pattern.permute.xlu0 0
    %632 = vperm.xlu0 %631, %v610
    %v633 = vpop.permute.xlu0 %632
    %636 = vset.pattern.permute.xlu0 0
    %637 = vperm.xlu0 %636, %v611
    %v638 = vpop.permute.xlu0 %637
    %641 = vset.pattern.permute.xlu0 0
    %642 = vperm.xlu0 %641, %v612
    %v643 = vpop.permute.xlu0 %642
    %646 = vset.pattern.permute.xlu0 0
    %647 = vperm.xlu0 %646, %v613
    %v648 = vpop.permute.xlu0 %647
    %651 = vset.pattern.permute.xlu0 0
    %652 = vperm.xlu0 %651, %v614
    %v653 = vpop.permute.xlu0 %652
    %656 = vset.pattern.permute.xlu0 0
    %657 = vperm.xlu0 %656, %v615
    %v658 = vpop.permute.xlu0 %657
    %661 = vset.pattern.permute.xlu0 0
    %662 = vperm.xlu0 %661, %v616
    %v663 = vpop.permute.xlu0 %662
    %666 = vset.pattern.permute.xlu0 0
    %667 = vperm.xlu0 %666, %v617
    %v668 = vpop.permute.xlu0 %667
    %671 = vset.pattern.permute.xlu0 0
    %672 = vperm.xlu0 %671, %v618
    %v673 = vpop.permute.xlu0 %672
    %676 = vset.pattern.permute.xlu0 0
    %677 = vperm.xlu0 %676, %v619
    %v678 = vpop.permute.xlu0 %677
    %681 = vset.pattern.permute.xlu0 0
    %682 = vperm.xlu0 %681, %v620
    %v683 = vpop.permute.xlu0 %682
    %686 = vset.pattern.permute.xlu0 0
    %687 = vperm.xlu0 %686, %v621
    %v688 = vpop.permute.xlu0 %687
    %691 = vset.pattern.permute.xlu0 0
    %692 = vperm.xlu0 %691, %v622
    %v693 = vpop.permute.xlu0 %692
    %696 = vset.pattern.permute.xlu0 0
    %697 = vperm.xlu0 %696, %v623
    %v698 = vpop.permute.xlu0 %697
    %701 = vset.pattern.permute.xlu0 0
    %702 = vperm.xlu0 %701, %v624
    %v703 = vpop.permute.xlu0 %702
    %705 = vmatprep.subr.mxu0 0.0
    %706 = vmatpush1.msra.mxu0 %v577
    %707 = vmatprep.subr.mxu0 0.0
    %708 = vmatpush1.msra.mxu0 %v578
    %709 = vmatprep.subr.mxu0 0.0
    %710 = vmatpush1.msra.mxu0 %v579
    %711 = vmatprep.subr.mxu0 0.0
    %712 = vmatpush1.msra.mxu0 %v580
    %713 = vmatprep.subr.mxu0 0.0
    %714 = vmatpush1.msra.mxu0 %v581
    %715 = vmatprep.subr.mxu0 0.0
    %716 = vmatpush1.msra.mxu0 %v582
    %717 = vmatprep.subr.mxu0 0.0
    %718 = vmatpush1.msra.mxu0 %v583
    %719 = vmatprep.subr.mxu0 0.0
    %720 = vmatpush1.msra.mxu0 %v584
    %721 = vmatprep.subr.mxu0 0.0
    %722 = vmatpush1.msra.mxu0 %v585
    %723 = vmatprep.subr.mxu0 0.0
    %724 = vmatpush1.msra.mxu0 %v586
    %725 = vmatprep.subr.mxu0 0.0
    %726 = vmatpush1.msra.mxu0 %v587
    %727 = vmatprep.subr.mxu0 0.0
    %728 = vmatpush1.msra.mxu0 %v588
    %729 = vmatprep.subr.mxu0 0.0
    %730 = vmatpush1.msra.mxu0 %v589
    %731 = vmatprep.subr.mxu0 0.0
    %732 = vmatpush1.msra.mxu0 %v590
    %733 = vmatprep.subr.mxu0 0.0
    %734 = vmatpush1.msra.mxu0 %v591
    %735 = vmatprep.subr.mxu0 0.0
    %736 = vmatpush1.msra.mxu0 %v592
    %737 = vmatprep.subr.mxu0 0.0
    %738 = vmatpush1.msra.mxu0 0.0
    %739 = vmatprep.subr.mxu0 0.0
    %740 = vmatpush1.msra.mxu0 0.0
    %741 = vmatprep.subr.mxu0 0.0
    %742 = vmatpush1.msra.mxu0 0.0
    %743 = vmatprep.subr.mxu0 0.0
    %744 = vmatpush1.msra.mxu0 0.0
    %745 = vmatprep.subr.mxu0 0.0
    %746 = vmatpush1.msra.mxu0 0.0
    %747 = vmatprep.subr.mxu0 0.0
    %748 = vmatpush1.msra.mxu0 0.0
    %749 = vmatprep.subr.mxu0 0.0
    %750 = vmatpush1.msra.mxu0 0.0
    %751 = vmatprep.subr.mxu0 0.0
    %752 = vmatpush1.msra.mxu0 0.0
    %753 = vmatprep.subr.mxu0 0.0
    %754 = vmatpush1.msra.mxu0 0.0
    %755 = vmatprep.subr.mxu0 0.0
    %756 = vmatpush1.msra.mxu0 0.0
    %757 = vmatprep.subr.mxu0 0.0
    %758 = vmatpush1.msra.mxu0 0.0
    %759 = vmatprep.subr.mxu0 0.0
    %760 = vmatpush1.msra.mxu0 0.0
    %761 = vmatprep.subr.mxu0 0.0
    %762 = vmatpush1.msra.mxu0 0.0
    %763 = vmatprep.subr.mxu0 0.0
    %764 = vmatpush1.msra.mxu0 0.0
    %765 = vmatprep.subr.mxu0 0.0
    %766 = vmatpush1.msra.mxu0 0.0
    %767 = vmatprep.subr.mxu0 0.0
    %768 = vmatpush1.msra.mxu0 0.0
    %769 = vmatprep.mubr.f32.mxu0 0.0
    %770 = vmatmul.mubr.f32.gmra.mrb[0].mxu0 %v593
    %v771 = vpop.f32.mrb[0].mxu0
    %v772 = vadd.f32 %v628, %v771
    %v773 = vpop.f32.mrb[0].mxu0
    %774 = vmatprep.mubr.f32.mxu0 0.0
    %775 = vmatmul.mubr.f32.gmra.mrb[0].mxu0 %v594
    %v776 = vpop.f32.mrb[0].mxu0
    %v777 = vadd.f32 %v633, %v776
    %v778 = vpop.f32.mrb[0].mxu0
    %779 = vmatprep.mubr.f32.mxu0 0.0
    %780 = vmatmul.mubr.f32.gmra.mrb[0].mxu0 %v595
    %v781 = vpop.f32.mrb[0].mxu0
    %v782 = vadd.f32 %v638, %v781
    %v783 = vpop.f32.mrb[0].mxu0
    %784 = vmatprep.mubr.f32.mxu0 0.0
    %785 = vmatmul.mubr.f32.gmra.mrb[0].mxu0 %v596
    %v786 = vpop.f32.mrb[0].mxu0
    %v787 = vadd.f32 %v643, %v786
    %v788 = vpop.f32.mrb[0].mxu0
    %789 = vmatprep.mubr.f32.mxu0 0.0
    %790 = vmatmul.mubr.f32.gmra.mrb[0].mxu0 %v597
    %v791 = vpop.f32.mrb[0].mxu0
    %v792 = vadd.f32 %v648, %v791
    %v793 = vpop.f32.mrb[0].mxu0
    %794 = vmatprep.mubr.f32.mxu0 0.0
    %795 = vmatmul.mubr.f32.gmra.mrb[0].mxu0 %v598
    %v796 = vpop.f32.mrb[0].mxu0
    %v797 = vadd.f32 %v653, %v796
    %v798 = vpop.f32.mrb[0].mxu0
    %799 = vmatprep.mubr.f32.mxu0 0.0
    %800 = vmatmul.mubr.f32.gmra.mrb[0].mxu0 %v599
    %v801 = vpop.f32.mrb[0].mxu0
    %v802 = vadd.f32 %v658, %v801
    %v803 = vpop.f32.mrb[0].mxu0
    %804 = vmatprep.mubr.f32.mxu0 0.0
    %805 = vmatmul.mubr.f32.gmra.mrb[0].mxu0 %v600
    %v806 = vpop.f32.mrb[0].mxu0
    %v807 = vadd.f32 %v663, %v806
    %v808 = vpop.f32.mrb[0].mxu0
    %809 = vmatprep.mubr.f32.mxu0 0.0
    %810 = vmatmul.mubr.f32.gmra.mrb[0].mxu0 %v601
    %v811 = vpop.f32.mrb[0].mxu0
    %v812 = vadd.f32 %v668, %v811
    %v813 = vpop.f32.mrb[0].mxu0
    %814 = vmatprep.mubr.f32.mxu0 0.0
    %815 = vmatmul.mubr.f32.gmra.mrb[0].mxu0 %v602
    %v816 = vpop.f32.mrb[0].mxu0
    %v817 = vadd.f32 %v673, %v816
    %v818 = vpop.f32.mrb[0].mxu0
    %819 = vmatprep.mubr.f32.mxu0 0.0
    %820 = vmatmul.mubr.f32.gmra.mrb[0].mxu0 %v603
    %v821 = vpop.f32.mrb[0].mxu0
    %v822 = vadd.f32 %v678, %v821
    %v823 = vpop.f32.mrb[0].mxu0
    %824 = vmatprep.mubr.f32.mxu0 0.0
    %825 = vmatmul.mubr.f32.gmra.mrb[0].mxu0 %v604
    %v826 = vpop.f32.mrb[0].mxu0
    %v827 = vadd.f32 %v683, %v826
    %v828 = vpop.f32.mrb[0].mxu0
    %829 = vmatprep.mubr.f32.mxu0 0.0
    %830 = vmatmul.mubr.f32.gmra.mrb[0].mxu0 %v605
    %v831 = vpop.f32.mrb[0].mxu0
    %v832 = vadd.f32 %v688, %v831
    %v833 = vpop.f32.mrb[0].mxu0
    %834 = vmatprep.mubr.f32.mxu0 0.0
    %835 = vmatmul.mubr.f32.gmra.mrb[0].mxu0 %v606
    %v836 = vpop.f32.mrb[0].mxu0
    %v837 = vadd.f32 %v693, %v836
    %v838 = vpop.f32.mrb[0].mxu0
    %839 = vmatprep.mubr.f32.mxu0 0.0
    %840 = vmatmul.mubr.f32.gmra.mrb[0].mxu0 %v607
    %v841 = vpop.f32.mrb[0].mxu0
    %v842 = vadd.f32 %v698, %v841
    %v843 = vpop.f32.mrb[0].mxu0
    %844 = vmatprep.mubr.f32.mxu0 0.0
    %845 = vmatmul.mubr.f32.gmra.mrb[0].mxu0 %v608
    %v846 = vpop.f32.mrb[0].mxu0
    %v847 = vadd.f32 %v703, %v846
    %v848 = vpop.f32.mrb[0].mxu0
    %849 = vdwg.mxu0
    %v850 = vmax.f32 %v772, 0.0
    %v851 = vmax.f32 %v777, 0.0
    %v852 = vmax.f32 %v782, 0.0
    %v853 = vmax.f32 %v787, 0.0
    %v854 = vmax.f32 %v792, 0.0
    %v855 = vmax.f32 %v797, 0.0
    %v856 = vmax.f32 %v802, 0.0
    %v857 = vmax.f32 %v807, 0.0
    %v858 = vmax.f32 %v812, 0.0
    %v859 = vmax.f32 %v817, 0.0
    %v860 = vmax.f32 %v822, 0.0
    %v861 = vmax.f32 %v827, 0.0
    %v862 = vmax.f32 %v832, 0.0
    %v863 = vmax.f32 %v837, 0.0
    %v864 = vmax.f32 %v842, 0.0
    %v865 = vmax.f32 %v847, 0.0
    %v866 = vld [vmem:[#allocation12] sm:$0xff]
    %v867 = vld [vmem:[#allocation12 + $0x8] sm:$0xff]
    %v868 = vld [vmem:[#allocation12 + $0x10] sm:$0xff]
    %v869 = vld [vmem:[#allocation12 + $0x18] sm:$0xff]
    %v870 = vld [vmem:[#allocation12 + $0x20] sm:$0xff]
    %v871 = vld [vmem:[#allocation12 + $0x28] sm:$0xff]
    %v872 = vld [vmem:[#allocation12 + $0x30] sm:$0xff]
    %v873 = vld [vmem:[#allocation12 + $0x38] sm:$0xff]
    %v874 = vld [vmem:[#allocation12 + $0x40] sm:$0xff]
    %v875 = vld [vmem:[#allocation12 + $0x48] sm:$0xff]
    %v876 = vld [vmem:[#allocation12 + $0x50] sm:$0xff]
    %v877 = vld [vmem:[#allocation12 + $0x58] sm:$0xff]
    %v878 = vld [vmem:[#allocation12 + $0x60] sm:$0xff]
    %v879 = vld [vmem:[#allocation12 + $0x68] sm:$0xff]
    %v880 = vld [vmem:[#allocation12 + $0x70] sm:$0xff]
    %v881 = vld [vmem:[#allocation12 + $0x78] sm:$0xff]
    %v882 = vld [vmem:[#allocation14] sm:$0xff]
    %v883 = vld [vmem:[#allocation14 + $0x8] sm:$0xff]
    %v884 = vld [vmem:[#allocation14 + $0x10] sm:$0xff]
    %v885 = vld [vmem:[#allocation14 + $0x18] sm:$0xff]
    %v886 = vld [vmem:[#allocation14 + $0x20] sm:$0xff]
    %v887 = vld [vmem:[#allocation14 + $0x28] sm:$0xff]
    %v888 = vld [vmem:[#allocation14 + $0x30] sm:$0xff]
    %v889 = vld [vmem:[#allocation14 + $0x38] sm:$0xff]
    %v890 = vld [vmem:[#allocation14 + $0x40] sm:$0xff]
    %v891 = vld [vmem:[#allocation14 + $0x48] sm:$0xff]
    %v892 = vld [vmem:[#allocation14 + $0x50] sm:$0xff]
    %v893 = vld [vmem:[#allocation14 + $0x58] sm:$0xff]
    %v894 = vld [vmem:[#allocation14 + $0x60] sm:$0xff]
    %v895 = vld [vmem:[#allocation14 + $0x68] sm:$0xff]
    %v896 = vld [vmem:[#allocation14 + $0x70] sm:$0xff]
    %v897 = vld [vmem:[#allocation14 + $0x78] sm:$0xff]
    %899 = vset.pattern.permute.xlu0 0
    %900 = vperm.xlu0 %899, %v882
    %v901 = vpop.permute.xlu0 %900
    %904 = vset.pattern.permute.xlu0 0
    %905 = vperm.xlu0 %904, %v883
    %v906 = vpop.permute.xlu0 %905
    %909 = vset.pattern.permute.xlu0 0
    %910 = vperm.xlu0 %909, %v884
    %v911 = vpop.permute.xlu0 %910
    %914 = vset.pattern.permute.xlu0 0
    %915 = vperm.xlu0 %914, %v885
    %v916 = vpop.permute.xlu0 %915
    %919 = vset.pattern.permute.xlu0 0
    %920 = vperm.xlu0 %919, %v886
    %v921 = vpop.permute.xlu0 %920
    %924 = vset.pattern.permute.xlu0 0
    %925 = vperm.xlu0 %924, %v887
    %v926 = vpop.permute.xlu0 %925
    %929 = vset.pattern.permute.xlu0 0
    %930 = vperm.xlu0 %929, %v888
    %v931 = vpop.permute.xlu0 %930
    %934 = vset.pattern.permute.xlu0 0
    %935 = vperm.xlu0 %934, %v889
    %v936 = vpop.permute.xlu0 %935
    %939 = vset.pattern.permute.xlu0 0
    %940 = vperm.xlu0 %939, %v890
    %v941 = vpop.permute.xlu0 %940
    %944 = vset.pattern.permute.xlu0 0
    %945 = vperm.xlu0 %944, %v891
    %v946 = vpop.permute.xlu0 %945
    %949 = vset.pattern.permute.xlu0 0
    %950 = vperm.xlu0 %949, %v892
    %v951 = vpop.permute.xlu0 %950
    %954 = vset.pattern.permute.xlu0 0
    %955 = vperm.xlu0 %954, %v893
    %v956 = vpop.permute.xlu0 %955
    %959 = vset.pattern.permute.xlu0 0
    %960 = vperm.xlu0 %959, %v894
    %v961 = vpop.permute.xlu0 %960
    %964 = vset.pattern.permute.xlu0 0
    %965 = vperm.xlu0 %964, %v895
    %v966 = vpop.permute.xlu0 %965
    %969 = vset.pattern.permute.xlu0 0
    %970 = vperm.xlu0 %969, %v896
    %v971 = vpop.permute.xlu0 %970
    %974 = vset.pattern.permute.xlu0 0
    %975 = vperm.xlu0 %974, %v897
    %v976 = vpop.permute.xlu0 %975
    %978 = vmatprep.subr.mxu0 0.0
    %979 = vmatpush1.msra.mxu0 %v850
    %980 = vmatprep.subr.mxu0 0.0
    %981 = vmatpush1.msra.mxu0 %v851
    %982 = vmatprep.subr.mxu0 0.0
    %983 = vmatpush1.msra.mxu0 %v852
    %984 = vmatprep.subr.mxu0 0.0
    %985 = vmatpush1.msra.mxu0 %v853
    %986 = vmatprep.subr.mxu0 0.0
    %987 = vmatpush1.msra.mxu0 %v854
    %988 = vmatprep.subr.mxu0 0.0
    %989 = vmatpush1.msra.mxu0 %v855
    %990 = vmatprep.subr.mxu0 0.0
    %991 = vmatpush1.msra.mxu0 %v856
    %992 = vmatprep.subr.mxu0 0.0
    %993 = vmatpush1.msra.mxu0 %v857
    %994 = vmatprep.subr.mxu0 0.0
    %995 = vmatpush1.msra.mxu0 %v858
    %996 = vmatprep.subr.mxu0 0.0
    %997 = vmatpush1.msra.mxu0 %v859
    %998 = vmatprep.subr.mxu0 0.0
    %999 = vmatpush1.msra.mxu0 %v860
    %1000 = vmatprep.subr.mxu0 0.0
    %1001 = vmatpush1.msra.mxu0 %v861
    %1002 = vmatprep.subr.mxu0 0.0
    %1003 = vmatpush1.msra.mxu0 %v862
    %1004 = vmatprep.subr.mxu0 0.0
    %1005 = vmatpush1.msra.mxu0 %v863
    %1006 = vmatprep.subr.mxu0 0.0
    %1007 = vmatpush1.msra.mxu0 %v864
    %1008 = vmatprep.subr.mxu0 0.0
    %1009 = vmatpush1.msra.mxu0 %v865
    %1010 = vmatprep.subr.mxu0 0.0
    %1011 = vmatpush1.msra.mxu0 0.0
    %1012 = vmatprep.subr.mxu0 0.0
    %1013 = vmatpush1.msra.mxu0 0.0
    %1014 = vmatprep.subr.mxu0 0.0
    %1015 = vmatpush1.msra.mxu0 0.0
    %1016 = vmatprep.subr.mxu0 0.0
    %1017 = vmatpush1.msra.mxu0 0.0
    %1018 = vmatprep.subr.mxu0 0.0
    %1019 = vmatpush1.msra.mxu0 0.0
    %1020 = vmatprep.subr.mxu0 0.0
    %1021 = vmatpush1.msra.mxu0 0.0
    %1022 = vmatprep.subr.mxu0 0.0
    %1023 = vmatpush1.msra.mxu0 0.0
    %1024 = vmatprep.subr.mxu0 0.0
    %1025 = vmatpush1.msra.mxu0 0.0
    %1026 = vmatprep.subr.mxu0 0.0
    %1027 = vmatpush1.msra.mxu0 0.0
    %1028 = vmatprep.subr.mxu0 0.0
    %1029 = vmatpush1.msra.mxu0 0.0
    %1030 = vmatprep.subr.mxu0 0.0
    %1031 = vmatpush1.msra.mxu0 0.0
    %1032 = vmatprep.subr.mxu0 0.0
    %1033 = vmatpush1.msra.mxu0 0.0
    %1034 = vmatprep.subr.mxu0 0.0
    %1035 = vmatpush1.msra.mxu0 0.0
    %1036 = vmatprep.subr.mxu0 0.0
    %1037 = vmatpush1.msra.mxu0 0.0
    %1038 = vmatprep.subr.mxu0 0.0
    %1039 = vmatpush1.msra.mxu0 0.0
    %1040 = vmatprep.subr.mxu0 0.0
    %1041 = vmatpush1.msra.mxu0 0.0
    %1042 = vmatprep.mubr.f32.mxu0 0.0
    %1043 = vmatmul.mubr.f32.gmra.mrb[0].mxu0 %v866
    %v1044 = vpop.f32.mrb[0].mxu0
    %v1045 = vadd.f32 %v901, %v1044
    %v1046 = vpop.f32.mrb[0].mxu0
    %1047 = vmatprep.mubr.f32.mxu0 0.0
    %1048 = vmatmul.mubr.f32.gmra.mrb[0].mxu0 %v867
    %v1049 = vpop.f32.mrb[0].mxu0
    %v1050 = vadd.f32 %v906, %v1049
    %v1051 = vpop.f32.mrb[0].mxu0
    %1052 = vmatprep.mubr.f32.mxu0 0.0
    %1053 = vmatmul.mubr.f32.gmra.mrb[0].mxu0 %v868
    %v1054 = vpop.f32.mrb[0].mxu0
    %v1055 = vadd.f32 %v911, %v1054
    %v1056 = vpop.f32.mrb[0].mxu0
    %1057 = vmatprep.mubr.f32.mxu0 0.0
    %1058 = vmatmul.mubr.f32.gmra.mrb[0].mxu0 %v869
    %v1059 = vpop.f32.mrb[0].mxu0
    %v1060 = vadd.f32 %v916, %v1059
    %v1061 = vpop.f32.mrb[0].mxu0
    %1062 = vmatprep.mubr.f32.mxu0 0.0
    %1063 = vmatmul.mubr.f32.gmra.mrb[0].mxu0 %v870
    %v1064 = vpop.f32.mrb[0].mxu0
    %v1065 = vadd.f32 %v921, %v1064
    %v1066 = vpop.f32.mrb[0].mxu0
    %1067 = vmatprep.mubr.f32.mxu0 0.0
    %1068 = vmatmul.mubr.f32.gmra.mrb[0].mxu0 %v871
    %v1069 = vpop.f32.mrb[0].mxu0
    %v1070 = vadd.f32 %v926, %v1069
    %v1071 = vpop.f32.mrb[0].mxu0
    %1072 = vmatprep.mubr.f32.mxu0 0.0
    %1073 = vmatmul.mubr.f32.gmra.mrb[0].mxu0 %v872
    %v1074 = vpop.f32.mrb[0].mxu0
    %v1075 = vadd.f32 %v931, %v1074
    %v1076 = vpop.f32.mrb[0].mxu0
    %1077 = vmatprep.mubr.f32.mxu0 0.0
    %1078 = vmatmul.mubr.f32.gmra.mrb[0].mxu0 %v873
    %v1079 = vpop.f32.mrb[0].mxu0
    %v1080 = vadd.f32 %v936, %v1079
    %v1081 = vpop.f32.mrb[0].mxu0
    %1082 = vmatprep.mubr.f32.mxu0 0.0
    %1083 = vmatmul.mubr.f32.gmra.mrb[0].mxu0 %v874
    %v1084 = vpop.f32.mrb[0].mxu0
    %v1085 = vadd.f32 %v941, %v1084
    %v1086 = vpop.f32.mrb[0].mxu0
    %1087 = vmatprep.mubr.f32.mxu0 0.0
    %1088 = vmatmul.mubr.f32.gmra.mrb[0].mxu0 %v875
    %v1089 = vpop.f32.mrb[0].mxu0
    %v1090 = vadd.f32 %v946, %v1089
    %v1091 = vpop.f32.mrb[0].mxu0
    %1092 = vmatprep.mubr.f32.mxu0 0.0
    %1093 = vmatmul.mubr.f32.gmra.mrb[0].mxu0 %v876
    %v1094 = vpop.f32.mrb[0].mxu0
    %v1095 = vadd.f32 %v951, %v1094
    %v1096 = vpop.f32.mrb[0].mxu0
    %1097 = vmatprep.mubr.f32.mxu0 0.0
    %1098 = vmatmul.mubr.f32.gmra.mrb[0].mxu0 %v877
    %v1099 = vpop.f32.mrb[0].mxu0
    %v1100 = vadd.f32 %v956, %v1099
    %v1101 = vpop.f32.mrb[0].mxu0
    %1102 = vmatprep.mubr.f32.mxu0 0.0
    %1103 = vmatmul.mubr.f32.gmra.mrb[0].mxu0 %v878
    %v1104 = vpop.f32.mrb[0].mxu0
    %v1105 = vadd.f32 %v961, %v1104
    %v1106 = vpop.f32.mrb[0].mxu0
    %1107 = vmatprep.mubr.f32.mxu0 0.0
    %1108 = vmatmul.mubr.f32.gmra.mrb[0].mxu0 %v879
    %v1109 = vpop.f32.mrb[0].mxu0
    %v1110 = vadd.f32 %v966, %v1109
    %v1111 = vpop.f32.mrb[0].mxu0
    %1112 = vmatprep.mubr.f32.mxu0 0.0
    %1113 = vmatmul.mubr.f32.gmra.mrb[0].mxu0 %v880
    %v1114 = vpop.f32.mrb[0].mxu0
    %v1115 = vadd.f32 %v971, %v1114
    %v1116 = vpop.f32.mrb[0].mxu0
    %1117 = vmatprep.mubr.f32.mxu0 0.0
    %1118 = vmatmul.mubr.f32.gmra.mrb[0].mxu0 %v881
    %v1119 = vpop.f32.mrb[0].mxu0
    %v1120 = vadd.f32 %v976, %v1119
    %v1121 = vpop.f32.mrb[0].mxu0
    %1122 = vdwg.mxu0
    %v1123 = vmax.f32 %v1045, 0.0
    %v1124 = vmax.f32 %v1050, 0.0
    %v1125 = vmax.f32 %v1055, 0.0
    %v1126 = vmax.f32 %v1060, 0.0
    %v1127 = vmax.f32 %v1065, 0.0
    %v1128 = vmax.f32 %v1070, 0.0
    %v1129 = vmax.f32 %v1075, 0.0
    %v1130 = vmax.f32 %v1080, 0.0
    %v1131 = vmax.f32 %v1085, 0.0
    %v1132 = vmax.f32 %v1090, 0.0
    %v1133 = vmax.f32 %v1095, 0.0
    %v1134 = vmax.f32 %v1100, 0.0
    %v1135 = vmax.f32 %v1105, 0.0
    %v1136 = vmax.f32 %v1110, 0.0
    %v1137 = vmax.f32 %v1115, 0.0
    %v1138 = vmax.f32 %v1120, 0.0
    %v1139 = vld [vmem:[#allocation15] sm:$0xff]
    %v1140 = vld [vmem:[#allocation15 + $0x8] sm:$0xff]
    %v1141 = vld [vmem:[#allocation15 + $0x10] sm:$0xff]
    %v1142 = vld [vmem:[#allocation15 + $0x18] sm:$0xff]
    %v1143 = vld [vmem:[#allocation15 + $0x20] sm:$0xff]
    %v1144 = vld [vmem:[#allocation15 + $0x28] sm:$0xff]
    %v1145 = vld [vmem:[#allocation15 + $0x30] sm:$0xff]
    %v1146 = vld [vmem:[#allocation15 + $0x38] sm:$0xff]
    %v1147 = vld [vmem:[#allocation15 + $0x40] sm:$0xff]
    %v1148 = vld [vmem:[#allocation15 + $0x48] sm:$0xff]
    %v1149 = vld [vmem:[#allocation15 + $0x50] sm:$0xff]
    %v1150 = vld [vmem:[#allocation15 + $0x58] sm:$0xff]
    %v1151 = vld [vmem:[#allocation15 + $0x60] sm:$0xff]
    %v1152 = vld [vmem:[#allocation15 + $0x68] sm:$0xff]
    %v1153 = vld [vmem:[#allocation15 + $0x70] sm:$0xff]
    %v1154 = vld [vmem:[#allocation15 + $0x78] sm:$0xff]
    %v1155 = vld [vmem:[#allocation17] sm:$0xff]
    %v1156 = vld [vmem:[#allocation17 + $0x8] sm:$0xff]
    %v1157 = vld [vmem:[#allocation17 + $0x10] sm:$0xff]
    %v1158 = vld [vmem:[#allocation17 + $0x18] sm:$0xff]
    %v1159 = vld [vmem:[#allocation17 + $0x20] sm:$0xff]
    %v1160 = vld [vmem:[#allocation17 + $0x28] sm:$0xff]
    %v1161 = vld [vmem:[#allocation17 + $0x30] sm:$0xff]
    %v1162 = vld [vmem:[#allocation17 + $0x38] sm:$0xff]
    %v1163 = vld [vmem:[#allocation17 + $0x40] sm:$0xff]
    %v1164 = vld [vmem:[#allocation17 + $0x48] sm:$0xff]
    %v1165 = vld [vmem:[#allocation17 + $0x50] sm:$0xff]
    %v1166 = vld [vmem:[#allocation17 + $0x58] sm:$0xff]
    %v1167 = vld [vmem:[#allocation17 + $0x60] sm:$0xff]
    %v1168 = vld [vmem:[#allocation17 + $0x68] sm:$0xff]
    %v1169 = vld [vmem:[#allocation17 + $0x70] sm:$0xff]
    %v1170 = vld [vmem:[#allocation17 + $0x78] sm:$0xff]
    %1172 = vset.pattern.permute.xlu0 0
    %1173 = vperm.xlu0 %1172, %v1155
    %v1174 = vpop.permute.xlu0 %1173
    %1177 = vset.pattern.permute.xlu0 0
    %1178 = vperm.xlu0 %1177, %v1156
    %v1179 = vpop.permute.xlu0 %1178
    %1182 = vset.pattern.permute.xlu0 0
    %1183 = vperm.xlu0 %1182, %v1157
    %v1184 = vpop.permute.xlu0 %1183
    %1187 = vset.pattern.permute.xlu0 0
    %1188 = vperm.xlu0 %1187, %v1158
    %v1189 = vpop.permute.xlu0 %1188
    %1192 = vset.pattern.permute.xlu0 0
    %1193 = vperm.xlu0 %1192, %v1159
    %v1194 = vpop.permute.xlu0 %1193
    %1197 = vset.pattern.permute.xlu0 0
    %1198 = vperm.xlu0 %1197, %v1160
    %v1199 = vpop.permute.xlu0 %1198
    %1202 = vset.pattern.permute.xlu0 0
    %1203 = vperm.xlu0 %1202, %v1161
    %v1204 = vpop.permute.xlu0 %1203
    %1207 = vset.pattern.permute.xlu0 0
    %1208 = vperm.xlu0 %1207, %v1162
    %v1209 = vpop.permute.xlu0 %1208
    %1212 = vset.pattern.permute.xlu0 0
    %1213 = vperm.xlu0 %1212, %v1163
    %v1214 = vpop.permute.xlu0 %1213
    %1217 = vset.pattern.permute.xlu0 0
    %1218 = vperm.xlu0 %1217, %v1164
    %v1219 = vpop.permute.xlu0 %1218
    %1222 = vset.pattern.permute.xlu0 0
    %1223 = vperm.xlu0 %1222, %v1165
    %v1224 = vpop.permute.xlu0 %1223
    %1227 = vset.pattern.permute.xlu0 0
    %1228 = vperm.xlu0 %1227, %v1166
    %v1229 = vpop.permute.xlu0 %1228
    %1232 = vset.pattern.permute.xlu0 0
    %1233 = vperm.xlu0 %1232, %v1167
    %v1234 = vpop.permute.xlu0 %1233
    %1237 = vset.pattern.permute.xlu0 0
    %1238 = vperm.xlu0 %1237, %v1168
    %v1239 = vpop.permute.xlu0 %1238
    %1242 = vset.pattern.permute.xlu0 0
    %1243 = vperm.xlu0 %1242, %v1169
    %v1244 = vpop.permute.xlu0 %1243
    %1247 = vset.pattern.permute.xlu0 0
    %1248 = vperm.xlu0 %1247, %v1170
    %v1249 = vpop.permute.xlu0 %1248
    %1251 = vmatprep.subr.mxu0 0.0
    %1252 = vmatpush1.msra.mxu0 %v1123
    %1253 = vmatprep.subr.mxu0 0.0
    %1254 = vmatpush1.msra.mxu0 %v1124
    %1255 = vmatprep.subr.mxu0 0.0
    %1256 = vmatpush1.msra.mxu0 %v1125
    %1257 = vmatprep.subr.mxu0 0.0
    %1258 = vmatpush1.msra.mxu0 %v1126
    %1259 = vmatprep.subr.mxu0 0.0
    %1260 = vmatpush1.msra.mxu0 %v1127
    %1261 = vmatprep.subr.mxu0 0.0
    %1262 = vmatpush1.msra.mxu0 %v1128
    %1263 = vmatprep.subr.mxu0 0.0
    %1264 = vmatpush1.msra.mxu0 %v1129
    %1265 = vmatprep.subr.mxu0 0.0
    %1266 = vmatpush1.msra.mxu0 %v1130
    %1267 = vmatprep.subr.mxu0 0.0
    %1268 = vmatpush1.msra.mxu0 %v1131
    %1269 = vmatprep.subr.mxu0 0.0
    %1270 = vmatpush1.msra.mxu0 %v1132
    %1271 = vmatprep.subr.mxu0 0.0
    %1272 = vmatpush1.msra.mxu0 %v1133
    %1273 = vmatprep.subr.mxu0 0.0
    %1274 = vmatpush1.msra.mxu0 %v1134
    %1275 = vmatprep.subr.mxu0 0.0
    %1276 = vmatpush1.msra.mxu0 %v1135
    %1277 = vmatprep.subr.mxu0 0.0
    %1278 = vmatpush1.msra.mxu0 %v1136
    %1279 = vmatprep.subr.mxu0 0.0
    %1280 = vmatpush1.msra.mxu0 %v1137
    %1281 = vmatprep.subr.mxu0 0.0
    %1282 = vmatpush1.msra.mxu0 %v1138
    %1283 = vmatprep.subr.mxu0 0.0
    %1284 = vmatpush1.msra.mxu0 0.0
    %1285 = vmatprep.subr.mxu0 0.0
    %1286 = vmatpush1.msra.mxu0 0.0
    %1287 = vmatprep.subr.mxu0 0.0
    %1288 = vmatpush1.msra.mxu0 0.0
    %1289 = vmatprep.subr.mxu0 0.0
    %1290 = vmatpush1.msra.mxu0 0.0
    %1291 = vmatprep.subr.mxu0 0.0
    %1292 = vmatpush1.msra.mxu0 0.0
    %1293 = vmatprep.subr.mxu0 0.0
    %1294 = vmatpush1.msra.mxu0 0.0
    %1295 = vmatprep.subr.mxu0 0.0
    %1296 = vmatpush1.msra.mxu0 0.0
    %1297 = vmatprep.subr.mxu0 0.0
    %1298 = vmatpush1.msra.mxu0 0.0
    %1299 = vmatprep.subr.mxu0 0.0
    %1300 = vmatpush1.msra.mxu0 0.0
    %1301 = vmatprep.subr.mxu0 0.0
    %1302 = vmatpush1.msra.mxu0 0.0
    %1303 = vmatprep.subr.mxu0 0.0
    %1304 = vmatpush1.msra.mxu0 0.0
    %1305 = vmatprep.subr.mxu0 0.0
    %1306 = vmatpush1.msra.mxu0 0.0
    %1307 = vmatprep.subr.mxu0 0.0
    %1308 = vmatpush1.msra.mxu0 0.0
    %1309 = vmatprep.subr.mxu0 0.0
    %1310 = vmatpush1.msra.mxu0 0.0
    %1311 = vmatprep.subr.mxu0 0.0
    %1312 = vmatpush1.msra.mxu0 0.0
    %1313 = vmatprep.subr.mxu0 0.0
    %1314 = vmatpush1.msra.mxu0 0.0
    %1315 = vmatprep.mubr.f32.mxu0 0.0
    %1316 = vmatmul.mubr.f32.gmra.mrb[0].mxu0 %v1139
    %v1317 = vpop.f32.mrb[0].mxu0
    %v1318 = vadd.f32 %v1174, %v1317
    %v1319 = vpop.f32.mrb[0].mxu0
    %1320 = vmatprep.mubr.f32.mxu0 0.0
    %1321 = vmatmul.mubr.f32.gmra.mrb[0].mxu0 %v1140
    %v1322 = vpop.f32.mrb[0].mxu0
    %v1323 = vadd.f32 %v1179, %v1322
    %v1324 = vpop.f32.mrb[0].mxu0
    %1325 = vmatprep.mubr.f32.mxu0 0.0
    %1326 = vmatmul.mubr.f32.gmra.mrb[0].mxu0 %v1141
    %v1327 = vpop.f32.mrb[0].mxu0
    %v1328 = vadd.f32 %v1184, %v1327
    %v1329 = vpop.f32.mrb[0].mxu0
    %1330 = vmatprep.mubr.f32.mxu0 0.0
    %1331 = vmatmul.mubr.f32.gmra.mrb[0].mxu0 %v1142
    %v1332 = vpop.f32.mrb[0].mxu0
    %v1333 = vadd.f32 %v1189, %v1332
    %v1334 = vpop.f32.mrb[0].mxu0
    %1335 = vmatprep.mubr.f32.mxu0 0.0
    %1336 = vmatmul.mubr.f32.gmra.mrb[0].mxu0 %v1143
    %v1337 = vpop.f32.mrb[0].mxu0
    %v1338 = vadd.f32 %v1194, %v1337
    %v1339 = vpop.f32.mrb[0].mxu0
    %1340 = vmatprep.mubr.f32.mxu0 0.0
    %1341 = vmatmul.mubr.f32.gmra.mrb[0].mxu0 %v1144
    %v1342 = vpop.f32.mrb[0].mxu0
    %v1343 = vadd.f32 %v1199, %v1342
    %v1344 = vpop.f32.mrb[0].mxu0
    %1345 = vmatprep.mubr.f32.mxu0 0.0
    %1346 = vmatmul.mubr.f32.gmra.mrb[0].mxu0 %v1145
    %v1347 = vpop.f32.mrb[0].mxu0
    %v1348 = vadd.f32 %v1204, %v1347
    %v1349 = vpop.f32.mrb[0].mxu0
    %1350 = vmatprep.mubr.f32.mxu0 0.0
    %1351 = vmatmul.mubr.f32.gmra.mrb[0].mxu0 %v1146
    %v1352 = vpop.f32.mrb[0].mxu0
    %v1353 = vadd.f32 %v1209, %v1352
    %v1354 = vpop.f32.mrb[0].mxu0
    %1355 = vmatprep.mubr.f32.mxu0 0.0
    %1356 = vmatmul.mubr.f32.gmra.mrb[0].mxu0 %v1147
    %v1357 = vpop.f32.mrb[0].mxu0
    %v1358 = vadd.f32 %v1214, %v1357
    %v1359 = vpop.f32.mrb[0].mxu0
    %1360 = vmatprep.mubr.f32.mxu0 0.0
    %1361 = vmatmul.mubr.f32.gmra.mrb[0].mxu0 %v1148
    %v1362 = vpop.f32.mrb[0].mxu0
    %v1363 = vadd.f32 %v1219, %v1362
    %v1364 = vpop.f32.mrb[0].mxu0
    %1365 = vmatprep.mubr.f32.mxu0 0.0
    %1366 = vmatmul.mubr.f32.gmra.mrb[0].mxu0 %v1149
    %v1367 = vpop.f32.mrb[0].mxu0
    %v1368 = vadd.f32 %v1224, %v1367
    %v1369 = vpop.f32.mrb[0].mxu0
    %1370 = vmatprep.mubr.f32.mxu0 0.0
    %1371 = vmatmul.mubr.f32.gmra.mrb[0].mxu0 %v1150
    %v1372 = vpop.f32.mrb[0].mxu0
    %v1373 = vadd.f32 %v1229, %v1372
    %v1374 = vpop.f32.mrb[0].mxu0
    %1375 = vmatprep.mubr.f32.mxu0 0.0
    %1376 = vmatmul.mubr.f32.gmra.mrb[0].mxu0 %v1151
    %v1377 = vpop.f32.mrb[0].mxu0
    %v1378 = vadd.f32 %v1234, %v1377
    %v1379 = vpop.f32.mrb[0].mxu0
    %1380 = vmatprep.mubr.f32.mxu0 0.0
    %1381 = vmatmul.mubr.f32.gmra.mrb[0].mxu0 %v1152
    %v1382 = vpop.f32.mrb[0].mxu0
    %v1383 = vadd.f32 %v1239, %v1382
    %v1384 = vpop.f32.mrb[0].mxu0
    %1385 = vmatprep.mubr.f32.mxu0 0.0
    %1386 = vmatmul.mubr.f32.gmra.mrb[0].mxu0 %v1153
    %v1387 = vpop.f32.mrb[0].mxu0
    %v1388 = vadd.f32 %v1244, %v1387
    %v1389 = vpop.f32.mrb[0].mxu0
    %1390 = vmatprep.mubr.f32.mxu0 0.0
    %1391 = vmatmul.mubr.f32.gmra.mrb[0].mxu0 %v1154
    %v1392 = vpop.f32.mrb[0].mxu0
    %v1393 = vadd.f32 %v1249, %v1392
    %v1394 = vpop.f32.mrb[0].mxu0
    %1395 = vdwg.mxu0
    %v1396 = vmax.f32 %v1318, 0.0
    %v1397 = vmax.f32 %v1323, 0.0
    %v1398 = vmax.f32 %v1328, 0.0
    %v1399 = vmax.f32 %v1333, 0.0
    %v1400 = vmax.f32 %v1338, 0.0
    %v1401 = vmax.f32 %v1343, 0.0
    %v1402 = vmax.f32 %v1348, 0.0
    %v1403 = vmax.f32 %v1353, 0.0
    %v1404 = vmax.f32 %v1358, 0.0
    %v1405 = vmax.f32 %v1363, 0.0
    %v1406 = vmax.f32 %v1368, 0.0
    %v1407 = vmax.f32 %v1373, 0.0
    %v1408 = vmax.f32 %v1378, 0.0
    %v1409 = vmax.f32 %v1383, 0.0
    %v1410 = vmax.f32 %v1388, 0.0
    %v1411 = vmax.f32 %v1393, 0.0
    %v1412 = vld [vmem:[#allocation18] sm:$0xff]
    %v1413 = vld [vmem:[#allocation18 + $0x8] sm:$0xff]
    %v1414 = vld [vmem:[#allocation18 + $0x10] sm:$0xff]
    %v1415 = vld [vmem:[#allocation18 + $0x18] sm:$0xff]
    %v1416 = vld [vmem:[#allocation18 + $0x20] sm:$0xff]
    %v1417 = vld [vmem:[#allocation18 + $0x28] sm:$0xff]
    %v1418 = vld [vmem:[#allocation18 + $0x30] sm:$0xff]
    %v1419 = vld [vmem:[#allocation18 + $0x38] sm:$0xff]
    %v1420 = vld [vmem:[#allocation18 + $0x40] sm:$0xff]
    %v1421 = vld [vmem:[#allocation18 + $0x48] sm:$0xff]
    %v1422 = vld [vmem:[#allocation18 + $0x50] sm:$0xff]
    %v1423 = vld [vmem:[#allocation18 + $0x58] sm:$0xff]
    %v1424 = vld [vmem:[#allocation18 + $0x60] sm:$0xff]
    %v1425 = vld [vmem:[#allocation18 + $0x68] sm:$0xff]
    %v1426 = vld [vmem:[#allocation18 + $0x70] sm:$0xff]
    %v1427 = vld [vmem:[#allocation18 + $0x78] sm:$0xff]
    %v1428 = vld [vmem:[#allocation20] sm:$0xff]
    %v1429 = vld [vmem:[#allocation20 + $0x8] sm:$0xff]
    %v1430 = vld [vmem:[#allocation20 + $0x10] sm:$0xff]
    %v1431 = vld [vmem:[#allocation20 + $0x18] sm:$0xff]
    %v1432 = vld [vmem:[#allocation20 + $0x20] sm:$0xff]
    %v1433 = vld [vmem:[#allocation20 + $0x28] sm:$0xff]
    %v1434 = vld [vmem:[#allocation20 + $0x30] sm:$0xff]
    %v1435 = vld [vmem:[#allocation20 + $0x38] sm:$0xff]
    %v1436 = vld [vmem:[#allocation20 + $0x40] sm:$0xff]
    %v1437 = vld [vmem:[#allocation20 + $0x48] sm:$0xff]
    %v1438 = vld [vmem:[#allocation20 + $0x50] sm:$0xff]
    %v1439 = vld [vmem:[#allocation20 + $0x58] sm:$0xff]
    %v1440 = vld [vmem:[#allocation20 + $0x60] sm:$0xff]
    %v1441 = vld [vmem:[#allocation20 + $0x68] sm:$0xff]
    %v1442 = vld [vmem:[#allocation20 + $0x70] sm:$0xff]
    %v1443 = vld [vmem:[#allocation20 + $0x78] sm:$0xff]
    %1445 = vset.pattern.permute.xlu0 0
    %1446 = vperm.xlu0 %1445, %v1428
    %v1447 = vpop.permute.xlu0 %1446
    %1450 = vset.pattern.permute.xlu0 0
    %1451 = vperm.xlu0 %1450, %v1429
    %v1452 = vpop.permute.xlu0 %1451
    %1455 = vset.pattern.permute.xlu0 0
    %1456 = vperm.xlu0 %1455, %v1430
    %v1457 = vpop.permute.xlu0 %1456
    %1460 = vset.pattern.permute.xlu0 0
    %1461 = vperm.xlu0 %1460, %v1431
    %v1462 = vpop.permute.xlu0 %1461
    %1465 = vset.pattern.permute.xlu0 0
    %1466 = vperm.xlu0 %1465, %v1432
    %v1467 = vpop.permute.xlu0 %1466
    %1470 = vset.pattern.permute.xlu0 0
    %1471 = vperm.xlu0 %1470, %v1433
    %v1472 = vpop.permute.xlu0 %1471
    %1475 = vset.pattern.permute.xlu0 0
    %1476 = vperm.xlu0 %1475, %v1434
    %v1477 = vpop.permute.xlu0 %1476
    %1480 = vset.pattern.permute.xlu0 0
    %1481 = vperm.xlu0 %1480, %v1435
    %v1482 = vpop.permute.xlu0 %1481
    %1485 = vset.pattern.permute.xlu0 0
    %1486 = vperm.xlu0 %1485, %v1436
    %v1487 = vpop.permute.xlu0 %1486
    %1490 = vset.pattern.permute.xlu0 0
    %1491 = vperm.xlu0 %1490, %v1437
    %v1492 = vpop.permute.xlu0 %1491
    %1495 = vset.pattern.permute.xlu0 0
    %1496 = vperm.xlu0 %1495, %v1438
    %v1497 = vpop.permute.xlu0 %1496
    %1500 = vset.pattern.permute.xlu0 0
    %1501 = vperm.xlu0 %1500, %v1439
    %v1502 = vpop.permute.xlu0 %1501
    %1505 = vset.pattern.permute.xlu0 0
    %1506 = vperm.xlu0 %1505, %v1440
    %v1507 = vpop.permute.xlu0 %1506
    %1510 = vset.pattern.permute.xlu0 0
    %1511 = vperm.xlu0 %1510, %v1441
    %v1512 = vpop.permute.xlu0 %1511
    %1515 = vset.pattern.permute.xlu0 0
    %1516 = vperm.xlu0 %1515, %v1442
    %v1517 = vpop.permute.xlu0 %1516
    %1520 = vset.pattern.permute.xlu0 0
    %1521 = vperm.xlu0 %1520, %v1443
    %v1522 = vpop.permute.xlu0 %1521
    %1524 = vmatprep.subr.mxu0 0.0
    %1525 = vmatpush1.msra.mxu0 %v1396
    %1526 = vmatprep.subr.mxu0 0.0
    %1527 = vmatpush1.msra.mxu0 %v1397
    %1528 = vmatprep.subr.mxu0 0.0
    %1529 = vmatpush1.msra.mxu0 %v1398
    %1530 = vmatprep.subr.mxu0 0.0
    %1531 = vmatpush1.msra.mxu0 %v1399
    %1532 = vmatprep.subr.mxu0 0.0
    %1533 = vmatpush1.msra.mxu0 %v1400
    %1534 = vmatprep.subr.mxu0 0.0
    %1535 = vmatpush1.msra.mxu0 %v1401
    %1536 = vmatprep.subr.mxu0 0.0
    %1537 = vmatpush1.msra.mxu0 %v1402
    %1538 = vmatprep.subr.mxu0 0.0
    %1539 = vmatpush1.msra.mxu0 %v1403
    %1540 = vmatprep.subr.mxu0 0.0
    %1541 = vmatpush1.msra.mxu0 %v1404
    %1542 = vmatprep.subr.mxu0 0.0
    %1543 = vmatpush1.msra.mxu0 %v1405
    %1544 = vmatprep.subr.mxu0 0.0
    %1545 = vmatpush1.msra.mxu0 %v1406
    %1546 = vmatprep.subr.mxu0 0.0
    %1547 = vmatpush1.msra.mxu0 %v1407
    %1548 = vmatprep.subr.mxu0 0.0
    %1549 = vmatpush1.msra.mxu0 %v1408
    %1550 = vmatprep.subr.mxu0 0.0
    %1551 = vmatpush1.msra.mxu0 %v1409
    %1552 = vmatprep.subr.mxu0 0.0
    %1553 = vmatpush1.msra.mxu0 %v1410
    %1554 = vmatprep.subr.mxu0 0.0
    %1555 = vmatpush1.msra.mxu0 %v1411
    %1556 = vmatprep.subr.mxu0 0.0
    %1557 = vmatpush1.msra.mxu0 0.0
    %1558 = vmatprep.subr.mxu0 0.0
    %1559 = vmatpush1.msra.mxu0 0.0
    %1560 = vmatprep.subr.mxu0 0.0
    %1561 = vmatpush1.msra.mxu0 0.0
    %1562 = vmatprep.subr.mxu0 0.0
    %1563 = vmatpush1.msra.mxu0 0.0
    %1564 = vmatprep.subr.mxu0 0.0
    %1565 = vmatpush1.msra.mxu0 0.0
    %1566 = vmatprep.subr.mxu0 0.0
    %1567 = vmatpush1.msra.mxu0 0.0
    %1568 = vmatprep.subr.mxu0 0.0
    %1569 = vmatpush1.msra.mxu0 0.0
    %1570 = vmatprep.subr.mxu0 0.0
    %1571 = vmatpush1.msra.mxu0 0.0
    %1572 = vmatprep.subr.mxu0 0.0
    %1573 = vmatpush1.msra.mxu0 0.0
    %1574 = vmatprep.subr.mxu0 0.0
    %1575 = vmatpush1.msra.mxu0 0.0
    %1576 = vmatprep.subr.mxu0 0.0
    %1577 = vmatpush1.msra.mxu0 0.0
    %1578 = vmatprep.subr.mxu0 0.0
    %1579 = vmatpush1.msra.mxu0 0.0
    %1580 = vmatprep.subr.mxu0 0.0
    %1581 = vmatpush1.msra.mxu0 0.0
    %1582 = vmatprep.subr.mxu0 0.0
    %1583 = vmatpush1.msra.mxu0 0.0
    %1584 = vmatprep.subr.mxu0 0.0
    %1585 = vmatpush1.msra.mxu0 0.0
    %1586 = vmatprep.subr.mxu0 0.0
    %1587 = vmatpush1.msra.mxu0 0.0
    %1588 = vmatprep.mubr.f32.mxu0 0.0
    %1589 = vmatmul.mubr.f32.gmra.mrb[0].mxu0 %v1412
    %v1590 = vpop.f32.mrb[0].mxu0
    %v1591 = vadd.f32 %v1447, %v1590
    %v1592 = vpop.f32.mrb[0].mxu0
    %1593 = vmatprep.mubr.f32.mxu0 0.0
    %1594 = vmatmul.mubr.f32.gmra.mrb[0].mxu0 %v1413
    %v1595 = vpop.f32.mrb[0].mxu0
    %v1596 = vadd.f32 %v1452, %v1595
    %v1597 = vpop.f32.mrb[0].mxu0
    %1598 = vmatprep.mubr.f32.mxu0 0.0
    %1599 = vmatmul.mubr.f32.gmra.mrb[0].mxu0 %v1414
    %v1600 = vpop.f32.mrb[0].mxu0
    %v1601 = vadd.f32 %v1457, %v1600
    %v1602 = vpop.f32.mrb[0].mxu0
    %1603 = vmatprep.mubr.f32.mxu0 0.0
    %1604 = vmatmul.mubr.f32.gmra.mrb[0].mxu0 %v1415
    %v1605 = vpop.f32.mrb[0].mxu0
    %v1606 = vadd.f32 %v1462, %v1605
    %v1607 = vpop.f32.mrb[0].mxu0
    %1608 = vmatprep.mubr.f32.mxu0 0.0
    %1609 = vmatmul.mubr.f32.gmra.mrb[0].mxu0 %v1416
    %v1610 = vpop.f32.mrb[0].mxu0
    %v1611 = vadd.f32 %v1467, %v1610
    %v1612 = vpop.f32.mrb[0].mxu0
    %1613 = vmatprep.mubr.f32.mxu0 0.0
    %1614 = vmatmul.mubr.f32.gmra.mrb[0].mxu0 %v1417
    %v1615 = vpop.f32.mrb[0].mxu0
    %v1616 = vadd.f32 %v1472, %v1615
    %v1617 = vpop.f32.mrb[0].mxu0
    %1618 = vmatprep.mubr.f32.mxu0 0.0
    %1619 = vmatmul.mubr.f32.gmra.mrb[0].mxu0 %v1418
    %v1620 = vpop.f32.mrb[0].mxu0
    %v1621 = vadd.f32 %v1477, %v1620
    %v1622 = vpop.f32.mrb[0].mxu0
    %1623 = vmatprep.mubr.f32.mxu0 0.0
    %1624 = vmatmul.mubr.f32.gmra.mrb[0].mxu0 %v1419
    %v1625 = vpop.f32.mrb[0].mxu0
    %v1626 = vadd.f32 %v1482, %v1625
    %v1627 = vpop.f32.mrb[0].mxu0
    %1628 = vmatprep.mubr.f32.mxu0 0.0
    %1629 = vmatmul.mubr.f32.gmra.mrb[0].mxu0 %v1420
    %v1630 = vpop.f32.mrb[0].mxu0
    %v1631 = vadd.f32 %v1487, %v1630
    %v1632 = vpop.f32.mrb[0].mxu0
    %1633 = vmatprep.mubr.f32.mxu0 0.0
    %1634 = vmatmul.mubr.f32.gmra.mrb[0].mxu0 %v1421
    %v1635 = vpop.f32.mrb[0].mxu0
    %v1636 = vadd.f32 %v1492, %v1635
    %v1637 = vpop.f32.mrb[0].mxu0
    %1638 = vmatprep.mubr.f32.mxu0 0.0
    %1639 = vmatmul.mubr.f32.gmra.mrb[0].mxu0 %v1422
    %v1640 = vpop.f32.mrb[0].mxu0
    %v1641 = vadd.f32 %v1497, %v1640
    %v1642 = vpop.f32.mrb[0].mxu0
    %1643 = vmatprep.mubr.f32.mxu0 0.0
    %1644 = vmatmul.mubr.f32.gmra.mrb[0].mxu0 %v1423
    %v1645 = vpop.f32.mrb[0].mxu0
    %v1646 = vadd.f32 %v1502, %v1645
    %v1647 = vpop.f32.mrb[0].mxu0
    %1648 = vmatprep.mubr.f32.mxu0 0.0
    %1649 = vmatmul.mubr.f32.gmra.mrb[0].mxu0 %v1424
    %v1650 = vpop.f32.mrb[0].mxu0
    %v1651 = vadd.f32 %v1507, %v1650
    %v1652 = vpop.f32.mrb[0].mxu0
    %1653 = vmatprep.mubr.f32.mxu0 0.0
    %1654 = vmatmul.mubr.f32.gmra.mrb[0].mxu0 %v1425
    %v1655 = vpop.f32.mrb[0].mxu0
    %v1656 = vadd.f32 %v1512, %v1655
    %v1657 = vpop.f32.mrb[0].mxu0
    %1658 = vmatprep.mubr.f32.mxu0 0.0
    %1659 = vmatmul.mubr.f32.gmra.mrb[0].mxu0 %v1426
    %v1660 = vpop.f32.mrb[0].mxu0
    %v1661 = vadd.f32 %v1517, %v1660
    %v1662 = vpop.f32.mrb[0].mxu0
    %1663 = vmatprep.mubr.f32.mxu0 0.0
    %1664 = vmatmul.mubr.f32.gmra.mrb[0].mxu0 %v1427
    %v1665 = vpop.f32.mrb[0].mxu0
    %v1666 = vadd.f32 %v1522, %v1665
    %v1667 = vpop.f32.mrb[0].mxu0
    %1668 = vdwg.mxu0
    %v1669 = vmax.f32 %v1591, 0.0
    %v1670 = vmax.f32 %v1596, 0.0
    %v1671 = vmax.f32 %v1601, 0.0
    %v1672 = vmax.f32 %v1606, 0.0
    %v1673 = vmax.f32 %v1611, 0.0
    %v1674 = vmax.f32 %v1616, 0.0
    %v1675 = vmax.f32 %v1621, 0.0
    %v1676 = vmax.f32 %v1626, 0.0
    %v1677 = vmax.f32 %v1631, 0.0
    %v1678 = vmax.f32 %v1636, 0.0
    %v1679 = vmax.f32 %v1641, 0.0
    %v1680 = vmax.f32 %v1646, 0.0
    %v1681 = vmax.f32 %v1651, 0.0
    %v1682 = vmax.f32 %v1656, 0.0
    %v1683 = vmax.f32 %v1661, 0.0
    %v1684 = vmax.f32 %v1666, 0.0
    %v1685 = vld [vmem:[#allocation21] sm:$0xff]
    %1686 = vmatprep.subr.mxu0 0.0
    %1687 = vmatpush1.msra.mxu0 %v1669
    %1688 = vmatprep.subr.mxu0 0.0
    %1689 = vmatpush1.msra.mxu0 %v1670
    %1690 = vmatprep.subr.mxu0 0.0
    %1691 = vmatpush1.msra.mxu0 %v1671
    %1692 = vmatprep.subr.mxu0 0.0
    %1693 = vmatpush1.msra.mxu0 %v1672
    %1694 = vmatprep.subr.mxu0 0.0
    %1695 = vmatpush1.msra.mxu0 %v1673
    %1696 = vmatprep.subr.mxu0 0.0
    %1697 = vmatpush1.msra.mxu0 %v1674
    %1698 = vmatprep.subr.mxu0 0.0
    %1699 = vmatpush1.msra.mxu0 %v1675
    %1700 = vmatprep.subr.mxu0 0.0
    %1701 = vmatpush1.msra.mxu0 %v1676
    %1702 = vmatprep.subr.mxu0 0.0
    %1703 = vmatpush1.msra.mxu0 %v1677
    %1704 = vmatprep.subr.mxu0 0.0
    %1705 = vmatpush1.msra.mxu0 %v1678
    %1706 = vmatprep.subr.mxu0 0.0
    %1707 = vmatpush1.msra.mxu0 %v1679
    %1708 = vmatprep.subr.mxu0 0.0
    %1709 = vmatpush1.msra.mxu0 %v1680
    %1710 = vmatprep.subr.mxu0 0.0
    %1711 = vmatpush1.msra.mxu0 %v1681
    %1712 = vmatprep.subr.mxu0 0.0
    %1713 = vmatpush1.msra.mxu0 %v1682
    %1714 = vmatprep.subr.mxu0 0.0
    %1715 = vmatpush1.msra.mxu0 %v1683
    %1716 = vmatprep.subr.mxu0 0.0
    %1717 = vmatpush1.msra.mxu0 %v1684
    %1718 = vmatprep.subr.mxu0 0.0
    %1719 = vmatpush1.msra.mxu0 0.0
    %1720 = vmatprep.subr.mxu0 0.0
    %1721 = vmatpush1.msra.mxu0 0.0
    %1722 = vmatprep.subr.mxu0 0.0
    %1723 = vmatpush1.msra.mxu0 0.0
    %1724 = vmatprep.subr.mxu0 0.0
    %1725 = vmatpush1.msra.mxu0 0.0
    %1726 = vmatprep.subr.mxu0 0.0
    %1727 = vmatpush1.msra.mxu0 0.0
    %1728 = vmatprep.subr.mxu0 0.0
    %1729 = vmatpush1.msra.mxu0 0.0
    %1730 = vmatprep.subr.mxu0 0.0
    %1731 = vmatpush1.msra.mxu0 0.0
    %1732 = vmatprep.subr.mxu0 0.0
    %1733 = vmatpush1.msra.mxu0 0.0
    %1734 = vmatprep.subr.mxu0 0.0
    %1735 = vmatpush1.msra.mxu0 0.0
    %1736 = vmatprep.subr.mxu0 0.0
    %1737 = vmatpush1.msra.mxu0 0.0
    %1738 = vmatprep.subr.mxu0 0.0
    %1739 = vmatpush1.msra.mxu0 0.0
    %1740 = vmatprep.subr.mxu0 0.0
    %1741 = vmatpush1.msra.mxu0 0.0
    %1742 = vmatprep.subr.mxu0 0.0
    %1743 = vmatpush1.msra.mxu0 0.0
    %1744 = vmatprep.subr.mxu0 0.0
    %1745 = vmatpush1.msra.mxu0 0.0
    %1746 = vmatprep.subr.mxu0 0.0
    %1747 = vmatpush1.msra.mxu0 0.0
    %1748 = vmatprep.subr.mxu0 0.0
    %1749 = vmatpush1.msra.mxu0 0.0
    %1750 = vmatprep.mubr.f32.mxu0 0.0
    %1751 = vmatmul.mubr.f32.gmra.mrb[0].mxu0 %v1685
    %v1752 = vpop.f32.mrb[0].mxu0
    %v1753 = vadd.f32 0.0, %v1752
    %v1754 = vpop.f32.mrb[0].mxu0
    %1755 = vdwg.mxu0
    %s1756 = sld [smem:[#allocation2]]
    %v1757 = vstv %s1756
    %v1758 = vadd.f32 %v1753, %v1757
    %1759 = vst [vmem:[#allocation23] sm:$0x1] %v1758
    // Predicated region
    $region102: #{tpu_custom_call.1} parent=1 // pred_check
      _
    $region103: #{tpu_custom_call.1} parent=1 // pred_check_branch
      %1761 = sbr.rel (0) target = $region105
    $region104: #{tpu_custom_call.1} parent=1 // pred_region
      %s1763 = ssub.s32 16, 16
      %1764 = vsyncadd [#allocation5], %s1763
      %s1766 = sshll.u32 [#allocation23], 4
      %s1767 = int_to_ptr.vmem [resolvable:$true] %s1766
      %1769 = dma.vmem_to_hbm [thread:$0]  %s1767, 16, %s13, [#allocation5]
    $region105: #{tpu_custom_call.1} parent=1 // pred_fallthru
      _
    // Predicated region
    $region106: #{tpu_custom_call.1} parent=1 // pred_check
      _
    $region107: #{tpu_custom_call.1} parent=1 // pred_check_branch
      %1771 = sbr.rel (0) target = $region109
    $region108: #{tpu_custom_call.1} parent=1 // pred_region
      %1772 = dma.done [#allocation5], 16
    $region109: #{tpu_custom_call.1} parent=1 // pred_fallthru
      _
    %1773 = vsyncpa [#allocation4], 1
    %1774 = vsyncpa [#allocation7], 1
    %1775 = vsyncpa [#allocation10], 1
    %1776 = vsyncpa [#allocation13], 1
    %1777 = vsyncpa [#allocation16], 1
    %1778 = vsyncpa [#allocation19], 1
    %1779 = vsyncpa [#allocation22], 1
    %1780 = vsyncpa [#allocation5], 1

// kernel: tpu_custom_call.1
$region0: #{tpu_custom_call.1}
  #allocation0 [shape = 'u32[]', space=smem, size = 0x4, offset = 0x4, fixed_abs, tag = 'smem constant byte address 0x4 - core index']
  #allocation1 [shape = 'u32[144,128]{1,0:T(1,128)}', space=vmem, size = 0x12000, scoped, tag = 'internal scratch']
  #allocation2 [shape = 'f32[1,1]{1,0:T(1,128)S(6)}', space=smem, size = 0x200, scoped, tag = 'scoped memory for tpu_custom_call.1']
  %s0 = inlined_call_operand.hbm [shape: f32[8,4], index: 0, kind: input, shape index: {}]
  %s1 = inlined_call_operand.hbm [shape: f32[128,4], index: 1, kind: input, shape index: {}]
  %s2 = inlined_call_operand.hbm [shape: f32[128,1], index: 2, kind: input, shape index: {}]
  %s3 = inlined_call_operand.hbm [shape: f32[128,128], index: 3, kind: input, shape index: {}]
  %s4 = inlined_call_operand.hbm [shape: f32[128,1], index: 4, kind: input, shape index: {}]
  %s5 = inlined_call_operand.hbm [shape: f32[128,128], index: 5, kind: input, shape index: {}]
  %s6 = inlined_call_operand.hbm [shape: f32[128,1], index: 6, kind: input, shape index: {}]
  %s7 = inlined_call_operand.hbm [shape: f32[128,128], index: 7, kind: input, shape index: {}]
  %s8 = inlined_call_operand.hbm [shape: f32[128,1], index: 8, kind: input, shape index: {}]
  %s9 = inlined_call_operand.hbm [shape: f32[128,128], index: 9, kind: input, shape index: {}]
  %s10 = inlined_call_operand.hbm [shape: f32[128,1], index: 10, kind: input, shape index: {}]
  %s11 = inlined_call_operand.hbm [shape: f32[8,128], index: 11, kind: input, shape index: {}]
  %s12 = inlined_call_operand.<no memory space> [shape: f32[1,1], index: 12, kind: input, shape index: {}]
  %s13 = inlined_call_operand.hbm [shape: f32[1,8], index: 13, kind: output, shape index: {}]
  %s14 = sld [smem:[#allocation0]]
  $region110: #{tpu_custom_call.1} parent=0
    _
  %s16 = ssub.s32 1, %s14
  %s17 = scalar_select 0, %s16, %s14
  %18 = sst [smem:[#allocation2]] %s12
  $region1: #{tpu_custom_call.1} parent=0
    #allocation3 [shape = 'u8[65536]{0}', space=vmem, size = 0x10000, scoped, tag = 'input window, operand 0, single buffered']
    #allocation4 [shape = 's32[1]{0}', space=sflag, size = 0x4, scoped, tag = 'scoped memory for tpu_custom_call.1']
    #allocation5 [shape = 's32[1]{0}', space=sflag, size = 0x4, scoped, tag = 'scoped memory for tpu_custom_call.1']
    #allocation6 [shape = 'u8[65536]{0}', space=vmem, size = 0x10000, scoped, tag = 'input window, operand 1, single buffered']
    #allocation7 [shape = 's32[1]{0}', space=sflag, size = 0x4, scoped, tag = 'scoped memory for tpu_custom_call.1']
    #allocation8 [shape = 'u8[65536]{0}', space=vmem, size = 0x10000, scoped, tag = 'input window, operand 2, single buffered']
    #allocation9 [shape = 'u8[65536]{0}', space=vmem, size = 0x10000, scoped, tag = 'input window, operand 3, single buffered']
    #allocation10 [shape = 's32[1]{0}', space=sflag, size = 0x4, scoped, tag = 'scoped memory for tpu_custom_call.1']
    #allocation11 [shape = 'u8[65536]{0}', space=vmem, size = 0x10000, scoped, tag = 'input window, operand 4, single buffered']
    #allocation12 [shape = 'u8[65536]{0}', space=vmem, size = 0x10000, scoped, tag = 'input window, operand 5, single buffered']
    #allocation13 [shape = 's32[1]{0}', space=sflag, size = 0x4, scoped, tag = 'scoped memory for tpu_custom_call.1']
    #allocation14 [shape = 'u8[65536]{0}', space=vmem, size = 0x10000, scoped, tag = 'input window, operand 6, single buffered']
    #allocation15 [shape = 'u8[65536]{0}', space=vmem, size = 0x10000, scoped, tag = 'input window, operand 7, single buffered']
    #allocation16 [shape = 's32[1]{0}', space=sflag, size = 0x4, scoped, tag = 'scoped memory for tpu_custom_call.1']
    #allocation17 [shape = 'u8[65536]{0}', space=vmem, size = 0x10000, scoped, tag = 'input window, operand 8, single buffered']
    #allocation18 [shape = 'u8[65536]{0}', space=vmem, size = 0x10000, scoped, tag = 'input window, operand 9, single buffered']
    #allocation19 [shape = 's32[1]{0}', space=sflag, size = 0x4, scoped, tag = 'scoped memory for tpu_custom_call.1']
    #allocation20 [shape = 'u8[65536]{0}', space=vmem, size = 0x10000, scoped, tag = 'input window, operand 10, single buffered']
    #allocation21 [shape = 'u8[4096]{0}', space=vmem, size = 0x1000, scoped, tag = 'input window, operand 11, single buffered']
    #allocation22 [shape = 's32[1]{0}', space=sflag, size = 0x4, scoped, tag = 'scoped memory for tpu_custom_call.1']
    #allocation23 [shape = 'u8[512]{0}', space=vmem, size = 0x400, scoped, tag = 'output window, operand 0, single buffered']
    %19 = vsyncpa [#allocation4], 0
    %20 = vsyncpa [#allocation7], 0
    %21 = vsyncpa [#allocation10], 0
    %22 = vsyncpa [#allocation13], 0
    %23 = vsyncpa [#allocation16], 0
    %24 = vsyncpa [#allocation19], 0
    %25 = vsyncpa [#allocation22], 0
    %26 = vsyncpa [#allocation5], 0
    // Predicated region
    $region2: #{tpu_custom_call.1} parent=1 // pred_check
      _
    $region3: #{tpu_custom_call.1} parent=1 // pred_check_branch
      %28 = sbr.rel (0) target = $region5
    $region4: #{tpu_custom_call.1} parent=1 // pred_region
      %s30 = ssub.s32 2048, 128
      %31 = vsyncadd [#allocation4], %s30
      %s32 = sshll.u32 [#allocation3], 4
      %s33 = int_to_ptr.vmem [resolvable:$true] %s32
      %38 = dma.hbm_to_vmem [thread:$0]  %s0, 128, %s33, [#allocation4], 128, 128, 8
    $region5: #{tpu_custom_call.1} parent=1 // pred_fallthru
      _
    // Predicated region
    $region6: #{tpu_custom_call.1} parent=1 // pred_check
      _
    $region7: #{tpu_custom_call.1} parent=1 // pred_check_branch
      %40 = sbr.rel (0) target = $region9
    $region8: #{tpu_custom_call.1} parent=1 // pred_region
      %s42 = ssub.s32 2048, 2048
      %43 = vsyncadd [#allocation7], %s42
      %s44 = sshll.u32 [#allocation6], 4
      %s45 = int_to_ptr.vmem [resolvable:$true] %s44
      %50 = dma.hbm_to_vmem [thread:$0]  %s1, 2048, %s45, [#allocation7], 128, 128, 8
    $region9: #{tpu_custom_call.1} parent=1 // pred_fallthru
      _
    // Predicated region
    $region10: #{tpu_custom_call.1} parent=1 // pred_check
      _
    $region11: #{tpu_custom_call.1} parent=1 // pred_check_branch
      %52 = sbr.rel (0) target = $region13
    $region12: #{tpu_custom_call.1} parent=1 // pred_region
      %s54 = ssub.s32 2048, 2048
      %55 = vsyncadd [#allocation7], %s54
      %s56 = sshll.u32 [#allocation8], 4
      %s57 = int_to_ptr.vmem [resolvable:$true] %s56
      %62 = dma.hbm_to_vmem [thread:$0]  %s2, 2048, %s57, [#allocation7], 128, 128, 8
    $region13: #{tpu_custom_call.1} parent=1 // pred_fallthru
      _
    // Predicated region
    $region14: #{tpu_custom_call.1} parent=1 // pred_check
      _
    $region15: #{tpu_custom_call.1} parent=1 // pred_check_branch
      %64 = sbr.rel (0) target = $region17
    $region16: #{tpu_custom_call.1} parent=1 // pred_region
      %s66 = ssub.s32 2048, 2048
      %67 = vsyncadd [#allocation10], %s66
      %s68 = sshll.u32 [#allocation9], 4
      %s69 = int_to_ptr.vmem [resolvable:$true] %s68
      %74 = dma.hbm_to_vmem [thread:$0]  %s3, 2048, %s69, [#allocation10], 128, 128, 8
    $region17: #{tpu_custom_call.1} parent=1 // pred_fallthru
      _
    // Predicated region
    $region18: #{tpu_custom_call.1} parent=1 // pred_check
      _
    $region19: #{tpu_custom_call.1} parent=1 // pred_check_branch
      %76 = sbr.rel (0) target = $region21
    $region20: #{tpu_custom_call.1} parent=1 // pred_region
      %s78 = ssub.s32 2048, 2048
      %79 = vsyncadd [#allocation10], %s78
      %s80 = sshll.u32 [#allocation11], 4
      %s81 = int_to_ptr.vmem [resolvable:$true] %s80
      %86 = dma.hbm_to_vmem [thread:$0]  %s4, 2048, %s81, [#allocation10], 128, 128, 8
    $region21: #{tpu_custom_call.1} parent=1 // pred_fallthru
      _
    // Predicated region
    $region22: #{tpu_custom_call.1} parent=1 // pred_check
      _
    $region23: #{tpu_custom_call.1} parent=1 // pred_check_branch
      %88 = sbr.rel (0) target = $region25
    $region24: #{tpu_custom_call.1} parent=1 // pred_region
      %s90 = ssub.s32 2048, 2048
      %91 = vsyncadd [#allocation13], %s90
      %s92 = sshll.u32 [#allocation12], 4
      %s93 = int_to_ptr.vmem [resolvable:$true] %s92
      %98 = dma.hbm_to_vmem [thread:$0]  %s5, 2048, %s93, [#allocation13], 128, 128, 8
    $region25: #{tpu_custom_call.1} parent=1 // pred_fallthru
      _
    // Predicated region
    $region26: #{tpu_custom_call.1} parent=1 // pred_check
      _
    $region27: #{tpu_custom_call.1} parent=1 // pred_check_branch
      %100 = sbr.rel (0) target = $region29
    $region28: #{tpu_custom_call.1} parent=1 // pred_region
      %s102 = ssub.s32 2048, 2048
      %103 = vsyncadd [#allocation13], %s102
      %s104 = sshll.u32 [#allocation14], 4
      %s105 = int_to_ptr.vmem [resolvable:$true] %s104
      %110 = dma.hbm_to_vmem [thread:$0]  %s6, 2048, %s105, [#allocation13], 128, 128, 8
    $region29: #{tpu_custom_call.1} parent=1 // pred_fallthru
      _
    // Predicated region
    $region30: #{tpu_custom_call.1} parent=1 // pred_check
      _
    $region31: #{tpu_custom_call.1} parent=1 // pred_check_branch
      %112 = sbr.rel (0) target = $region33
    $region32: #{tpu_custom_call.1} parent=1 // pred_region
      %s114 = ssub.s32 2048, 2048
      %115 = vsyncadd [#allocation16], %s114
      %s116 = sshll.u32 [#allocation15], 4
      %s117 = int_to_ptr.vmem [resolvable:$true] %s116
      %122 = dma.hbm_to_vmem [thread:$0]  %s7, 2048, %s117, [#allocation16], 128, 128, 8
    $region33: #{tpu_custom_call.1} parent=1 // pred_fallthru
      _
    // Predicated region
    $region34: #{tpu_custom_call.1} parent=1 // pred_check
      _
    $region35: #{tpu_custom_call.1} parent=1 // pred_check_branch
      %124 = sbr.rel (0) target = $region37
    $region36: #{tpu_custom_call.1} parent=1 // pred_region
      %s126 = ssub.s32 2048, 2048
      %127 = vsyncadd [#allocation16], %s126
      %s128 = sshll.u32 [#allocation17], 4
      %s129 = int_to_ptr.vmem [resolvable:$true] %s128
      %134 = dma.hbm_to_vmem [thread:$0]  %s8, 2048, %s129, [#allocation16], 128, 128, 8
    $region37: #{tpu_custom_call.1} parent=1 // pred_fallthru
      _
    // Predicated region
    $region38: #{tpu_custom_call.1} parent=1 // pred_check
      _
    $region39: #{tpu_custom_call.1} parent=1 // pred_check_branch
      %136 = sbr.rel (0) target = $region41
    $region40: #{tpu_custom_call.1} parent=1 // pred_region
      %s138 = ssub.s32 2048, 2048
      %139 = vsyncadd [#allocation19], %s138
      %s140 = sshll.u32 [#allocation18], 4
      %s141 = int_to_ptr.vmem [resolvable:$true] %s140
      %146 = dma.hbm_to_vmem [thread:$0]  %s9, 2048, %s141, [#allocation19], 128, 128, 8
    $region41: #{tpu_custom_call.1} parent=1 // pred_fallthru
      _
    // Predicated region
    $region42: #{tpu_custom_call.1} parent=1 // pred_check
      _
    $region43: #{tpu_custom_call.1} parent=1 // pred_check_branch
      %148 = sbr.rel (0) target = $region45
    $region44: #{tpu_custom_call.1} parent=1 // pred_region
      %s150 = ssub.s32 2048, 2048
      %151 = vsyncadd [#allocation19], %s150
      %s152 = sshll.u32 [#allocation20], 4
      %s153 = int_to_ptr.vmem [resolvable:$true] %s152
      %158 = dma.hbm_to_vmem [thread:$0]  %s10, 2048, %s153, [#allocation19], 128, 128, 8
    $region45: #{tpu_custom_call.1} parent=1 // pred_fallthru
      _
    // Predicated region
    $region46: #{tpu_custom_call.1} parent=1 // pred_check
      _
    $region47: #{tpu_custom_call.1} parent=1 // pred_check_branch
      %160 = sbr.rel (0) target = $region49
    $region48: #{tpu_custom_call.1} parent=1 // pred_region
      %s162 = ssub.s32 128, 128
      %163 = vsyncadd [#allocation22], %s162
      %s165 = sshll.u32 [#allocation21], 4
      %s166 = int_to_ptr.vmem [resolvable:$true] %s165
      %168 = dma.hbm_to_vmem [thread:$0]  %s11, 128, %s166, [#allocation22]
    $region49: #{tpu_custom_call.1} parent=1 // pred_fallthru
      _
    // Predicated region
    $region50: #{tpu_custom_call.1} parent=1 // pred_check
      _
    $region51: #{tpu_custom_call.1} parent=1 // pred_check_branch
      %170 = sbr.rel (0) target = $region53
    $region52: #{tpu_custom_call.1} parent=1 // pred_region
      _
    $region53: #{tpu_custom_call.1} parent=1 // pred_fallthru
      _
    // Predicated region
    $region54: #{tpu_custom_call.1} parent=1 // pred_check
      _
    $region55: #{tpu_custom_call.1} parent=1 // pred_check_branch
      %172 = sbr.rel (0) target = $region57
    $region56: #{tpu_custom_call.1} parent=1 // pred_region
      %173 = dma.done [#allocation4], 2048
    $region57: #{tpu_custom_call.1} parent=1 // pred_fallthru
      _
    // Predicated region
    $region58: #{tpu_custom_call.1} parent=1 // pred_check
      _
    $region59: #{tpu_custom_call.1} parent=1 // pred_check_branch
      %175 = sbr.rel (0) target = $region61
    $region60: #{tpu_custom_call.1} parent=1 // pred_region
      %176 = dma.done [#allocation7], 2048
    $region61: #{tpu_custom_call.1} parent=1 // pred_fallthru
      _
    // Predicated region
    $region62: #{tpu_custom_call.1} parent=1 // pred_check
      _
    $region63: #{tpu_custom_call.1} parent=1 // pred_check_branch
      %178 = sbr.rel (0) target = $region65
    $region64: #{tpu_custom_call.1} parent=1 // pred_region
      %179 = dma.done [#allocation7], 2048
    $region65: #{tpu_custom_call.1} parent=1 // pred_fallthru
      _
    // Predicated region
    $region66: #{tpu_custom_call.1} parent=1 // pred_check
      _
    $region67: #{tpu_custom_call.1} parent=1 // pred_check_branch
      %181 = sbr.rel (0) target = $region69
    $region68: #{tpu_custom_call.1} parent=1 // pred_region
      %182 = dma.done [#allocation10], 2048
    $region69: #{tpu_custom_call.1} parent=1 // pred_fallthru
      _
    // Predicated region
    $region70: #{tpu_custom_call.1} parent=1 // pred_check
      _
    $region71: #{tpu_custom_call.1} parent=1 // pred_check_branch
      %184 = sbr.rel (0) target = $region73
    $region72: #{tpu_custom_call.1} parent=1 // pred_region
      %185 = dma.done [#allocation10], 2048
    $region73: #{tpu_custom_call.1} parent=1 // pred_fallthru
      _
    // Predicated region
    $region74: #{tpu_custom_call.1} parent=1 // pred_check
      _
    $region75: #{tpu_custom_call.1} parent=1 // pred_check_branch
      %187 = sbr.rel (0) target = $region77
    $region76: #{tpu_custom_call.1} parent=1 // pred_region
      %188 = dma.done [#allocation13], 2048
    $region77: #{tpu_custom_call.1} parent=1 // pred_fallthru
      _
    // Predicated region
    $region78: #{tpu_custom_call.1} parent=1 // pred_check
      _
    $region79: #{tpu_custom_call.1} parent=1 // pred_check_branch
      %190 = sbr.rel (0) target = $region81
    $region80: #{tpu_custom_call.1} parent=1 // pred_region
      %191 = dma.done [#allocation13], 2048
    $region81: #{tpu_custom_call.1} parent=1 // pred_fallthru
      _
    // Predicated region
    $region82: #{tpu_custom_call.1} parent=1 // pred_check
      _
    $region83: #{tpu_custom_call.1} parent=1 // pred_check_branch
      %193 = sbr.rel (0) target = $region85
    $region84: #{tpu_custom_call.1} parent=1 // pred_region
      %194 = dma.done [#allocation16], 2048
    $region85: #{tpu_custom_call.1} parent=1 // pred_fallthru
      _
    // Predicated region
    $region86: #{tpu_custom_call.1} parent=1 // pred_check
      _
    $region87: #{tpu_custom_call.1} parent=1 // pred_check_branch
      %196 = sbr.rel (0) target = $region89
    $region88: #{tpu_custom_call.1} parent=1 // pred_region
      %197 = dma.done [#allocation16], 2048
    $region89: #{tpu_custom_call.1} parent=1 // pred_fallthru
      _
    // Predicated region
    $region90: #{tpu_custom_call.1} parent=1 // pred_check
      _
    $region91: #{tpu_custom_call.1} parent=1 // pred_check_branch
      %199 = sbr.rel (0) target = $region93
    $region92: #{tpu_custom_call.1} parent=1 // pred_region
      %200 = dma.done [#allocation19], 2048
    $region93: #{tpu_custom_call.1} parent=1 // pred_fallthru
      _
    // Predicated region
    $region94: #{tpu_custom_call.1} parent=1 // pred_check
      _
    $region95: #{tpu_custom_call.1} parent=1 // pred_check_branch
      %202 = sbr.rel (0) target = $region97
    $region96: #{tpu_custom_call.1} parent=1 // pred_region
      %203 = dma.done [#allocation19], 2048
    $region97: #{tpu_custom_call.1} parent=1 // pred_fallthru
      _
    // Predicated region
    $region98: #{tpu_custom_call.1} parent=1 // pred_check
      _
    $region99: #{tpu_custom_call.1} parent=1 // pred_check_branch
      %205 = sbr.rel (0) target = $region101
    $region100: #{tpu_custom_call.1} parent=1 // pred_region
      %206 = dma.done [#allocation22], 128
    $region101: #{tpu_custom_call.1} parent=1 // pred_fallthru
      _
    %v207 = vld [vmem:[#allocation6] sm:$0xff]
    %v208 = vld [vmem:[#allocation6 + $0x8] sm:$0xff]
    %v209 = vld [vmem:[#allocation6 + $0x10] sm:$0xff]
    %v210 = vld [vmem:[#allocation6 + $0x18] sm:$0xff]
    %v211 = vld [vmem:[#allocation6 + $0x20] sm:$0xff]
    %v212 = vld [vmem:[#allocation6 + $0x28] sm:$0xff]
    %v213 = vld [vmem:[#allocation6 + $0x30] sm:$0xff]
    %v214 = vld [vmem:[#allocation6 + $0x38] sm:$0xff]
    %v215 = vld [vmem:[#allocation6 + $0x40] sm:$0xff]
    %v216 = vld [vmem:[#allocation6 + $0x48] sm:$0xff]
    %v217 = vld [vmem:[#allocation6 + $0x50] sm:$0xff]
    %v218 = vld [vmem:[#allocation6 + $0x58] sm:$0xff]
    %v219 = vld [vmem:[#allocation6 + $0x60] sm:$0xff]
    %v220 = vld [vmem:[#allocation6 + $0x68] sm:$0xff]
    %v221 = vld [vmem:[#allocation6 + $0x70] sm:$0xff]
    %v222 = vld [vmem:[#allocation6 + $0x78] sm:$0xff]
    %v223 = vld [vmem:[#allocation3] sm:$0xff]
    %v224 = vld [vmem:[#allocation3 + $0x8] sm:$0xff]
    %v225 = vld [vmem:[#allocation3 + $0x10] sm:$0xff]
    %v226 = vld [vmem:[#allocation3 + $0x18] sm:$0xff]
    %v227 = vld [vmem:[#allocation3 + $0x20] sm:$0xff]
    %v228 = vld [vmem:[#allocation3 + $0x28] sm:$0xff]
    %v229 = vld [vmem:[#allocation3 + $0x30] sm:$0xff]
    %v230 = vld [vmem:[#allocation3 + $0x38] sm:$0xff]
    %v231 = vld [vmem:[#allocation3 + $0x40] sm:$0xff]
    %v232 = vld [vmem:[#allocation3 + $0x48] sm:$0xff]
    %v233 = vld [vmem:[#allocation3 + $0x50] sm:$0xff]
    %v234 = vld [vmem:[#allocation3 + $0x58] sm:$0xff]
    %v235 = vld [vmem:[#allocation3 + $0x60] sm:$0xff]
    %v236 = vld [vmem:[#allocation3 + $0x68] sm:$0xff]
    %v237 = vld [vmem:[#allocation3 + $0x70] sm:$0xff]
    %v238 = vld [vmem:[#allocation3 + $0x78] sm:$0xff]
    %v239 = vld [vmem:[#allocation8] sm:$0xff]
    %v240 = vld [vmem:[#allocation8 + $0x8] sm:$0xff]
    %v241 = vld [vmem:[#allocation8 + $0x10] sm:$0xff]
    %v242 = vld [vmem:[#allocation8 + $0x18] sm:$0xff]
    %v243 = vld [vmem:[#allocation8 + $0x20] sm:$0xff]
    %v244 = vld [vmem:[#allocation8 + $0x28] sm:$0xff]
    %v245 = vld [vmem:[#allocation8 + $0x30] sm:$0xff]
    %v246 = vld [vmem:[#allocation8 + $0x38] sm:$0xff]
    %v247 = vld [vmem:[#allocation8 + $0x40] sm:$0xff]
    %v248 = vld [vmem:[#allocation8 + $0x48] sm:$0xff]
    %v249 = vld [vmem:[#allocation8 + $0x50] sm:$0xff]
    %v250 = vld [vmem:[#allocation8 + $0x58] sm:$0xff]
    %v251 = vld [vmem:[#allocation8 + $0x60] sm:$0xff]
    %v252 = vld [vmem:[#allocation8 + $0x68] sm:$0xff]
    %v253 = vld [vmem:[#allocation8 + $0x70] sm:$0xff]
    %v254 = vld [vmem:[#allocation8 + $0x78] sm:$0xff]
    %256 = vset.pattern.permute.xlu0 0
    %257 = vperm.xlu0 %256, %v239
    %v258 = vpop.permute.xlu0 %257
    %261 = vset.pattern.permute.xlu0 0
    %262 = vperm.xlu0 %261, %v240
    %v263 = vpop.permute.xlu0 %262
    %266 = vset.pattern.permute.xlu0 0
    %267 = vperm.xlu0 %266, %v241
    %v268 = vpop.permute.xlu0 %267
    %271 = vset.pattern.permute.xlu0 0
    %272 = vperm.xlu0 %271, %v242
    %v273 = vpop.permute.xlu0 %272
    %276 = vset.pattern.permute.xlu0 0
    %277 = vperm.xlu0 %276, %v243
    %v278 = vpop.permute.xlu0 %277
    %281 = vset.pattern.permute.xlu0 0
    %282 = vperm.xlu0 %281, %v244
    %v283 = vpop.permute.xlu0 %282
    %286 = vset.pattern.permute.xlu0 0
    %287 = vperm.xlu0 %286, %v245
    %v288 = vpop.permute.xlu0 %287
    %291 = vset.pattern.permute.xlu0 0
    %292 = vperm.xlu0 %291, %v246
    %v293 = vpop.permute.xlu0 %292
    %296 = vset.pattern.permute.xlu0 0
    %297 = vperm.xlu0 %296, %v247
    %v298 = vpop.permute.xlu0 %297
    %301 = vset.pattern.permute.xlu0 0
    %302 = vperm.xlu0 %301, %v248
    %v303 = vpop.permute.xlu0 %302
    %306 = vset.pattern.permute.xlu0 0
    %307 = vperm.xlu0 %306, %v249
    %v308 = vpop.permute.xlu0 %307
    %311 = vset.pattern.permute.xlu0 0
    %312 = vperm.xlu0 %311, %v250
    %v313 = vpop.permute.xlu0 %312
    %316 = vset.pattern.permute.xlu0 0
    %317 = vperm.xlu0 %316, %v251
    %v318 = vpop.permute.xlu0 %317
    %321 = vset.pattern.permute.xlu0 0
    %322 = vperm.xlu0 %321, %v252
    %v323 = vpop.permute.xlu0 %322
    %326 = vset.pattern.permute.xlu0 0
    %327 = vperm.xlu0 %326, %v253
    %v328 = vpop.permute.xlu0 %327
    %331 = vset.pattern.permute.xlu0 0
    %332 = vperm.xlu0 %331, %v254
    %v333 = vpop.permute.xlu0 %332
    %vm335 = vcmask 31744
    %v337 = vsel %vm335, %v207, 0
    %v340 = vsel %vm335, %v208, 0
    %v343 = vsel %vm335, %v209, 0
    %v346 = vsel %vm335, %v210, 0
    %v349 = vsel %vm335, %v211, 0
    %v352 = vsel %vm335, %v212, 0
    %v355 = vsel %vm335, %v213, 0
    %v358 = vsel %vm335, %v214, 0
    %v361 = vsel %vm335, %v215, 0
    %v364 = vsel %vm335, %v216, 0
    %v367 = vsel %vm335, %v217, 0
    %v370 = vsel %vm335, %v218, 0
    %v373 = vsel %vm335, %v219, 0
    %v376 = vsel %vm335, %v220, 0
    %v379 = vsel %vm335, %v221, 0
    %v382 = vsel %vm335, %v222, 0
    %v385 = vsel %vm335, %v223, 0
    %v388 = vsel %vm335, %v224, 0
    %v391 = vsel %vm335, %v225, 0
    %v394 = vsel %vm335, %v226, 0
    %v397 = vsel %vm335, %v227, 0
    %v400 = vsel %vm335, %v228, 0
    %v403 = vsel %vm335, %v229, 0
    %v406 = vsel %vm335, %v230, 0
    %v409 = vsel %vm335, %v231, 0
    %v412 = vsel %vm335, %v232, 0
    %v415 = vsel %vm335, %v233, 0
    %v418 = vsel %vm335, %v234, 0
    %v421 = vsel %vm335, %v235, 0
    %v424 = vsel %vm335, %v236, 0
    %v427 = vsel %vm335, %v237, 0
    %v430 = vsel %vm335, %v238, 0
    %432 = vmatprep.subr.mxu0 0.0
    %433 = vmatpush1.xpose.msra.mxu0 %v385
    %434 = vmatprep.subr.mxu0 0.0
    %435 = vmatpush1.xpose.msra.mxu0 %v388
    %436 = vmatprep.subr.mxu0 0.0
    %437 = vmatpush1.xpose.msra.mxu0 %v391
    %438 = vmatprep.subr.mxu0 0.0
    %439 = vmatpush1.xpose.msra.mxu0 %v394
    %440 = vmatprep.subr.mxu0 0.0
    %441 = vmatpush1.xpose.msra.mxu0 %v397
    %442 = vmatprep.subr.mxu0 0.0
    %443 = vmatpush1.xpose.msra.mxu0 %v400
    %444 = vmatprep.subr.mxu0 0.0
    %445 = vmatpush1.xpose.msra.mxu0 %v403
    %446 = vmatprep.subr.mxu0 0.0
    %447 = vmatpush1.xpose.msra.mxu0 %v406
    %448 = vmatprep.subr.mxu0 0.0
    %449 = vmatpush1.xpose.msra.mxu0 %v409
    %450 = vmatprep.subr.mxu0 0.0
    %451 = vmatpush1.xpose.msra.mxu0 %v412
    %452 = vmatprep.subr.mxu0 0.0
    %453 = vmatpush1.xpose.msra.mxu0 %v415
    %454 = vmatprep.subr.mxu0 0.0
    %455 = vmatpush1.xpose.msra.mxu0 %v418
    %456 = vmatprep.subr.mxu0 0.0
    %457 = vmatpush1.xpose.msra.mxu0 %v421
    %458 = vmatprep.subr.mxu0 0.0
    %459 = vmatpush1.xpose.msra.mxu0 %v424
    %460 = vmatprep.subr.mxu0 0.0
    %461 = vmatpush1.xpose.msra.mxu0 %v427
    %462 = vmatprep.subr.mxu0 0.0
    %463 = vmatpush1.xpose.msra.mxu0 %v430
    %464 = vmatprep.subr.mxu0 0.0
    %465 = vmatpush1.xpose.msra.mxu0 0.0
    %466 = vmatprep.subr.mxu0 0.0
    %467 = vmatpush1.xpose.msra.mxu0 0.0
    %468 = vmatprep.subr.mxu0 0.0
    %469 = vmatpush1.xpose.msra.mxu0 0.0
    %470 = vmatprep.subr.mxu0 0.0
    %471 = vmatpush1.xpose.msra.mxu0 0.0
    %472 = vmatprep.subr.mxu0 0.0
    %473 = vmatpush1.xpose.msra.mxu0 0.0
    %474 = vmatprep.subr.mxu0 0.0
    %475 = vmatpush1.xpose.msra.mxu0 0.0
    %476 = vmatprep.subr.mxu0 0.0
    %477 = vmatpush1.xpose.msra.mxu0 0.0
    %478 = vmatprep.subr.mxu0 0.0
    %479 = vmatpush1.xpose.msra.mxu0 0.0
    %480 = vmatprep.subr.mxu0 0.0
    %481 = vmatpush1.xpose.msra.mxu0 0.0
    %482 = vmatprep.subr.mxu0 0.0
    %483 = vmatpush1.xpose.msra.mxu0 0.0
    %484 = vmatprep.subr.mxu0 0.0
    %485 = vmatpush1.xpose.msra.mxu0 0.0
    %486 = vmatprep.subr.mxu0 0.0
    %487 = vmatpush1.xpose.msra.mxu0 0.0
    %488 = vmatprep.subr.mxu0 0.0
    %489 = vmatpush1.xpose.msra.mxu0 0.0
    %490 = vmatprep.subr.mxu0 0.0
    %491 = vmatpush1.xpose.msra.mxu0 0.0
    %492 = vmatprep.subr.mxu0 0.0
    %493 = vmatpush1.xpose.msra.mxu0 0.0
    %494 = vmatprep.subr.mxu0 0.0
    %495 = vmatpush1.xpose.msra.mxu0 0.0
    %496 = vmatprep.mubr.f32.mxu0 0.0
    %497 = vmatmul.mubr.f32.gmra.mrb[0].mxu0 %v337
    %v498 = vpop.f32.mrb[0].mxu0
    %v499 = vadd.f32 %v258, %v498
    %v500 = vpop.f32.mrb[0].mxu0
    %501 = vmatprep.mubr.f32.mxu0 0.0
    %502 = vmatmul.mubr.f32.gmra.mrb[0].mxu0 %v340
    %v503 = vpop.f32.mrb[0].mxu0
    %v504 = vadd.f32 %v263, %v503
    %v505 = vpop.f32.mrb[0].mxu0
    %506 = vmatprep.mubr.f32.mxu0 0.0
    %507 = vmatmul.mubr.f32.gmra.mrb[0].mxu0 %v343
    %v508 = vpop.f32.mrb[0].mxu0
    %v509 = vadd.f32 %v268, %v508
    %v510 = vpop.f32.mrb[0].mxu0
    %511 = vmatprep.mubr.f32.mxu0 0.0
    %512 = vmatmul.mubr.f32.gmra.mrb[0].mxu0 %v346
    %v513 = vpop.f32.mrb[0].mxu0
    %v514 = vadd.f32 %v273, %v513
    %v515 = vpop.f32.mrb[0].mxu0
    %516 = vmatprep.mubr.f32.mxu0 0.0
    %517 = vmatmul.mubr.f32.gmra.mrb[0].mxu0 %v349
    %v518 = vpop.f32.mrb[0].mxu0
    %v519 = vadd.f32 %v278, %v518
    %v520 = vpop.f32.mrb[0].mxu0
    %521 = vmatprep.mubr.f32.mxu0 0.0
    %522 = vmatmul.mubr.f32.gmra.mrb[0].mxu0 %v352
    %v523 = vpop.f32.mrb[0].mxu0
    %v524 = vadd.f32 %v283, %v523
    %v525 = vpop.f32.mrb[0].mxu0
    %526 = vmatprep.mubr.f32.mxu0 0.0
    %527 = vmatmul.mubr.f32.gmra.mrb[0].mxu0 %v355
    %v528 = vpop.f32.mrb[0].mxu0
    %v529 = vadd.f32 %v288, %v528
    %v530 = vpop.f32.mrb[0].mxu0
    %531 = vmatprep.mubr.f32.mxu0 0.0
    %532 = vmatmul.mubr.f32.gmra.mrb[0].mxu0 %v358
    %v533 = vpop.f32.mrb[0].mxu0
    %v534 = vadd.f32 %v293, %v533
    %v535 = vpop.f32.mrb[0].mxu0
    %536 = vmatprep.mubr.f32.mxu0 0.0
    %537 = vmatmul.mubr.f32.gmra.mrb[0].mxu0 %v361
    %v538 = vpop.f32.mrb[0].mxu0
    %v539 = vadd.f32 %v298, %v538
    %v540 = vpop.f32.mrb[0].mxu0
    %541 = vmatprep.mubr.f32.mxu0 0.0
    %542 = vmatmul.mubr.f32.gmra.mrb[0].mxu0 %v364
    %v543 = vpop.f32.mrb[0].mxu0
    %v544 = vadd.f32 %v303, %v543
    %v545 = vpop.f32.mrb[0].mxu0
    %546 = vmatprep.mubr.f32.mxu0 0.0
    %547 = vmatmul.mubr.f32.gmra.mrb[0].mxu0 %v367
    %v548 = vpop.f32.mrb[0].mxu0
    %v549 = vadd.f32 %v308, %v548
    %v550 = vpop.f32.mrb[0].mxu0
    %551 = vmatprep.mubr.f32.mxu0 0.0
    %552 = vmatmul.mubr.f32.gmra.mrb[0].mxu0 %v370
    %v553 = vpop.f32.mrb[0].mxu0
    %v554 = vadd.f32 %v313, %v553
    %v555 = vpop.f32.mrb[0].mxu0
    %556 = vmatprep.mubr.f32.mxu0 0.0
    %557 = vmatmul.mubr.f32.gmra.mrb[0].mxu0 %v373
    %v558 = vpop.f32.mrb[0].mxu0
    %v559 = vadd.f32 %v318, %v558
    %v560 = vpop.f32.mrb[0].mxu0
    %561 = vmatprep.mubr.f32.mxu0 0.0
    %562 = vmatmul.mubr.f32.gmra.mrb[0].mxu0 %v376
    %v563 = vpop.f32.mrb[0].mxu0
    %v564 = vadd.f32 %v323, %v563
    %v565 = vpop.f32.mrb[0].mxu0
    %566 = vmatprep.mubr.f32.mxu0 0.0
    %567 = vmatmul.mubr.f32.gmra.mrb[0].mxu0 %v379
    %v568 = vpop.f32.mrb[0].mxu0
    %v569 = vadd.f32 %v328, %v568
    %v570 = vpop.f32.mrb[0].mxu0
    %571 = vmatprep.mubr.f32.mxu0 0.0
    %572 = vmatmul.mubr.f32.gmra.mrb[0].mxu0 %v382
    %v573 = vpop.f32.mrb[0].mxu0
    %v574 = vadd.f32 %v333, %v573
    %v575 = vpop.f32.mrb[0].mxu0
    %576 = vdwg.mxu0
    %v577 = vmax.f32 %v499, 0.0
    %v578 = vmax.f32 %v504, 0.0
    %v579 = vmax.f32 %v509, 0.0
    %v580 = vmax.f32 %v514, 0.0
    %v581 = vmax.f32 %v519, 0.0
    %v582 = vmax.f32 %v524, 0.0
    %v583 = vmax.f32 %v529, 0.0
    %v584 = vmax.f32 %v534, 0.0
    %v585 = vmax.f32 %v539, 0.0
    %v586 = vmax.f32 %v544, 0.0
    %v587 = vmax.f32 %v549, 0.0
    %v588 = vmax.f32 %v554, 0.0
    %v589 = vmax.f32 %v559, 0.0
    %v590 = vmax.f32 %v564, 0.0
    %v591 = vmax.f32 %v569, 0.0
    %v592 = vmax.f32 %v574, 0.0
    %v593 = vld [vmem:[#allocation9] sm:$0xff]
    %v594 = vld [vmem:[#allocation9 + $0x8] sm:$0xff]
    %v595 = vld [vmem:[#allocation9 + $0x10] sm:$0xff]
    %v596 = vld [vmem:[#allocation9 + $0x18] sm:$0xff]
    %v597 = vld [vmem:[#allocation9 + $0x20] sm:$0xff]
    %v598 = vld [vmem:[#allocation9 + $0x28] sm:$0xff]
    %v599 = vld [vmem:[#allocation9 + $0x30] sm:$0xff]
    %v600 = vld [vmem:[#allocation9 + $0x38] sm:$0xff]
    %v601 = vld [vmem:[#allocation9 + $0x40] sm:$0xff]
    %v602 = vld [vmem:[#allocation9 + $0x48] sm:$0xff]
    %v603 = vld [vmem:[#allocation9 + $0x50] sm:$0xff]
    %v604 = vld [vmem:[#allocation9 + $0x58] sm:$0xff]
    %v605 = vld [vmem:[#allocation9 + $0x60] sm:$0xff]
    %v606 = vld [vmem:[#allocation9 + $0x68] sm:$0xff]
    %v607 = vld [vmem:[#allocation9 + $0x70] sm:$0xff]
    %v608 = vld [vmem:[#allocation9 + $0x78] sm:$0xff]
    %v609 = vld [vmem:[#allocation11] sm:$0xff]
    %v610 = vld [vmem:[#allocation11 + $0x8] sm:$0xff]
    %v611 = vld [vmem:[#allocation11 + $0x10] sm:$0xff]
    %v612 = vld [vmem:[#allocation11 + $0x18] sm:$0xff]
    %v613 = vld [vmem:[#allocation11 + $0x20] sm:$0xff]
    %v614 = vld [vmem:[#allocation11 + $0x28] sm:$0xff]
    %v615 = vld [vmem:[#allocation11 + $0x30] sm:$0xff]
    %v616 = vld [vmem:[#allocation11 + $0x38] sm:$0xff]
    %v617 = vld [vmem:[#allocation11 + $0x40] sm:$0xff]
    %v618 = vld [vmem:[#allocation11 + $0x48] sm:$0xff]
    %v619 = vld [vmem:[#allocation11 + $0x50] sm:$0xff]
    %v620 = vld [vmem:[#allocation11 + $0x58] sm:$0xff]
    %v621 = vld [vmem:[#allocation11 + $0x60] sm:$0xff]
    %v622 = vld [vmem:[#allocation11 + $0x68] sm:$0xff]
    %v623 = vld [vmem:[#allocation11 + $0x70] sm:$0xff]
    %v624 = vld [vmem:[#allocation11 + $0x78] sm:$0xff]
    %626 = vset.pattern.permute.xlu0 0
    %627 = vperm.xlu0 %626, %v609
    %v628 = vpop.permute.xlu0 %627
    %631 = vset.pattern.permute.xlu0 0
    %632 = vperm.xlu0 %631, %v610
    %v633 = vpop.permute.xlu0 %632
    %636 = vset.pattern.permute.xlu0 0
    %637 = vperm.xlu0 %636, %v611
    %v638 = vpop.permute.xlu0 %637
    %641 = vset.pattern.permute.xlu0 0
    %642 = vperm.xlu0 %641, %v612
    %v643 = vpop.permute.xlu0 %642
    %646 = vset.pattern.permute.xlu0 0
    %647 = vperm.xlu0 %646, %v613
    %v648 = vpop.permute.xlu0 %647
    %651 = vset.pattern.permute.xlu0 0
    %652 = vperm.xlu0 %651, %v614
    %v653 = vpop.permute.xlu0 %652
    %656 = vset.pattern.permute.xlu0 0
    %657 = vperm.xlu0 %656, %v615
    %v658 = vpop.permute.xlu0 %657
    %661 = vset.pattern.permute.xlu0 0
    %662 = vperm.xlu0 %661, %v616
    %v663 = vpop.permute.xlu0 %662
    %666 = vset.pattern.permute.xlu0 0
    %667 = vperm.xlu0 %666, %v617
    %v668 = vpop.permute.xlu0 %667
    %671 = vset.pattern.permute.xlu0 0
    %672 = vperm.xlu0 %671, %v618
    %v673 = vpop.permute.xlu0 %672
    %676 = vset.pattern.permute.xlu0 0
    %677 = vperm.xlu0 %676, %v619
    %v678 = vpop.permute.xlu0 %677
    %681 = vset.pattern.permute.xlu0 0
    %682 = vperm.xlu0 %681, %v620
    %v683 = vpop.permute.xlu0 %682
    %686 = vset.pattern.permute.xlu0 0
    %687 = vperm.xlu0 %686, %v621
    %v688 = vpop.permute.xlu0 %687
    %691 = vset.pattern.permute.xlu0 0
    %692 = vperm.xlu0 %691, %v622
    %v693 = vpop.permute.xlu0 %692
    %696 = vset.pattern.permute.xlu0 0
    %697 = vperm.xlu0 %696, %v623
    %v698 = vpop.permute.xlu0 %697
    %701 = vset.pattern.permute.xlu0 0
    %702 = vperm.xlu0 %701, %v624
    %v703 = vpop.permute.xlu0 %702
    %705 = vmatprep.subr.mxu0 0.0
    %706 = vmatpush1.msra.mxu0 %v577
    %707 = vmatprep.subr.mxu0 0.0
    %708 = vmatpush1.msra.mxu0 %v578
    %709 = vmatprep.subr.mxu0 0.0
    %710 = vmatpush1.msra.mxu0 %v579
    %711 = vmatprep.subr.mxu0 0.0
    %712 = vmatpush1.msra.mxu0 %v580
    %713 = vmatprep.subr.mxu0 0.0
    %714 = vmatpush1.msra.mxu0 %v581
    %715 = vmatprep.subr.mxu0 0.0
    %716 = vmatpush1.msra.mxu0 %v582
    %717 = vmatprep.subr.mxu0 0.0
    %718 = vmatpush1.msra.mxu0 %v583
    %719 = vmatprep.subr.mxu0 0.0
    %720 = vmatpush1.msra.mxu0 %v584
    %721 = vmatprep.subr.mxu0 0.0
    %722 = vmatpush1.msra.mxu0 %v585
    %723 = vmatprep.subr.mxu0 0.0
    %724 = vmatpush1.msra.mxu0 %v586
    %725 = vmatprep.subr.mxu0 0.0
    %726 = vmatpush1.msra.mxu0 %v587
    %727 = vmatprep.subr.mxu0 0.0
    %728 = vmatpush1.msra.mxu0 %v588
    %729 = vmatprep.subr.mxu0 0.0
    %730 = vmatpush1.msra.mxu0 %v589
    %731 = vmatprep.subr.mxu0 0.0
    %732 = vmatpush1.msra.mxu0 %v590
    %733 = vmatprep.subr.mxu0 0.0
    %734 = vmatpush1.msra.mxu0 %v591
    %735 = vmatprep.subr.mxu0 0.0
    %736 = vmatpush1.msra.mxu0 %v592
    %737 = vmatprep.subr.mxu0 0.0
    %738 = vmatpush1.msra.mxu0 0.0
    %739 = vmatprep.subr.mxu0 0.0
    %740 = vmatpush1.msra.mxu0 0.0
    %741 = vmatprep.subr.mxu0 0.0
    %742 = vmatpush1.msra.mxu0 0.0
    %743 = vmatprep.subr.mxu0 0.0
    %744 = vmatpush1.msra.mxu0 0.0
    %745 = vmatprep.subr.mxu0 0.0
    %746 = vmatpush1.msra.mxu0 0.0
    %747 = vmatprep.subr.mxu0 0.0
    %748 = vmatpush1.msra.mxu0 0.0
    %749 = vmatprep.subr.mxu0 0.0
    %750 = vmatpush1.msra.mxu0 0.0
    %751 = vmatprep.subr.mxu0 0.0
    %752 = vmatpush1.msra.mxu0 0.0
    %753 = vmatprep.subr.mxu0 0.0
    %754 = vmatpush1.msra.mxu0 0.0
    %755 = vmatprep.subr.mxu0 0.0
    %756 = vmatpush1.msra.mxu0 0.0
    %757 = vmatprep.subr.mxu0 0.0
    %758 = vmatpush1.msra.mxu0 0.0
    %759 = vmatprep.subr.mxu0 0.0
    %760 = vmatpush1.msra.mxu0 0.0
    %761 = vmatprep.subr.mxu0 0.0
    %762 = vmatpush1.msra.mxu0 0.0
    %763 = vmatprep.subr.mxu0 0.0
    %764 = vmatpush1.msra.mxu0 0.0
    %765 = vmatprep.subr.mxu0 0.0
    %766 = vmatpush1.msra.mxu0 0.0
    %767 = vmatprep.subr.mxu0 0.0
    %768 = vmatpush1.msra.mxu0 0.0
    %769 = vmatprep.mubr.f32.mxu0 0.0
    %770 = vmatmul.mubr.f32.gmra.mrb[0].mxu0 %v593
    %v771 = vpop.f32.mrb[0].mxu0
    %v772 = vadd.f32 %v628, %v771
    %v773 = vpop.f32.mrb[0].mxu0
    %774 = vmatprep.mubr.f32.mxu0 0.0
    %775 = vmatmul.mubr.f32.gmra.mrb[0].mxu0 %v594
    %v776 = vpop.f32.mrb[0].mxu0
    %v777 = vadd.f32 %v633, %v776
    %v778 = vpop.f32.mrb[0].mxu0
    %779 = vmatprep.mubr.f32.mxu0 0.0
    %780 = vmatmul.mubr.f32.gmra.mrb[0].mxu0 %v595
    %v781 = vpop.f32.mrb[0].mxu0
    %v782 = vadd.f32 %v638, %v781
    %v783 = vpop.f32.mrb[0].mxu0
    %784 = vmatprep.mubr.f32.mxu0 0.0
    %785 = vmatmul.mubr.f32.gmra.mrb[0].mxu0 %v596
    %v786 = vpop.f32.mrb[0].mxu0
    %v787 = vadd.f32 %v643, %v786
    %v788 = vpop.f32.mrb[0].mxu0
    %789 = vmatprep.mubr.f32.mxu0 0.0
    %790 = vmatmul.mubr.f32.gmra.mrb[0].mxu0 %v597
    %v791 = vpop.f32.mrb[0].mxu0
    %v792 = vadd.f32 %v648, %v791
    %v793 = vpop.f32.mrb[0].mxu0
    %794 = vmatprep.mubr.f32.mxu0 0.0
    %795 = vmatmul.mubr.f32.gmra.mrb[0].mxu0 %v598
    %v796 = vpop.f32.mrb[0].mxu0
    %v797 = vadd.f32 %v653, %v796
    %v798 = vpop.f32.mrb[0].mxu0
    %799 = vmatprep.mubr.f32.mxu0 0.0
    %800 = vmatmul.mubr.f32.gmra.mrb[0].mxu0 %v599
    %v801 = vpop.f32.mrb[0].mxu0
    %v802 = vadd.f32 %v658, %v801
    %v803 = vpop.f32.mrb[0].mxu0
    %804 = vmatprep.mubr.f32.mxu0 0.0
    %805 = vmatmul.mubr.f32.gmra.mrb[0].mxu0 %v600
    %v806 = vpop.f32.mrb[0].mxu0
    %v807 = vadd.f32 %v663, %v806
    %v808 = vpop.f32.mrb[0].mxu0
    %809 = vmatprep.mubr.f32.mxu0 0.0
    %810 = vmatmul.mubr.f32.gmra.mrb[0].mxu0 %v601
    %v811 = vpop.f32.mrb[0].mxu0
    %v812 = vadd.f32 %v668, %v811
    %v813 = vpop.f32.mrb[0].mxu0
    %814 = vmatprep.mubr.f32.mxu0 0.0
    %815 = vmatmul.mubr.f32.gmra.mrb[0].mxu0 %v602
    %v816 = vpop.f32.mrb[0].mxu0
    %v817 = vadd.f32 %v673, %v816
    %v818 = vpop.f32.mrb[0].mxu0
    %819 = vmatprep.mubr.f32.mxu0 0.0
    %820 = vmatmul.mubr.f32.gmra.mrb[0].mxu0 %v603
    %v821 = vpop.f32.mrb[0].mxu0
    %v822 = vadd.f32 %v678, %v821
    %v823 = vpop.f32.mrb[0].mxu0
    %824 = vmatprep.mubr.f32.mxu0 0.0
    %825 = vmatmul.mubr.f32.gmra.mrb[0].mxu0 %v604
    %v826 = vpop.f32.mrb[0].mxu0
    %v827 = vadd.f32 %v683, %v826
    %v828 = vpop.f32.mrb[0].mxu0
    %829 = vmatprep.mubr.f32.mxu0 0.0
    %830 = vmatmul.mubr.f32.gmra.mrb[0].mxu0 %v605
    %v831 = vpop.f32.mrb[0].mxu0
    %v832 = vadd.f32 %v688, %v831
    %v833 = vpop.f32.mrb[0].mxu0
    %834 = vmatprep.mubr.f32.mxu0 0.0
    %835 = vmatmul.mubr.f32.gmra.mrb[0].mxu0 %v606
    %v836 = vpop.f32.mrb[0].mxu0
    %v837 = vadd.f32 %v693, %v836
    %v838 = vpop.f32.mrb[0].mxu0
    %839 = vmatprep.mubr.f32.mxu0 0.0
    %840 = vmatmul.mubr.f32.gmra.mrb[0].mxu0 %v607
    %v841 = vpop.f32.mrb[0].mxu0
    %v842 = vadd.f32 %v698, %v841
    %v843 = vpop.f32.mrb[0].mxu0
    %844 = vmatprep.mubr.f32.mxu0 0.0
    %845 = vmatmul.mubr.f32.gmra.mrb[0].mxu0 %v608
    %v846 = vpop.f32.mrb[0].mxu0
    %v847 = vadd.f32 %v703, %v846
    %v848 = vpop.f32.mrb[0].mxu0
    %849 = vdwg.mxu0
    %v850 = vmax.f32 %v772, 0.0
    %v851 = vmax.f32 %v777, 0.0
    %v852 = vmax.f32 %v782, 0.0
    %v853 = vmax.f32 %v787, 0.0
    %v854 = vmax.f32 %v792, 0.0
    %v855 = vmax.f32 %v797, 0.0
    %v856 = vmax.f32 %v802, 0.0
    %v857 = vmax.f32 %v807, 0.0
    %v858 = vmax.f32 %v812, 0.0
    %v859 = vmax.f32 %v817, 0.0
    %v860 = vmax.f32 %v822, 0.0
    %v861 = vmax.f32 %v827, 0.0
    %v862 = vmax.f32 %v832, 0.0
    %v863 = vmax.f32 %v837, 0.0
    %v864 = vmax.f32 %v842, 0.0
    %v865 = vmax.f32 %v847, 0.0
    %v866 = vld [vmem:[#allocation12] sm:$0xff]
    %v867 = vld [vmem:[#allocation12 + $0x8] sm:$0xff]
    %v868 = vld [vmem:[#allocation12 + $0x10] sm:$0xff]
    %v869 = vld [vmem:[#allocation12 + $0x18] sm:$0xff]
    %v870 = vld [vmem:[#allocation12 + $0x20] sm:$0xff]
    %v871 = vld [vmem:[#allocation12 + $0x28] sm:$0xff]
    %v872 = vld [vmem:[#allocation12 + $0x30] sm:$0xff]
    %v873 = vld [vmem:[#allocation12 + $0x38] sm:$0xff]
    %v874 = vld [vmem:[#allocation12 + $0x40] sm:$0xff]
    %v875 = vld [vmem:[#allocation12 + $0x48] sm:$0xff]
    %v876 = vld [vmem:[#allocation12 + $0x50] sm:$0xff]
    %v877 = vld [vmem:[#allocation12 + $0x58] sm:$0xff]
    %v878 = vld [vmem:[#allocation12 + $0x60] sm:$0xff]
    %v879 = vld [vmem:[#allocation12 + $0x68] sm:$0xff]
    %v880 = vld [vmem:[#allocation12 + $0x70] sm:$0xff]
    %v881 = vld [vmem:[#allocation12 + $0x78] sm:$0xff]
    %v882 = vld [vmem:[#allocation14] sm:$0xff]
    %v883 = vld [vmem:[#allocation14 + $0x8] sm:$0xff]
    %v884 = vld [vmem:[#allocation14 + $0x10] sm:$0xff]
    %v885 = vld [vmem:[#allocation14 + $0x18] sm:$0xff]
    %v886 = vld [vmem:[#allocation14 + $0x20] sm:$0xff]
    %v887 = vld [vmem:[#allocation14 + $0x28] sm:$0xff]
    %v888 = vld [vmem:[#allocation14 + $0x30] sm:$0xff]
    %v889 = vld [vmem:[#allocation14 + $0x38] sm:$0xff]
    %v890 = vld [vmem:[#allocation14 + $0x40] sm:$0xff]
    %v891 = vld [vmem:[#allocation14 + $0x48] sm:$0xff]
    %v892 = vld [vmem:[#allocation14 + $0x50] sm:$0xff]
    %v893 = vld [vmem:[#allocation14 + $0x58] sm:$0xff]
    %v894 = vld [vmem:[#allocation14 + $0x60] sm:$0xff]
    %v895 = vld [vmem:[#allocation14 + $0x68] sm:$0xff]
    %v896 = vld [vmem:[#allocation14 + $0x70] sm:$0xff]
    %v897 = vld [vmem:[#allocation14 + $0x78] sm:$0xff]
    %899 = vset.pattern.permute.xlu0 0
    %900 = vperm.xlu0 %899, %v882
    %v901 = vpop.permute.xlu0 %900
    %904 = vset.pattern.permute.xlu0 0
    %905 = vperm.xlu0 %904, %v883
    %v906 = vpop.permute.xlu0 %905
    %909 = vset.pattern.permute.xlu0 0
    %910 = vperm.xlu0 %909, %v884
    %v911 = vpop.permute.xlu0 %910
    %914 = vset.pattern.permute.xlu0 0
    %915 = vperm.xlu0 %914, %v885
    %v916 = vpop.permute.xlu0 %915
    %919 = vset.pattern.permute.xlu0 0
    %920 = vperm.xlu0 %919, %v886
    %v921 = vpop.permute.xlu0 %920
    %924 = vset.pattern.permute.xlu0 0
    %925 = vperm.xlu0 %924, %v887
    %v926 = vpop.permute.xlu0 %925
    %929 = vset.pattern.permute.xlu0 0
    %930 = vperm.xlu0 %929, %v888
    %v931 = vpop.permute.xlu0 %930
    %934 = vset.pattern.permute.xlu0 0
    %935 = vperm.xlu0 %934, %v889
    %v936 = vpop.permute.xlu0 %935
    %939 = vset.pattern.permute.xlu0 0
    %940 = vperm.xlu0 %939, %v890
    %v941 = vpop.permute.xlu0 %940
    %944 = vset.pattern.permute.xlu0 0
    %945 = vperm.xlu0 %944, %v891
    %v946 = vpop.permute.xlu0 %945
    %949 = vset.pattern.permute.xlu0 0
    %950 = vperm.xlu0 %949, %v892
    %v951 = vpop.permute.xlu0 %950
    %954 = vset.pattern.permute.xlu0 0
    %955 = vperm.xlu0 %954, %v893
    %v956 = vpop.permute.xlu0 %955
    %959 = vset.pattern.permute.xlu0 0
    %960 = vperm.xlu0 %959, %v894
    %v961 = vpop.permute.xlu0 %960
    %964 = vset.pattern.permute.xlu0 0
    %965 = vperm.xlu0 %964, %v895
    %v966 = vpop.permute.xlu0 %965
    %969 = vset.pattern.permute.xlu0 0
    %970 = vperm.xlu0 %969, %v896
    %v971 = vpop.permute.xlu0 %970
    %974 = vset.pattern.permute.xlu0 0
    %975 = vperm.xlu0 %974, %v897
    %v976 = vpop.permute.xlu0 %975
    %978 = vmatprep.subr.mxu0 0.0
    %979 = vmatpush1.msra.mxu0 %v850
    %980 = vmatprep.subr.mxu0 0.0
    %981 = vmatpush1.msra.mxu0 %v851
    %982 = vmatprep.subr.mxu0 0.0
    %983 = vmatpush1.msra.mxu0 %v852
    %984 = vmatprep.subr.mxu0 0.0
    %985 = vmatpush1.msra.mxu0 %v853
    %986 = vmatprep.subr.mxu0 0.0
    %987 = vmatpush1.msra.mxu0 %v854
    %988 = vmatprep.subr.mxu0 0.0
    %989 = vmatpush1.msra.mxu0 %v855
    %990 = vmatprep.subr.mxu0 0.0
    %991 = vmatpush1.msra.mxu0 %v856
    %992 = vmatprep.subr.mxu0 0.0
    %993 = vmatpush1.msra.mxu0 %v857
    %994 = vmatprep.subr.mxu0 0.0
    %995 = vmatpush1.msra.mxu0 %v858
    %996 = vmatprep.subr.mxu0 0.0
    %997 = vmatpush1.msra.mxu0 %v859
    %998 = vmatprep.subr.mxu0 0.0
    %999 = vmatpush1.msra.mxu0 %v860
    %1000 = vmatprep.subr.mxu0 0.0
    %1001 = vmatpush1.msra.mxu0 %v861
    %1002 = vmatprep.subr.mxu0 0.0
    %1003 = vmatpush1.msra.mxu0 %v862
    %1004 = vmatprep.subr.mxu0 0.0
    %1005 = vmatpush1.msra.mxu0 %v863
    %1006 = vmatprep.subr.mxu0 0.0
    %1007 = vmatpush1.msra.mxu0 %v864
    %1008 = vmatprep.subr.mxu0 0.0
    %1009 = vmatpush1.msra.mxu0 %v865
    %1010 = vmatprep.subr.mxu0 0.0
    %1011 = vmatpush1.msra.mxu0 0.0
    %1012 = vmatprep.subr.mxu0 0.0
    %1013 = vmatpush1.msra.mxu0 0.0
    %1014 = vmatprep.subr.mxu0 0.0
    %1015 = vmatpush1.msra.mxu0 0.0
    %1016 = vmatprep.subr.mxu0 0.0
    %1017 = vmatpush1.msra.mxu0 0.0
    %1018 = vmatprep.subr.mxu0 0.0
    %1019 = vmatpush1.msra.mxu0 0.0
    %1020 = vmatprep.subr.mxu0 0.0
    %1021 = vmatpush1.msra.mxu0 0.0
    %1022 = vmatprep.subr.mxu0 0.0
    %1023 = vmatpush1.msra.mxu0 0.0
    %1024 = vmatprep.subr.mxu0 0.0
    %1025 = vmatpush1.msra.mxu0 0.0
    %1026 = vmatprep.subr.mxu0 0.0
    %1027 = vmatpush1.msra.mxu0 0.0
    %1028 = vmatprep.subr.mxu0 0.0
    %1029 = vmatpush1.msra.mxu0 0.0
    %1030 = vmatprep.subr.mxu0 0.0
    %1031 = vmatpush1.msra.mxu0 0.0
    %1032 = vmatprep.subr.mxu0 0.0
    %1033 = vmatpush1.msra.mxu0 0.0
    %1034 = vmatprep.subr.mxu0 0.0
    %1035 = vmatpush1.msra.mxu0 0.0
    %1036 = vmatprep.subr.mxu0 0.0
    %1037 = vmatpush1.msra.mxu0 0.0
    %1038 = vmatprep.subr.mxu0 0.0
    %1039 = vmatpush1.msra.mxu0 0.0
    %1040 = vmatprep.subr.mxu0 0.0
    %1041 = vmatpush1.msra.mxu0 0.0
    %1042 = vmatprep.mubr.f32.mxu0 0.0
    %1043 = vmatmul.mubr.f32.gmra.mrb[0].mxu0 %v866
    %v1044 = vpop.f32.mrb[0].mxu0
    %v1045 = vadd.f32 %v901, %v1044
    %v1046 = vpop.f32.mrb[0].mxu0
    %1047 = vmatprep.mubr.f32.mxu0 0.0
    %1048 = vmatmul.mubr.f32.gmra.mrb[0].mxu0 %v867
    %v1049 = vpop.f32.mrb[0].mxu0
    %v1050 = vadd.f32 %v906, %v1049
    %v1051 = vpop.f32.mrb[0].mxu0
    %1052 = vmatprep.mubr.f32.mxu0 0.0
    %1053 = vmatmul.mubr.f32.gmra.mrb[0].mxu0 %v868
    %v1054 = vpop.f32.mrb[0].mxu0
    %v1055 = vadd.f32 %v911, %v1054
    %v1056 = vpop.f32.mrb[0].mxu0
    %1057 = vmatprep.mubr.f32.mxu0 0.0
    %1058 = vmatmul.mubr.f32.gmra.mrb[0].mxu0 %v869
    %v1059 = vpop.f32.mrb[0].mxu0
    %v1060 = vadd.f32 %v916, %v1059
    %v1061 = vpop.f32.mrb[0].mxu0
    %1062 = vmatprep.mubr.f32.mxu0 0.0
    %1063 = vmatmul.mubr.f32.gmra.mrb[0].mxu0 %v870
    %v1064 = vpop.f32.mrb[0].mxu0
    %v1065 = vadd.f32 %v921, %v1064
    %v1066 = vpop.f32.mrb[0].mxu0
    %1067 = vmatprep.mubr.f32.mxu0 0.0
    %1068 = vmatmul.mubr.f32.gmra.mrb[0].mxu0 %v871
    %v1069 = vpop.f32.mrb[0].mxu0
    %v1070 = vadd.f32 %v926, %v1069
    %v1071 = vpop.f32.mrb[0].mxu0
    %1072 = vmatprep.mubr.f32.mxu0 0.0
    %1073 = vmatmul.mubr.f32.gmra.mrb[0].mxu0 %v872
    %v1074 = vpop.f32.mrb[0].mxu0
    %v1075 = vadd.f32 %v931, %v1074
    %v1076 = vpop.f32.mrb[0].mxu0
    %1077 = vmatprep.mubr.f32.mxu0 0.0
    %1078 = vmatmul.mubr.f32.gmra.mrb[0].mxu0 %v873
    %v1079 = vpop.f32.mrb[0].mxu0
    %v1080 = vadd.f32 %v936, %v1079
    %v1081 = vpop.f32.mrb[0].mxu0
    %1082 = vmatprep.mubr.f32.mxu0 0.0
    %1083 = vmatmul.mubr.f32.gmra.mrb[0].mxu0 %v874
    %v1084 = vpop.f32.mrb[0].mxu0
    %v1085 = vadd.f32 %v941, %v1084
    %v1086 = vpop.f32.mrb[0].mxu0
    %1087 = vmatprep.mubr.f32.mxu0 0.0
    %1088 = vmatmul.mubr.f32.gmra.mrb[0].mxu0 %v875
    %v1089 = vpop.f32.mrb[0].mxu0
    %v1090 = vadd.f32 %v946, %v1089
    %v1091 = vpop.f32.mrb[0].mxu0
    %1092 = vmatprep.mubr.f32.mxu0 0.0
    %1093 = vmatmul.mubr.f32.gmra.mrb[0].mxu0 %v876
    %v1094 = vpop.f32.mrb[0].mxu0
    %v1095 = vadd.f32 %v951, %v1094
    %v1096 = vpop.f32.mrb[0].mxu0
    %1097 = vmatprep.mubr.f32.mxu0 0.0
    %1098 = vmatmul.mubr.f32.gmra.mrb[0].mxu0 %v877
    %v1099 = vpop.f32.mrb[0].mxu0
    %v1100 = vadd.f32 %v956, %v1099
    %v1101 = vpop.f32.mrb[0].mxu0
    %1102 = vmatprep.mubr.f32.mxu0 0.0
    %1103 = vmatmul.mubr.f32.gmra.mrb[0].mxu0 %v878
    %v1104 = vpop.f32.mrb[0].mxu0
    %v1105 = vadd.f32 %v961, %v1104
    %v1106 = vpop.f32.mrb[0].mxu0
    %1107 = vmatprep.mubr.f32.mxu0 0.0
    %1108 = vmatmul.mubr.f32.gmra.mrb[0].mxu0 %v879
    %v1109 = vpop.f32.mrb[0].mxu0
    %v1110 = vadd.f32 %v966, %v1109
    %v1111 = vpop.f32.mrb[0].mxu0
    %1112 = vmatprep.mubr.f32.mxu0 0.0
    %1113 = vmatmul.mubr.f32.gmra.mrb[0].mxu0 %v880
    %v1114 = vpop.f32.mrb[0].mxu0
    %v1115 = vadd.f32 %v971, %v1114
    %v1116 = vpop.f32.mrb[0].mxu0
    %1117 = vmatprep.mubr.f32.mxu0 0.0
    %1118 = vmatmul.mubr.f32.gmra.mrb[0].mxu0 %v881
    %v1119 = vpop.f32.mrb[0].mxu0
    %v1120 = vadd.f32 %v976, %v1119
    %v1121 = vpop.f32.mrb[0].mxu0
    %1122 = vdwg.mxu0
    %v1123 = vmax.f32 %v1045, 0.0
    %v1124 = vmax.f32 %v1050, 0.0
    %v1125 = vmax.f32 %v1055, 0.0
    %v1126 = vmax.f32 %v1060, 0.0
    %v1127 = vmax.f32 %v1065, 0.0
    %v1128 = vmax.f32 %v1070, 0.0
    %v1129 = vmax.f32 %v1075, 0.0
    %v1130 = vmax.f32 %v1080, 0.0
    %v1131 = vmax.f32 %v1085, 0.0
    %v1132 = vmax.f32 %v1090, 0.0
    %v1133 = vmax.f32 %v1095, 0.0
    %v1134 = vmax.f32 %v1100, 0.0
    %v1135 = vmax.f32 %v1105, 0.0
    %v1136 = vmax.f32 %v1110, 0.0
    %v1137 = vmax.f32 %v1115, 0.0
    %v1138 = vmax.f32 %v1120, 0.0
    %v1139 = vld [vmem:[#allocation15] sm:$0xff]
    %v1140 = vld [vmem:[#allocation15 + $0x8] sm:$0xff]
    %v1141 = vld [vmem:[#allocation15 + $0x10] sm:$0xff]
    %v1142 = vld [vmem:[#allocation15 + $0x18] sm:$0xff]
    %v1143 = vld [vmem:[#allocation15 + $0x20] sm:$0xff]
    %v1144 = vld [vmem:[#allocation15 + $0x28] sm:$0xff]
    %v1145 = vld [vmem:[#allocation15 + $0x30] sm:$0xff]
    %v1146 = vld [vmem:[#allocation15 + $0x38] sm:$0xff]
    %v1147 = vld [vmem:[#allocation15 + $0x40] sm:$0xff]
    %v1148 = vld [vmem:[#allocation15 + $0x48] sm:$0xff]
    %v1149 = vld [vmem:[#allocation15 + $0x50] sm:$0xff]
    %v1150 = vld [vmem:[#allocation15 + $0x58] sm:$0xff]
    %v1151 = vld [vmem:[#allocation15 + $0x60] sm:$0xff]
    %v1152 = vld [vmem:[#allocation15 + $0x68] sm:$0xff]
    %v1153 = vld [vmem:[#allocation15 + $0x70] sm:$0xff]
    %v1154 = vld [vmem:[#allocation15 + $0x78] sm:$0xff]
    %v1155 = vld [vmem:[#allocation17] sm:$0xff]
    %v1156 = vld [vmem:[#allocation17 + $0x8] sm:$0xff]
    %v1157 = vld [vmem:[#allocation17 + $0x10] sm:$0xff]
    %v1158 = vld [vmem:[#allocation17 + $0x18] sm:$0xff]
    %v1159 = vld [vmem:[#allocation17 + $0x20] sm:$0xff]
    %v1160 = vld [vmem:[#allocation17 + $0x28] sm:$0xff]
    %v1161 = vld [vmem:[#allocation17 + $0x30] sm:$0xff]
    %v1162 = vld [vmem:[#allocation17 + $0x38] sm:$0xff]
    %v1163 = vld [vmem:[#allocation17 + $0x40] sm:$0xff]
    %v1164 = vld [vmem:[#allocation17 + $0x48] sm:$0xff]
    %v1165 = vld [vmem:[#allocation17 + $0x50] sm:$0xff]
    %v1166 = vld [vmem:[#allocation17 + $0x58] sm:$0xff]
    %v1167 = vld [vmem:[#allocation17 + $0x60] sm:$0xff]
    %v1168 = vld [vmem:[#allocation17 + $0x68] sm:$0xff]
    %v1169 = vld [vmem:[#allocation17 + $0x70] sm:$0xff]
    %v1170 = vld [vmem:[#allocation17 + $0x78] sm:$0xff]
    %1172 = vset.pattern.permute.xlu0 0
    %1173 = vperm.xlu0 %1172, %v1155
    %v1174 = vpop.permute.xlu0 %1173
    %1177 = vset.pattern.permute.xlu0 0
    %1178 = vperm.xlu0 %1177, %v1156
    %v1179 = vpop.permute.xlu0 %1178
    %1182 = vset.pattern.permute.xlu0 0
    %1183 = vperm.xlu0 %1182, %v1157
    %v1184 = vpop.permute.xlu0 %1183
    %1187 = vset.pattern.permute.xlu0 0
    %1188 = vperm.xlu0 %1187, %v1158
    %v1189 = vpop.permute.xlu0 %1188
    %1192 = vset.pattern.permute.xlu0 0
    %1193 = vperm.xlu0 %1192, %v1159
    %v1194 = vpop.permute.xlu0 %1193
    %1197 = vset.pattern.permute.xlu0 0
    %1198 = vperm.xlu0 %1197, %v1160
    %v1199 = vpop.permute.xlu0 %1198
    %1202 = vset.pattern.permute.xlu0 0
    %1203 = vperm.xlu0 %1202, %v1161
    %v1204 = vpop.permute.xlu0 %1203
    %1207 = vset.pattern.permute.xlu0 0
    %1208 = vperm.xlu0 %1207, %v1162
    %v1209 = vpop.permute.xlu0 %1208
    %1212 = vset.pattern.permute.xlu0 0
    %1213 = vperm.xlu0 %1212, %v1163
    %v1214 = vpop.permute.xlu0 %1213
    %1217 = vset.pattern.permute.xlu0 0
    %1218 = vperm.xlu0 %1217, %v1164
    %v1219 = vpop.permute.xlu0 %1218
    %1222 = vset.pattern.permute.xlu0 0
    %1223 = vperm.xlu0 %1222, %v1165
    %v1224 = vpop.permute.xlu0 %1223
    %1227 = vset.pattern.permute.xlu0 0
    %1228 = vperm.xlu0 %1227, %v1166
    %v1229 = vpop.permute.xlu0 %1228
    %1232 = vset.pattern.permute.xlu0 0
    %1233 = vperm.xlu0 %1232, %v1167
    %v1234 = vpop.permute.xlu0 %1233
    %1237 = vset.pattern.permute.xlu0 0
    %1238 = vperm.xlu0 %1237, %v1168
    %v1239 = vpop.permute.xlu0 %1238
    %1242 = vset.pattern.permute.xlu0 0
    %1243 = vperm.xlu0 %1242, %v1169
    %v1244 = vpop.permute.xlu0 %1243
    %1247 = vset.pattern.permute.xlu0 0
    %1248 = vperm.xlu0 %1247, %v1170
    %v1249 = vpop.permute.xlu0 %1248
    %1251 = vmatprep.subr.mxu0 0.0
    %1252 = vmatpush1.msra.mxu0 %v1123
    %1253 = vmatprep.subr.mxu0 0.0
    %1254 = vmatpush1.msra.mxu0 %v1124
    %1255 = vmatprep.subr.mxu0 0.0
    %1256 = vmatpush1.msra.mxu0 %v1125
    %1257 = vmatprep.subr.mxu0 0.0
    %1258 = vmatpush1.msra.mxu0 %v1126
    %1259 = vmatprep.subr.mxu0 0.0
    %1260 = vmatpush1.msra.mxu0 %v1127
    %1261 = vmatprep.subr.mxu0 0.0
    %1262 = vmatpush1.msra.mxu0 %v1128
    %1263 = vmatprep.subr.mxu0 0.0
    %1264 = vmatpush1.msra.mxu0 %v1129
    %1265 = vmatprep.subr.mxu0 0.0
    %1266 = vmatpush1.msra.mxu0 %v1130
    %1267 = vmatprep.subr.mxu0 0.0
    %1268 = vmatpush1.msra.mxu0 %v1131
    %1269 = vmatprep.subr.mxu0 0.0
    %1270 = vmatpush1.msra.mxu0 %v1132
    %1271 = vmatprep.subr.mxu0 0.0
    %1272 = vmatpush1.msra.mxu0 %v1133
    %1273 = vmatprep.subr.mxu0 0.0
    %1274 = vmatpush1.msra.mxu0 %v1134
    %1275 = vmatprep.subr.mxu0 0.0
    %1276 = vmatpush1.msra.mxu0 %v1135
    %1277 = vmatprep.subr.mxu0 0.0
    %1278 = vmatpush1.msra.mxu0 %v1136
    %1279 = vmatprep.subr.mxu0 0.0
    %1280 = vmatpush1.msra.mxu0 %v1137
    %1281 = vmatprep.subr.mxu0 0.0
    %1282 = vmatpush1.msra.mxu0 %v1138
    %1283 = vmatprep.subr.mxu0 0.0
    %1284 = vmatpush1.msra.mxu0 0.0
    %1285 = vmatprep.subr.mxu0 0.0
    %1286 = vmatpush1.msra.mxu0 0.0
    %1287 = vmatprep.subr.mxu0 0.0
    %1288 = vmatpush1.msra.mxu0 0.0
    %1289 = vmatprep.subr.mxu0 0.0
    %1290 = vmatpush1.msra.mxu0 0.0
    %1291 = vmatprep.subr.mxu0 0.0
    %1292 = vmatpush1.msra.mxu0 0.0
    %1293 = vmatprep.subr.mxu0 0.0
    %1294 = vmatpush1.msra.mxu0 0.0
    %1295 = vmatprep.subr.mxu0 0.0
    %1296 = vmatpush1.msra.mxu0 0.0
    %1297 = vmatprep.subr.mxu0 0.0
    %1298 = vmatpush1.msra.mxu0 0.0
    %1299 = vmatprep.subr.mxu0 0.0
    %1300 = vmatpush1.msra.mxu0 0.0
    %1301 = vmatprep.subr.mxu0 0.0
    %1302 = vmatpush1.msra.mxu0 0.0
    %1303 = vmatprep.subr.mxu0 0.0
    %1304 = vmatpush1.msra.mxu0 0.0
    %1305 = vmatprep.subr.mxu0 0.0
    %1306 = vmatpush1.msra.mxu0 0.0
    %1307 = vmatprep.subr.mxu0 0.0
    %1308 = vmatpush1.msra.mxu0 0.0
    %1309 = vmatprep.subr.mxu0 0.0
    %1310 = vmatpush1.msra.mxu0 0.0
    %1311 = vmatprep.subr.mxu0 0.0
    %1312 = vmatpush1.msra.mxu0 0.0
    %1313 = vmatprep.subr.mxu0 0.0
    %1314 = vmatpush1.msra.mxu0 0.0
    %1315 = vmatprep.mubr.f32.mxu0 0.0
    %1316 = vmatmul.mubr.f32.gmra.mrb[0].mxu0 %v1139
    %v1317 = vpop.f32.mrb[0].mxu0
    %v1318 = vadd.f32 %v1174, %v1317
    %v1319 = vpop.f32.mrb[0].mxu0
    %1320 = vmatprep.mubr.f32.mxu0 0.0
    %1321 = vmatmul.mubr.f32.gmra.mrb[0].mxu0 %v1140
    %v1322 = vpop.f32.mrb[0].mxu0
    %v1323 = vadd.f32 %v1179, %v1322
    %v1324 = vpop.f32.mrb[0].mxu0
    %1325 = vmatprep.mubr.f32.mxu0 0.0
    %1326 = vmatmul.mubr.f32.gmra.mrb[0].mxu0 %v1141
    %v1327 = vpop.f32.mrb[0].mxu0
    %v1328 = vadd.f32 %v1184, %v1327
    %v1329 = vpop.f32.mrb[0].mxu0
    %1330 = vmatprep.mubr.f32.mxu0 0.0
    %1331 = vmatmul.mubr.f32.gmra.mrb[0].mxu0 %v1142
    %v1332 = vpop.f32.mrb[0].mxu0
    %v1333 = vadd.f32 %v1189, %v1332
    %v1334 = vpop.f32.mrb[0].mxu0
    %1335 = vmatprep.mubr.f32.mxu0 0.0
    %1336 = vmatmul.mubr.f32.gmra.mrb[0].mxu0 %v1143
    %v1337 = vpop.f32.mrb[0].mxu0
    %v1338 = vadd.f32 %v1194, %v1337
    %v1339 = vpop.f32.mrb[0].mxu0
    %1340 = vmatprep.mubr.f32.mxu0 0.0
    %1341 = vmatmul.mubr.f32.gmra.mrb[0].mxu0 %v1144
    %v1342 = vpop.f32.mrb[0].mxu0
    %v1343 = vadd.f32 %v1199, %v1342
    %v1344 = vpop.f32.mrb[0].mxu0
    %1345 = vmatprep.mubr.f32.mxu0 0.0
    %1346 = vmatmul.mubr.f32.gmra.mrb[0].mxu0 %v1145
    %v1347 = vpop.f32.mrb[0].mxu0
    %v1348 = vadd.f32 %v1204, %v1347
    %v1349 = vpop.f32.mrb[0].mxu0
    %1350 = vmatprep.mubr.f32.mxu0 0.0
    %1351 = vmatmul.mubr.f32.gmra.mrb[0].mxu0 %v1146
    %v1352 = vpop.f32.mrb[0].mxu0
    %v1353 = vadd.f32 %v1209, %v1352
    %v1354 = vpop.f32.mrb[0].mxu0
    %1355 = vmatprep.mubr.f32.mxu0 0.0
    %1356 = vmatmul.mubr.f32.gmra.mrb[0].mxu0 %v1147
    %v1357 = vpop.f32.mrb[0].mxu0
    %v1358 = vadd.f32 %v1214, %v1357
    %v1359 = vpop.f32.mrb[0].mxu0
    %1360 = vmatprep.mubr.f32.mxu0 0.0
    %1361 = vmatmul.mubr.f32.gmra.mrb[0].mxu0 %v1148
    %v1362 = vpop.f32.mrb[0].mxu0
    %v1363 = vadd.f32 %v1219, %v1362
    %v1364 = vpop.f32.mrb[0].mxu0
    %1365 = vmatprep.mubr.f32.mxu0 0.0
    %1366 = vmatmul.mubr.f32.gmra.mrb[0].mxu0 %v1149
    %v1367 = vpop.f32.mrb[0].mxu0
    %v1368 = vadd.f32 %v1224, %v1367
    %v1369 = vpop.f32.mrb[0].mxu0
    %1370 = vmatprep.mubr.f32.mxu0 0.0
    %1371 = vmatmul.mubr.f32.gmra.mrb[0].mxu0 %v1150
    %v1372 = vpop.f32.mrb[0].mxu0
    %v1373 = vadd.f32 %v1229, %v1372
    %v1374 = vpop.f32.mrb[0].mxu0
    %1375 = vmatprep.mubr.f32.mxu0 0.0
    %1376 = vmatmul.mubr.f32.gmra.mrb[0].mxu0 %v1151
    %v1377 = vpop.f32.mrb[0].mxu0
    %v1378 = vadd.f32 %v1234, %v1377
    %v1379 = vpop.f32.mrb[0].mxu0
    %1380 = vmatprep.mubr.f32.mxu0 0.0
    %1381 = vmatmul.mubr.f32.gmra.mrb[0].mxu0 %v1152
    %v1382 = vpop.f32.mrb[0].mxu0
    %v1383 = vadd.f32 %v1239, %v1382
    %v1384 = vpop.f32.mrb[0].mxu0
    %1385 = vmatprep.mubr.f32.mxu0 0.0
    %1386 = vmatmul.mubr.f32.gmra.mrb[0].mxu0 %v1153
    %v1387 = vpop.f32.mrb[0].mxu0
    %v1388 = vadd.f32 %v1244, %v1387
    %v1389 = vpop.f32.mrb[0].mxu0
    %1390 = vmatprep.mubr.f32.mxu0 0.0
    %1391 = vmatmul.mubr.f32.gmra.mrb[0].mxu0 %v1154
    %v1392 = vpop.f32.mrb[0].mxu0
    %v1393 = vadd.f32 %v1249, %v1392
    %v1394 = vpop.f32.mrb[0].mxu0
    %1395 = vdwg.mxu0
    %v1396 = vmax.f32 %v1318, 0.0
    %v1397 = vmax.f32 %v1323, 0.0
    %v1398 = vmax.f32 %v1328, 0.0
    %v1399 = vmax.f32 %v1333, 0.0
    %v1400 = vmax.f32 %v1338, 0.0
    %v1401 = vmax.f32 %v1343, 0.0
    %v1402 = vmax.f32 %v1348, 0.0
    %v1403 = vmax.f32 %v1353, 0.0
    %v1404 = vmax.f32 %v1358, 0.0
    %v1405 = vmax.f32 %v1363, 0.0
    %v1406 = vmax.f32 %v1368, 0.0
    %v1407 = vmax.f32 %v1373, 0.0
    %v1408 = vmax.f32 %v1378, 0.0
    %v1409 = vmax.f32 %v1383, 0.0
    %v1410 = vmax.f32 %v1388, 0.0
    %v1411 = vmax.f32 %v1393, 0.0
    %v1412 = vld [vmem:[#allocation18] sm:$0xff]
    %v1413 = vld [vmem:[#allocation18 + $0x8] sm:$0xff]
    %v1414 = vld [vmem:[#allocation18 + $0x10] sm:$0xff]
    %v1415 = vld [vmem:[#allocation18 + $0x18] sm:$0xff]
    %v1416 = vld [vmem:[#allocation18 + $0x20] sm:$0xff]
    %v1417 = vld [vmem:[#allocation18 + $0x28] sm:$0xff]
    %v1418 = vld [vmem:[#allocation18 + $0x30] sm:$0xff]
    %v1419 = vld [vmem:[#allocation18 + $0x38] sm:$0xff]
    %v1420 = vld [vmem:[#allocation18 + $0x40] sm:$0xff]
    %v1421 = vld [vmem:[#allocation18 + $0x48] sm:$0xff]
    %v1422 = vld [vmem:[#allocation18 + $0x50] sm:$0xff]
    %v1423 = vld [vmem:[#allocation18 + $0x58] sm:$0xff]
    %v1424 = vld [vmem:[#allocation18 + $0x60] sm:$0xff]
    %v1425 = vld [vmem:[#allocation18 + $0x68] sm:$0xff]
    %v1426 = vld [vmem:[#allocation18 + $0x70] sm:$0xff]
    %v1427 = vld [vmem:[#allocation18 + $0x78] sm:$0xff]
    %v1428 = vld [vmem:[#allocation20] sm:$0xff]
    %v1429 = vld [vmem:[#allocation20 + $0x8] sm:$0xff]
    %v1430 = vld [vmem:[#allocation20 + $0x10] sm:$0xff]
    %v1431 = vld [vmem:[#allocation20 + $0x18] sm:$0xff]
    %v1432 = vld [vmem:[#allocation20 + $0x20] sm:$0xff]
    %v1433 = vld [vmem:[#allocation20 + $0x28] sm:$0xff]
    %v1434 = vld [vmem:[#allocation20 + $0x30] sm:$0xff]
    %v1435 = vld [vmem:[#allocation20 + $0x38] sm:$0xff]
    %v1436 = vld [vmem:[#allocation20 + $0x40] sm:$0xff]
    %v1437 = vld [vmem:[#allocation20 + $0x48] sm:$0xff]
    %v1438 = vld [vmem:[#allocation20 + $0x50] sm:$0xff]
    %v1439 = vld [vmem:[#allocation20 + $0x58] sm:$0xff]
    %v1440 = vld [vmem:[#allocation20 + $0x60] sm:$0xff]
    %v1441 = vld [vmem:[#allocation20 + $0x68] sm:$0xff]
    %v1442 = vld [vmem:[#allocation20 + $0x70] sm:$0xff]
    %v1443 = vld [vmem:[#allocation20 + $0x78] sm:$0xff]
    %1445 = vset.pattern.permute.xlu0 0
    %1446 = vperm.xlu0 %1445, %v1428
    %v1447 = vpop.permute.xlu0 %1446
    %1450 = vset.pattern.permute.xlu0 0
    %1451 = vperm.xlu0 %1450, %v1429
    %v1452 = vpop.permute.xlu0 %1451
    %1455 = vset.pattern.permute.xlu0 0
    %1456 = vperm.xlu0 %1455, %v1430
    %v1457 = vpop.permute.xlu0 %1456
    %1460 = vset.pattern.permute.xlu0 0
    %1461 = vperm.xlu0 %1460, %v1431
    %v1462 = vpop.permute.xlu0 %1461
    %1465 = vset.pattern.permute.xlu0 0
    %1466 = vperm.xlu0 %1465, %v1432
    %v1467 = vpop.permute.xlu0 %1466
    %1470 = vset.pattern.permute.xlu0 0
    %1471 = vperm.xlu0 %1470, %v1433
    %v1472 = vpop.permute.xlu0 %1471
    %1475 = vset.pattern.permute.xlu0 0
    %1476 = vperm.xlu0 %1475, %v1434
    %v1477 = vpop.permute.xlu0 %1476
    %1480 = vset.pattern.permute.xlu0 0
    %1481 = vperm.xlu0 %1480, %v1435
    %v1482 = vpop.permute.xlu0 %1481
    %1485 = vset.pattern.permute.xlu0 0
    %1486 = vperm.xlu0 %1485, %v1436
    %v1487 = vpop.permute.xlu0 %1486
    %1490 = vset.pattern.permute.xlu0 0
    %1491 = vperm.xlu0 %1490, %v1437
    %v1492 = vpop.permute.xlu0 %1491
    %1495 = vset.pattern.permute.xlu0 0
    %1496 = vperm.xlu0 %1495, %v1438
    %v1497 = vpop.permute.xlu0 %1496
    %1500 = vset.pattern.permute.xlu0 0
    %1501 = vperm.xlu0 %1500, %v1439
    %v1502 = vpop.permute.xlu0 %1501
    %1505 = vset.pattern.permute.xlu0 0
    %1506 = vperm.xlu0 %1505, %v1440
    %v1507 = vpop.permute.xlu0 %1506
    %1510 = vset.pattern.permute.xlu0 0
    %1511 = vperm.xlu0 %1510, %v1441
    %v1512 = vpop.permute.xlu0 %1511
    %1515 = vset.pattern.permute.xlu0 0
    %1516 = vperm.xlu0 %1515, %v1442
    %v1517 = vpop.permute.xlu0 %1516
    %1520 = vset.pattern.permute.xlu0 0
    %1521 = vperm.xlu0 %1520, %v1443
    %v1522 = vpop.permute.xlu0 %1521
    %1524 = vmatprep.subr.mxu0 0.0
    %1525 = vmatpush1.msra.mxu0 %v1396
    %1526 = vmatprep.subr.mxu0 0.0
    %1527 = vmatpush1.msra.mxu0 %v1397
    %1528 = vmatprep.subr.mxu0 0.0
    %1529 = vmatpush1.msra.mxu0 %v1398
    %1530 = vmatprep.subr.mxu0 0.0
    %1531 = vmatpush1.msra.mxu0 %v1399
    %1532 = vmatprep.subr.mxu0 0.0
    %1533 = vmatpush1.msra.mxu0 %v1400
    %1534 = vmatprep.subr.mxu0 0.0
    %1535 = vmatpush1.msra.mxu0 %v1401
    %1536 = vmatprep.subr.mxu0 0.0
    %1537 = vmatpush1.msra.mxu0 %v1402
    %1538 = vmatprep.subr.mxu0 0.0
    %1539 = vmatpush1.msra.mxu0 %v1403
    %1540 = vmatprep.subr.mxu0 0.0
    %1541 = vmatpush1.msra.mxu0 %v1404
    %1542 = vmatprep.subr.mxu0 0.0
    %1543 = vmatpush1.msra.mxu0 %v1405
    %1544 = vmatprep.subr.mxu0 0.0
    %1545 = vmatpush1.msra.mxu0 %v1406
    %1546 = vmatprep.subr.mxu0 0.0
    %1547 = vmatpush1.msra.mxu0 %v1407
    %1548 = vmatprep.subr.mxu0 0.0
    %1549 = vmatpush1.msra.mxu0 %v1408
    %1550 = vmatprep.subr.mxu0 0.0
    %1551 = vmatpush1.msra.mxu0 %v1409
    %1552 = vmatprep.subr.mxu0 0.0
    %1553 = vmatpush1.msra.mxu0 %v1410
    %1554 = vmatprep.subr.mxu0 0.0
    %1555 = vmatpush1.msra.mxu0 %v1411
    %1556 = vmatprep.subr.mxu0 0.0
    %1557 = vmatpush1.msra.mxu0 0.0
    %1558 = vmatprep.subr.mxu0 0.0
    %1559 = vmatpush1.msra.mxu0 0.0
    %1560 = vmatprep.subr.mxu0 0.0
    %1561 = vmatpush1.msra.mxu0 0.0
    %1562 = vmatprep.subr.mxu0 0.0
    %1563 = vmatpush1.msra.mxu0 0.0
    %1564 = vmatprep.subr.mxu0 0.0
    %1565 = vmatpush1.msra.mxu0 0.0
    %1566 = vmatprep.subr.mxu0 0.0
    %1567 = vmatpush1.msra.mxu0 0.0
    %1568 = vmatprep.subr.mxu0 0.0
    %1569 = vmatpush1.msra.mxu0 0.0
    %1570 = vmatprep.subr.mxu0 0.0
    %1571 = vmatpush1.msra.mxu0 0.0
    %1572 = vmatprep.subr.mxu0 0.0
    %1573 = vmatpush1.msra.mxu0 0.0
    %1574 = vmatprep.subr.mxu0 0.0
    %1575 = vmatpush1.msra.mxu0 0.0
    %1576 = vmatprep.subr.mxu0 0.0
    %1577 = vmatpush1.msra.mxu0 0.0
    %1578 = vmatprep.subr.mxu0 0.0
    %1579 = vmatpush1.msra.mxu0 0.0
    %1580 = vmatprep.subr.mxu0 0.0
    %1581 = vmatpush1.msra.mxu0 0.0
    %1582 = vmatprep.subr.mxu0 0.0
    %1583 = vmatpush1.msra.mxu0 0.0
    %1584 = vmatprep.subr.mxu0 0.0
    %1585 = vmatpush1.msra.mxu0 0.0
    %1586 = vmatprep.subr.mxu0 0.0
    %1587 = vmatpush1.msra.mxu0 0.0
    %1588 = vmatprep.mubr.f32.mxu0 0.0
    %1589 = vmatmul.mubr.f32.gmra.mrb[0].mxu0 %v1412
    %v1590 = vpop.f32.mrb[0].mxu0
    %v1591 = vadd.f32 %v1447, %v1590
    %v1592 = vpop.f32.mrb[0].mxu0
    %1593 = vmatprep.mubr.f32.mxu0 0.0
    %1594 = vmatmul.mubr.f32.gmra.mrb[0].mxu0 %v1413
    %v1595 = vpop.f32.mrb[0].mxu0
    %v1596 = vadd.f32 %v1452, %v1595
    %v1597 = vpop.f32.mrb[0].mxu0
    %1598 = vmatprep.mubr.f32.mxu0 0.0
    %1599 = vmatmul.mubr.f32.gmra.mrb[0].mxu0 %v1414
    %v1600 = vpop.f32.mrb[0].mxu0
    %v1601 = vadd.f32 %v1457, %v1600
    %v1602 = vpop.f32.mrb[0].mxu0
    %1603 = vmatprep.mubr.f32.mxu0 0.0
    %1604 = vmatmul.mubr.f32.gmra.mrb[0].mxu0 %v1415
    %v1605 = vpop.f32.mrb[0].mxu0
    %v1606 = vadd.f32 %v1462, %v1605
    %v1607 = vpop.f32.mrb[0].mxu0
    %1608 = vmatprep.mubr.f32.mxu0 0.0
    %1609 = vmatmul.mubr.f32.gmra.mrb[0].mxu0 %v1416
    %v1610 = vpop.f32.mrb[0].mxu0
    %v1611 = vadd.f32 %v1467, %v1610
    %v1612 = vpop.f32.mrb[0].mxu0
    %1613 = vmatprep.mubr.f32.mxu0 0.0
    %1614 = vmatmul.mubr.f32.gmra.mrb[0].mxu0 %v1417
    %v1615 = vpop.f32.mrb[0].mxu0
    %v1616 = vadd.f32 %v1472, %v1615
    %v1617 = vpop.f32.mrb[0].mxu0
    %1618 = vmatprep.mubr.f32.mxu0 0.0
    %1619 = vmatmul.mubr.f32.gmra.mrb[0].mxu0 %v1418
    %v1620 = vpop.f32.mrb[0].mxu0
    %v1621 = vadd.f32 %v1477, %v1620
    %v1622 = vpop.f32.mrb[0].mxu0
    %1623 = vmatprep.mubr.f32.mxu0 0.0
    %1624 = vmatmul.mubr.f32.gmra.mrb[0].mxu0 %v1419
    %v1625 = vpop.f32.mrb[0].mxu0
    %v1626 = vadd.f32 %v1482, %v1625
    %v1627 = vpop.f32.mrb[0].mxu0
    %1628 = vmatprep.mubr.f32.mxu0 0.0
    %1629 = vmatmul.mubr.f32.gmra.mrb[0].mxu0 %v1420
    %v1630 = vpop.f32.mrb[0].mxu0
    %v1631 = vadd.f32 %v1487, %v1630
    %v1632 = vpop.f32.mrb[0].mxu0
    %1633 = vmatprep.mubr.f32.mxu0 0.0
    %1634 = vmatmul.mubr.f32.gmra.mrb[0].mxu0 %v1421
    %v1635 = vpop.f32.mrb[0].mxu0
    %v1636 = vadd.f32 %v1492, %v1635
    %v1637 = vpop.f32.mrb[0].mxu0
    %1638 = vmatprep.mubr.f32.mxu0 0.0
    %1639 = vmatmul.mubr.f32.gmra.mrb[0].mxu0 %v1422
    %v1640 = vpop.f32.mrb[0].mxu0
    %v1641 = vadd.f32 %v1497, %v1640
    %v1642 = vpop.f32.mrb[0].mxu0
    %1643 = vmatprep.mubr.f32.mxu0 0.0
    %1644 = vmatmul.mubr.f32.gmra.mrb[0].mxu0 %v1423
    %v1645 = vpop.f32.mrb[0].mxu0
    %v1646 = vadd.f32 %v1502, %v1645
    %v1647 = vpop.f32.mrb[0].mxu0
    %1648 = vmatprep.mubr.f32.mxu0 0.0
    %1649 = vmatmul.mubr.f32.gmra.mrb[0].mxu0 %v1424
    %v1650 = vpop.f32.mrb[0].mxu0
    %v1651 = vadd.f32 %v1507, %v1650
    %v1652 = vpop.f32.mrb[0].mxu0
    %1653 = vmatprep.mubr.f32.mxu0 0.0
    %1654 = vmatmul.mubr.f32.gmra.mrb[0].mxu0 %v1425
    %v1655 = vpop.f32.mrb[0].mxu0
    %v1656 = vadd.f32 %v1512, %v1655
    %v1657 = vpop.f32.mrb[0].mxu0
    %1658 = vmatprep.mubr.f32.mxu0 0.0
    %1659 = vmatmul.mubr.f32.gmra.mrb[0].mxu0 %v1426
    %v1660 = vpop.f32.mrb[0].mxu0
    %v1661 = vadd.f32 %v1517, %v1660
    %v1662 = vpop.f32.mrb[0].mxu0
    %1663 = vmatprep.mubr.f32.mxu0 0.0
    %1664 = vmatmul.mubr.f32.gmra.mrb[0].mxu0 %v1427
    %v1665 = vpop.f32.mrb[0].mxu0
    %v1666 = vadd.f32 %v1522, %v1665
    %v1667 = vpop.f32.mrb[0].mxu0
    %1668 = vdwg.mxu0
    %v1669 = vmax.f32 %v1591, 0.0
    %v1670 = vmax.f32 %v1596, 0.0
    %v1671 = vmax.f32 %v1601, 0.0
    %v1672 = vmax.f32 %v1606, 0.0
    %v1673 = vmax.f32 %v1611, 0.0
    %v1674 = vmax.f32 %v1616, 0.0
    %v1675 = vmax.f32 %v1621, 0.0
    %v1676 = vmax.f32 %v1626, 0.0
    %v1677 = vmax.f32 %v1631, 0.0
    %v1678 = vmax.f32 %v1636, 0.0
    %v1679 = vmax.f32 %v1641, 0.0
    %v1680 = vmax.f32 %v1646, 0.0
    %v1681 = vmax.f32 %v1651, 0.0
    %v1682 = vmax.f32 %v1656, 0.0
    %v1683 = vmax.f32 %v1661, 0.0
    %v1684 = vmax.f32 %v1666, 0.0
    %v1685 = vld [vmem:[#allocation21] sm:$0xff]
    %1686 = vmatprep.subr.mxu0 0.0
    %1687 = vmatpush1.msra.mxu0 %v1669
    %1688 = vmatprep.subr.mxu0 0.0
    %1689 = vmatpush1.msra.mxu0 %v1670
    %1690 = vmatprep.subr.mxu0 0.0
    %1691 = vmatpush1.msra.mxu0 %v1671
    %1692 = vmatprep.subr.mxu0 0.0
    %1693 = vmatpush1.msra.mxu0 %v1672
    %1694 = vmatprep.subr.mxu0 0.0
    %1695 = vmatpush1.msra.mxu0 %v1673
    %1696 = vmatprep.subr.mxu0 0.0
    %1697 = vmatpush1.msra.mxu0 %v1674
    %1698 = vmatprep.subr.mxu0 0.0
    %1699 = vmatpush1.msra.mxu0 %v1675
    %1700 = vmatprep.subr.mxu0 0.0
    %1701 = vmatpush1.msra.mxu0 %v1676
    %1702 = vmatprep.subr.mxu0 0.0
    %1703 = vmatpush1.msra.mxu0 %v1677
    %1704 = vmatprep.subr.mxu0 0.0
    %1705 = vmatpush1.msra.mxu0 %v1678
    %1706 = vmatprep.subr.mxu0 0.0
    %1707 = vmatpush1.msra.mxu0 %v1679
    %1708 = vmatprep.subr.mxu0 0.0
    %1709 = vmatpush1.msra.mxu0 %v1680
    %1710 = vmatprep.subr.mxu0 0.0
    %1711 = vmatpush1.msra.mxu0 %v1681
    %1712 = vmatprep.subr.mxu0 0.0
    %1713 = vmatpush1.msra.mxu0 %v1682
    %1714 = vmatprep.subr.mxu0 0.0
    %1715 = vmatpush1.msra.mxu0 %v1683
    %1716 = vmatprep.subr.mxu0 0.0
    %1717 = vmatpush1.msra.mxu0 %v1684
    %1718 = vmatprep.subr.mxu0 0.0
    %1719 = vmatpush1.msra.mxu0 0.0
    %1720 = vmatprep.subr.mxu0 0.0
    %1721 = vmatpush1.msra.mxu0 0.0
    %1722 = vmatprep.subr.mxu0 0.0
    %1723 = vmatpush1.msra.mxu0 0.0
    %1724 = vmatprep.subr.mxu0 0.0
    %1725 = vmatpush1.msra.mxu0 0.0
    %1726 = vmatprep.subr.mxu0 0.0
    %1727 = vmatpush1.msra.mxu0 0.0
    %1728 = vmatprep.subr.mxu0 0.0
    %1729 = vmatpush1.msra.mxu0 0.0
    %1730 = vmatprep.subr.mxu0 0.0
    %1731 = vmatpush1.msra.mxu0 0.0
    %1732 = vmatprep.subr.mxu0 0.0
    %1733 = vmatpush1.msra.mxu0 0.0
    %1734 = vmatprep.subr.mxu0 0.0
    %1735 = vmatpush1.msra.mxu0 0.0
    %1736 = vmatprep.subr.mxu0 0.0
    %1737 = vmatpush1.msra.mxu0 0.0
    %1738 = vmatprep.subr.mxu0 0.0
    %1739 = vmatpush1.msra.mxu0 0.0
    %1740 = vmatprep.subr.mxu0 0.0
    %1741 = vmatpush1.msra.mxu0 0.0
    %1742 = vmatprep.subr.mxu0 0.0
    %1743 = vmatpush1.msra.mxu0 0.0
    %1744 = vmatprep.subr.mxu0 0.0
    %1745 = vmatpush1.msra.mxu0 0.0
    %1746 = vmatprep.subr.mxu0 0.0
    %1747 = vmatpush1.msra.mxu0 0.0
    %1748 = vmatprep.subr.mxu0 0.0
    %1749 = vmatpush1.msra.mxu0 0.0
    %1750 = vmatprep.mubr.f32.mxu0 0.0
    %1751 = vmatmul.mubr.f32.gmra.mrb[0].mxu0 %v1685
    %v1752 = vpop.f32.mrb[0].mxu0
    %v1753 = vadd.f32 0.0, %v1752
    %v1754 = vpop.f32.mrb[0].mxu0
    %1755 = vdwg.mxu0
    %s1756 = sld [smem:[#allocation2]]
    %v1757 = vstv %s1756
    %v1758 = vadd.f32 %v1753, %v1757
    %1759 = vst [vmem:[#allocation23] sm:$0x1] %v1758
    // Predicated region
    $region102: #{tpu_custom_call.1} parent=1 // pred_check
      _
    $region103: #{tpu_custom_call.1} parent=1 // pred_check_branch
      %1761 = sbr.rel (0) target = $region105
    $region104: #{tpu_custom_call.1} parent=1 // pred_region
      %s1763 = ssub.s32 16, 16
      %1764 = vsyncadd [#allocation5], %s1763
      %s1766 = sshll.u32 [#allocation23], 4
      %s1767 = int_to_ptr.vmem [resolvable:$true] %s1766
      %1769 = dma.vmem_to_hbm [thread:$0]  %s1767, 16, %s13, [#allocation5]
    $region105: #{tpu_custom_call.1} parent=1 // pred_fallthru
      _
    // Predicated region
    $region106: #{tpu_custom_call.1} parent=1 // pred_check
      _
    $region107: #{tpu_custom_call.1} parent=1 // pred_check_branch
      %1771 = sbr.rel (0) target = $region109
    $region108: #{tpu_custom_call.1} parent=1 // pred_region
      %1772 = dma.done [#allocation5], 16
    $region109: #{tpu_custom_call.1} parent=1 // pred_fallthru
      _
    %1773 = vsyncpa [#allocation4], 1
    %1774 = vsyncpa [#allocation7], 1
    %1775 = vsyncpa [#allocation10], 1
    %1776 = vsyncpa [#allocation13], 1
    %1777 = vsyncpa [#allocation16], 1
    %1778 = vsyncpa [#allocation19], 1
    %1779 = vsyncpa [#allocation22], 1
    %1780 = vsyncpa [#allocation5], 1

</llo_original>
